<compile_context>
chip_gen: v5e
topology: v5e:2x2
jax: 0.10.0
libtpu: 0.0.40
codegen_flags: <defaults>
</compile_context>

<pallas_src>
import math

import jax
import jax.numpy as jnp
from jax.experimental import pallas as pl
from jax.experimental.pallas import tpu as pltpu

# ----- hyperparameters (scheme_var equivalents, small & consistent) -----------
TP = 64          # timepoints
CH = 8           # EEG channels
SF = 30          # sampling frequency
N_CLASS = 4
OCTSF = math.floor(SF * 0.1)            # 3  (conv2 kernel width / pool stride)
PAD2 = int(OCTSF / 2)                   # 1
POOL_W = int(SF / 2)                    # 15 (avg-pool window)
T2 = TP + 2 * PAD2 - OCTSF + 1          # conv2 output length (== TP, odd OCTSF)
P_OUT = (T2 - POOL_W) // OCTSF + 1      # avg-pool output length (17)
FEAT = 20 * int(math.ceil((TP - SF / 2) / OCTSF))    # 340
F1 = 22                                 # conv1 out channels
F2 = 20                                 # conv2 out channels
F2P = 24                                # F2 padded to a multiple of 8 sublanes

B_TILE = 64                             # samples per grid step (keep even; for
                                        # v7x megacore also keep N/B_TILE even)
L_IN = B_TILE * TP                      # conv-slab lane width (4096)
R_POOL = F2P * B_TILE // 2              # rows after pair-packing (768)
C_POOL = 2 * P_OUT                      # pooled columns per pair-row (34)

assert T2 == TP and FEAT == F2 * P_OUT
assert B_TILE % 2 == 0 and L_IN % 128 == 0 and F2P % 8 == 0


# ------------------------------ Pallas kernel ----------------------------------
def sccnet_feature_kernel(x_ref, w_ref, mask_ref, bias_ref, pool_ref, out_ref):
    # x_ref   : (CH, L_IN) f32        lane = b_local*TP + t (batch folded into lanes)
    # w_ref   : (OCTSF, F2P, CH) bf16 folded conv1*BN1*conv2*BN2 per-tap weights
    # mask_ref: (OCTSF, 1, L_IN) f32  1.0 where tap k stays inside its own sample
    # bias_ref: (F2P, L_IN) f32       folded bias incl. zero-padding edge corrections
    # pool_ref: (2*TP, 2*P_OUT) bf16  avg-pool matrix for one 2-sample pair row
    # out_ref : (1, R_POOL, C_POOL) f32
    x = x_ref[...]
    h2 = bias_ref[...]                               # (F2P, L_IN) f32 accumulator
    for k in range(OCTSF):                           # conv1+BN1+conv2+BN2, per tap
        d = k - PAD2
        if d == 0:
            tap = x
        else:
            # circular roll leaks neighbouring samples into the shifted columns;
            # the precomputed mask zeroes exactly those (zero-padded) taps.
            tap = pltpu.roll(x, shift=(-d) % L_IN, axis=1) * mask_ref[k]
        h2 = h2 + jnp.dot(w_ref[k], tap.astype(jnp.bfloat16),
                          preferred_element_type=jnp.float32)

    # square; Dropout(0.5) is identity in eval mode
    # TODO(synk): training-mode dropout mask (pltpu.prng_*) not implemented; eval identity.
    sq = h2 * h2                                     # f32 (F2P, L_IN)

    # AvgPool2d((1, POOL_W), stride (1, OCTSF)): pack two samples per 128-lane
    # row (pure relayout in VMEM) and apply one small shared pool matrix.
    # row = f*(B_TILE//2) + b//2, col = (b%2)*TP + t.
    sq2 = sq.reshape(R_POOL, 2 * TP)
    pooled = jnp.dot(sq2.astype(jnp.bfloat16), pool_ref[...],
                     preferred_element_type=jnp.float32)     # (R_POOL, 2*P_OUT)
    out_ref[0] = jnp.log(pooled)


# --------------------------------- wrapper --------------------------------------
@jax.jit
def sccnet_forward(x, p):
    """x: (N, 1, CH, TP) float32 (PyTorch NCHW).  Returns (N, N_CLASS)."""
    n = x.shape[0]
    nb = (n + B_TILE - 1) // B_TILE
    n_pad = nb * B_TILE

    x3 = x[:, 0, :, :]                                       # (N, CH, TP)
    if n_pad != n:
        x3 = jnp.pad(x3, ((0, n_pad - n), (0, 0), (0, 0)))
    # lane-dense layout: (CH, N_pad*TP), lane = b*TP + t
    x_l = jnp.transpose(x3, (1, 0, 2)).reshape(CH, n_pad * TP)

    flops = nb * (2 * F2P * CH * OCTSF * L_IN                 # conv taps
                  + F2P * L_IN                                # square
                  + 2 * R_POOL * (2 * TP) * C_POOL)           # pool matmul
    transcendentals = nb * R_POOL * C_POOL                    # log
    bytes_accessed = (nb * (CH * L_IN * 4 + R_POOL * C_POOL * 4)
                      + F2P * L_IN * 4 + OCTSF * L_IN * 4     # bias slab + masks
                      + OCTSF * F2P * CH * 2 + (2 * TP) * C_POOL * 2)

    lg = pl.pallas_call(
        sccnet_feature_kernel,
        out_shape=jax.ShapeDtypeStruct((nb, R_POOL, C_POOL), jnp.float32),
        grid=(nb,),
        in_specs=[
            pl.BlockSpec((CH, L_IN), lambda i: (0, i)),
            pl.BlockSpec((OCTSF, F2P, CH), lambda i: (0, 0, 0)),
            pl.BlockSpec((OCTSF, 1, L_IN), lambda i: (0, 0, 0)),
            pl.BlockSpec((F2P, L_IN), lambda i: (0, 0)),
            pl.BlockSpec((2 * TP, 2 * P_OUT), lambda i: (0, 0)),
        ],
        out_specs=pl.BlockSpec((1, R_POOL, C_POOL), lambda i: (i, 0, 0)),
        compiler_params=pltpu.CompilerParams(
            dimension_semantics=("parallel",)),
        cost_estimate=pl.CostEstimate(
            flops=flops, transcendentals=transcendentals,
            bytes_accessed=bytes_accessed),
    )(x_l, p["w_taps"], p["tap_mask"], p["bias_slab"], p["pool2"])

    # glue (XLA): (nb, R_POOL, 2*P_OUT), row = f*(B/2)+b//2, col = (b%2)*P_OUT+p
    # -> (N_pad, FEAT) in torch .view() order (f-major, p-minor); drop padded f rows.
    feats = lg.reshape(nb, F2P, B_TILE // 2, 2, P_OUT)
    feats = feats.transpose(0, 2, 3, 1, 4)[:, :, :, :F2, :]   # (nb, B/2, 2, F2, P_OUT)
    flat = feats.reshape(n_pad, FEAT)

    # classifier: too tiny for its own kernel -- let XLA fuse it with the glue.
    logits = jnp.dot(flat, p["wc"].T, precision="highest") + p["bc"][None]
    return logits[:n]


# ------------------------- deterministic parameter init -------------------------
def init_params(key):
    ks = jax.random.split(key, 16)
    eps = 1e-5

    w1 = 0.1 * jax.random.normal(ks[0], (F1, CH), jnp.float32)      # conv1 (22,1,CH,1)
    b1 = 0.1 * jax.random.normal(ks[1], (F1, 1), jnp.float32)
    g1 = 1.0 + 0.1 * jax.random.normal(ks[2], (F1, 1), jnp.float32)
    be1 = 0.1 * jax.random.normal(ks[3], (F1, 1), jnp.float32)
    m1 = 0.1 * jax.random.normal(ks[4], (F1, 1), jnp.float32)
    v1 = 1.0 + 0.5 * jax.random.uniform(ks[5], (F1, 1), jnp.float32)
    bn1_scale = g1 / jnp.sqrt(v1 + eps)
    bn1_shift = be1 - m1 * bn1_scale

    w2 = 0.1 * jax.random.normal(ks[6], (F2, F1, OCTSF), jnp.float32)  # conv2 (20,22,1,K)
    b2 = 0.1 * jax.random.normal(ks[7], (F2, 1), jnp.float32)
    g2 = 1.0 + 0.1 * jax.random.normal(ks[8], (F2, 1), jnp.float32)
    be2 = 0.1 * jax.random.normal(ks[9], (F2, 1), jnp.float32)
    m2 = 0.1 * jax.random.normal(ks[10], (F2, 1), jnp.float32)
    v2 = 1.0 + 0.5 * jax.random.uniform(ks[11], (F2, 1), jnp.float32)
    bn2_scale = g2 / jnp.sqrt(v2 + eps)
    bn2_shift = be2 - m2 * bn2_scale

    wc = 0.1 * jax.random.normal(ks[12], (N_CLASS, FEAT), jnp.float32)
    bc = 0.1 * jax.random.normal(ks[13], (N_CLASS,), jnp.float32)

    # ---- fold BN1/BN2 into the conv weights, combine conv1∘conv2 per temporal tap ----
    w1f = bn1_scale * w1                              # (F1, CH)
    b1f = bn1_scale * b1 + bn1_shift                  # (F1, 1)
    w2f = bn2_scale[:, :, None] * w2                  # (F2, F1, OCTSF)
    b2f = bn2_scale * b2 + bn2_shift                  # (F2, 1)

    w_tap = jnp.stack([jnp.matmul(w2f[:, :, k], w1f, precision="highest")
                       for k in range(OCTSF)], axis=0)            # (OCTSF, F2, CH)
    b_edge = jnp.concatenate([jnp.matmul(w2f[:, :, k], b1f, precision="highest")
                              for k in range(OCTSF)], axis=1)     # (F2, OCTSF)
    b_center = b2f + jnp.sum(b_edge, axis=1, keepdims=True)       # (F2, 1)

    # per-tap validity over one sample (taps that land in the zero padding)
    t = jnp.arange(TP)
    valid = jnp.stack([((t + (k - PAD2) >= 0) & (t + (k - PAD2) < TP))
                       for k in range(OCTSF)], axis=0).astype(jnp.float32)  # (OCTSF, TP)

    # fully folded per-column bias: edge columns lose the padded taps' contribution
    bias_tp = b_center - jnp.einsum("fk,kt->ft", b_edge, 1.0 - valid)       # (F2, TP)

    # pad F2 -> F2P: zero weights; bias 1.0 so padded rows give log(1) = 0 (finite)
    w_taps = jnp.pad(w_tap, ((0, 0), (0, F2P - F2), (0, 0))).astype(jnp.bfloat16)
    bias_tp = jnp.concatenate(
        [bias_tp, jnp.ones((F2P - F2, TP), jnp.float32)], axis=0)           # (F2P, TP)
    bias_slab = jnp.tile(bias_tp, (1, B_TILE))                              # (F2P, L_IN)
    tap_mask = jnp.tile(valid, (1, B_TILE))[:, None, :]                     # (OCTSF,1,L_IN)

    # shared avg-pool matrix for one sample, block-diag over the 2-sample pair row
    rows = jnp.arange(TP)[:, None]
    cols = jnp.arange(P_OUT)[None, :]
    pool_mat = jnp.where((rows >= cols * OCTSF) & (rows < cols * OCTSF + POOL_W),
                         1.0 / POOL_W, 0.0).astype(jnp.float32)             # (TP, P_OUT)
    pool2 = jnp.kron(jnp.eye(2, dtype=jnp.float32), pool_mat).astype(jnp.bfloat16)

    return dict(
        # canonical parameters (used by the plain-JAX reference)
        w1=w1, b1=b1, bn1_scale=bn1_scale, bn1_shift=bn1_shift,
        w2=w2, b2=b2, bn2_scale=bn2_scale, bn2_shift=bn2_shift,
        wc=wc, bc=bc,
        # kernel-layout derived parameters
        w_taps=w_taps, tap_mask=tap_mask, bias_slab=bias_slab, pool2=pool2,
    )


# ------------------------------ plain-JAX reference -----------------------------
def sccnet_reference(x, p):
    n = x.shape[0]
    x3 = x[:, 0]                                                   # (N, CH, TP)
    h1 = jnp.einsum("fc,nct->nft", p["w1"], x3,
                    precision="highest") + p["b1"][None]
    h1 = h1 * p["bn1_scale"][None] + p["bn1_shift"][None]
    h1p = jnp.pad(h1, ((0, 0), (0, 0), (PAD2, PAD2)))
    h2 = jnp.zeros((n, F2, T2), jnp.float32)
    for k in range(OCTSF):
        h2 = h2 + jnp.einsum("gf,nft->ngt", p["w2"][:, :, k],
                             h1p[:, :, k:k + T2], precision="highest")
    h2 = h2 + p["b2"][None]
    h2 = h2 * p["bn2_scale"][None] + p["bn2_shift"][None]
    sq = h2 ** 2
    pooled = jnp.stack(
        [sq[:, :, i * OCTSF:i * OCTSF + POOL_W].mean(axis=-1)
         for i in range(P_OUT)], axis=-1)
    flat = jnp.log(pooled).reshape(n, FEAT)
    return jnp.dot(flat, p["wc"].T, precision="highest") + p["bc"][None]


# ----------------------------------- main ----------------------------------------
if __name__ == "__main__":
    key = jax.random.PRNGKey(0)
    pkey, xkey = jax.random.split(key)
    params = init_params(pkey)
    x = jax.random.normal(xkey, (2, 1, CH, TP), jnp.float32)       # NCHW like torch

    out = sccnet_forward(x, params)
    out = jax.block_until_ready(out)
    ref = sccnet_reference(x, params)

    assert out.shape == (2, N_CLASS)
    assert bool(jnp.all(jnp.isfinite(out)))
    assert bool(jnp.allclose(out, ref, rtol=5e-2, atol=5e-2)), (out, ref)
    print("KERNEL_OK")
</pallas_src>

<mosaic_0001>
module attributes {stable_mosaic.version = 11 : i64} {
  func.func @sccnet_feature_kernel(%arg0: i32, %arg1: memref<8x4096xf32, #tpu.memory_space<vmem>>, %arg2: memref<3x24x8xbf16, #tpu.memory_space<vmem>>, %arg3: memref<3x1x4096xf32, #tpu.memory_space<vmem>>, %arg4: memref<24x4096xf32, #tpu.memory_space<vmem>>, %arg5: memref<128x34xbf16, #tpu.memory_space<vmem>>, %arg6: memref<1x768x34xf32, #tpu.memory_space<vmem>>) attributes {dimension_semantics = [#tpu.dimension_semantics<parallel>], iteration_bounds = array<i64: 1>, scalar_prefetch = 0 : i64, scratch_operands = 0 : i64, tpu.core_type = #tpu.core_type<tc>, window_params = [{transform_indices = @transform_0, window_bounds = array<i64: 8, 4096>}, {pipeline_mode = #tpu.pipeline_mode<synchronous>, transform_indices = @transform_1, window_bounds = array<i64: 3, 24, 8>}, {pipeline_mode = #tpu.pipeline_mode<synchronous>, transform_indices = @transform_2, window_bounds = array<i64: 3, 1, 4096>}, {pipeline_mode = #tpu.pipeline_mode<synchronous>, transform_indices = @transform_3, window_bounds = array<i64: 24, 4096>}, {pipeline_mode = #tpu.pipeline_mode<synchronous>, transform_indices = @transform_4, window_bounds = array<i64: 128, 34>}, {transform_indices = @transform_5, window_bounds = array<i64: 1, 768, 34>}]} {
    %c0 = arith.constant 0 : index
    %c0_0 = arith.constant 0 : index
    %0 = vector.load %arg1[%c0, %c0_0] : memref<8x4096xf32, #tpu.memory_space<vmem>>, vector<8x4096xf32>
    %c0_1 = arith.constant 0 : index
    %c0_2 = arith.constant 0 : index
    %1 = vector.load %arg4[%c0_1, %c0_2] : memref<24x4096xf32, #tpu.memory_space<vmem>>, vector<24x4096xf32>
    %c1_i32 = arith.constant 1 : i32
    %2 = tpu.dynamic_rotate %0 by %c1_i32 dim 1 : vector<8x4096xf32>, i32 -> vector<8x4096xf32>
    %c0_3 = arith.constant 0 : index
    %c0_4 = arith.constant 0 : index
    %c0_5 = arith.constant 0 : index
    %3 = vector.load %arg3[%c0_3, %c0_4, %c0_5] : memref<3x1x4096xf32, #tpu.memory_space<vmem>>, vector<1x1x4096xf32>
    %4 = vector.shape_cast %3 : vector<1x1x4096xf32> to vector<1x4096xf32>
    %5 = vector.broadcast %4 : vector<1x4096xf32> to vector<8x4096xf32>
    %6 = arith.mulf %2, %5 : vector<8x4096xf32>
    %c0_6 = arith.constant 0 : index
    %c0_7 = arith.constant 0 : index
    %c0_8 = arith.constant 0 : index
    %7 = vector.load %arg2[%c0_6, %c0_7, %c0_8] : memref<3x24x8xbf16, #tpu.memory_space<vmem>>, vector<1x24x8xbf16>
    %8 = vector.shape_cast %7 : vector<1x24x8xbf16> to vector<24x8xbf16>
    %9 = arith.truncf %6 : vector<8x4096xf32> to vector<8x4096xbf16>
    %cst = arith.constant dense<0.000000e+00> : vector<24x4096xf32>
    %10 = tpu.matmul %8, %9, %cst {dimension_numbers = #tpu.dot_dimension_numbers<[1], [0], [0], [1], [0, 0, 1, 1], [], []>} : vector<24x8xbf16>, vector<8x4096xbf16>, vector<24x4096xf32> -> vector<24x4096xf32>
    %11 = arith.addf %1, %10 : vector<24x4096xf32>
    %c1 = arith.constant 1 : index
    %c0_9 = arith.constant 0 : index
    %c0_10 = arith.constant 0 : index
    %12 = vector.load %arg2[%c1, %c0_9, %c0_10] : memref<3x24x8xbf16, #tpu.memory_space<vmem>>, vector<1x24x8xbf16>
    %13 = vector.shape_cast %12 : vector<1x24x8xbf16> to vector<24x8xbf16>
    %14 = arith.truncf %0 : vector<8x4096xf32> to vector<8x4096xbf16>
    %cst_11 = arith.constant dense<0.000000e+00> : vector<24x4096xf32>
    %15 = tpu.matmul %13, %14, %cst_11 {dimension_numbers = #tpu.dot_dimension_numbers<[1], [0], [0], [1], [0, 0, 1, 1], [], []>} : vector<24x8xbf16>, vector<8x4096xbf16>, vector<24x4096xf32> -> vector<24x4096xf32>
    %16 = arith.addf %11, %15 : vector<24x4096xf32>
    %c4095_i32 = arith.constant 4095 : i32
    %17 = tpu.dynamic_rotate %0 by %c4095_i32 dim 1 : vector<8x4096xf32>, i32 -> vector<8x4096xf32>
    %c2 = arith.constant 2 : index
    %c0_12 = arith.constant 0 : index
    %c0_13 = arith.constant 0 : index
    %18 = vector.load %arg3[%c2, %c0_12, %c0_13] : memref<3x1x4096xf32, #tpu.memory_space<vmem>>, vector<1x1x4096xf32>
    %19 = vector.shape_cast %18 : vector<1x1x4096xf32> to vector<1x4096xf32>
    %20 = vector.broadcast %19 : vector<1x4096xf32> to vector<8x4096xf32>
    %21 = arith.mulf %17, %20 : vector<8x4096xf32>
    %c2_14 = arith.constant 2 : index
    %c0_15 = arith.constant 0 : index
    %c0_16 = arith.constant 0 : index
    %22 = vector.load %arg2[%c2_14, %c0_15, %c0_16] : memref<3x24x8xbf16, #tpu.memory_space<vmem>>, vector<1x24x8xbf16>
    %23 = vector.shape_cast %22 : vector<1x24x8xbf16> to vector<24x8xbf16>
    %24 = arith.truncf %21 : vector<8x4096xf32> to vector<8x4096xbf16>
    %cst_17 = arith.constant dense<0.000000e+00> : vector<24x4096xf32>
    %25 = tpu.matmul %23, %24, %cst_17 {dimension_numbers = #tpu.dot_dimension_numbers<[1], [0], [0], [1], [0, 0, 1, 1], [], []>} : vector<24x8xbf16>, vector<8x4096xbf16>, vector<24x4096xf32> -> vector<24x4096xf32>
    %26 = arith.addf %16, %25 : vector<24x4096xf32>
    %27 = arith.mulf %26, %26 : vector<24x4096xf32>
    %28 = vector.shape_cast %27 : vector<24x4096xf32> to vector<768x128xf32>
    %29 = arith.truncf %28 : vector<768x128xf32> to vector<768x128xbf16>
    %c0_18 = arith.constant 0 : index
    %c0_19 = arith.constant 0 : index
    %30 = vector.load %arg5[%c0_18, %c0_19] : memref<128x34xbf16, #tpu.memory_space<vmem>>, vector<128x34xbf16>
    %cst_20 = arith.constant dense<0.000000e+00> : vector<768x34xf32>
    %31 = tpu.matmul %29, %30, %cst_20 {dimension_numbers = #tpu.dot_dimension_numbers<[1], [0], [0], [1], [0, 0, 1, 1], [], []>} : vector<768x128xbf16>, vector<128x34xbf16>, vector<768x34xf32> -> vector<768x34xf32>
    %32 = math.log %31 : vector<768x34xf32>
    %c0_21 = arith.constant 0 : index
    %c0_22 = arith.constant 0 : index
    %c0_23 = arith.constant 0 : index
    %33 = vector.load %arg6[%c0_21, %c0_22, %c0_23] : memref<1x768x34xf32, #tpu.memory_space<vmem>>, vector<1x768x34xf32>
    %34 = vector.shape_cast %33 : vector<1x768x34xf32> to vector<768x34xf32>
    %35 = vector.shape_cast %32 : vector<768x34xf32> to vector<1x768x34xf32>
    tpu.vector_store %arg6[%c0_21, %c0_22, %c0_23], %35 {strides = array<i32>} : memref<1x768x34xf32, #tpu.memory_space<vmem>>, vector<1x768x34xf32>,
    return
  }
  func.func @transform_0(%arg0: i32) -> (i32, i32) {
    %c0_i32 = arith.constant 0 : i32
    %c0_i32_0 = arith.constant 0 : i32
    return %c0_i32, %arg0 : i32, i32
  }
  func.func @transform_1(%arg0: i32) -> (i32, i32, i32) {
    %c0_i32 = arith.constant 0 : i32
    %c0_i32_0 = arith.constant 0 : i32
    %c0_i32_1 = arith.constant 0 : i32
    %c0_i32_2 = arith.constant 0 : i32
    return %c0_i32, %c0_i32_0, %c0_i32_1 : i32, i32, i32
  }
  func.func @transform_2(%arg0: i32) -> (i32, i32, i32) {
    %c0_i32 = arith.constant 0 : i32
    %c0_i32_0 = arith.constant 0 : i32
    %c0_i32_1 = arith.constant 0 : i32
    %c0_i32_2 = arith.constant 0 : i32
    return %c0_i32, %c0_i32_0, %c0_i32_1 : i32, i32, i32
  }
  func.func @transform_3(%arg0: i32) -> (i32, i32) {
    %c0_i32 = arith.constant 0 : i32
    %c0_i32_0 = arith.constant 0 : i32
    %c0_i32_1 = arith.constant 0 : i32
    return %c0_i32, %c0_i32_0 : i32, i32
  }
  func.func @transform_4(%arg0: i32) -> (i32, i32) {
    %c0_i32 = arith.constant 0 : i32
    %c0_i32_0 = arith.constant 0 : i32
    %c0_i32_1 = arith.constant 0 : i32
    return %c0_i32, %c0_i32_0 : i32, i32
  }
  func.func @transform_5(%arg0: i32) -> (i32, i32, i32) {
    %c0_i32 = arith.constant 0 : i32
    %c0_i32_0 = arith.constant 0 : i32
    %c0_i32_1 = arith.constant 0 : i32
    return %arg0, %c0_i32, %c0_i32_0 : i32, i32, i32
  }
}

</mosaic_0001>

<llo_original>
// kernel: sccnet_forward.1
$region0: #{sccnet_forward.1}
  #allocation0 [shape = 'u32[]', space=smem, size = 0x4, offset = 0x4, fixed_abs, tag = 'smem constant byte address 0x4 - core index']
  #allocation1 [shape = 'u32[72,128]{1,0:T(1,128)}', space=vmem, size = 0x9000, scoped, tag = 'internal scratch']
  %s0 = inlined_call_operand.vmem [shape: f32[8,4096], index: 0, kind: input, shape index: {}]
  %s1 = inlined_call_operand.vmem [shape: bf16[3,24,8], index: 1, kind: input, shape index: {}]
  %s2 = inlined_call_operand.vmem [shape: f32[3,1,4096], index: 2, kind: input, shape index: {}]
  %s3 = inlined_call_operand.vmem [shape: f32[24,4096], index: 3, kind: input, shape index: {}]
  %s4 = inlined_call_operand.vmem [shape: bf16[128,34], index: 4, kind: input, shape index: {}]
  %s5 = inlined_call_operand.vmem [shape: f32[1,768,34], index: 5, kind: output, shape index: {}]
  %s6 = sld [smem:[#allocation0]]
  $region30: #{sccnet_forward.1} parent=0
    _
  %s8 = ssub.s32 1, %s6
  %s9 = scalar_select 0, %s8, %s6
  // Predicated region
  $region2: #{sccnet_forward.1} parent=0 // pred_check
    _
  $region3: #{sccnet_forward.1} parent=0 // pred_check_branch
    %11 = sbr.rel (0) target = $region5
  $region4: #{sccnet_forward.1} parent=0 // pred_region
    _
  $region5: #{sccnet_forward.1} parent=0 // pred_fallthru
    _
  // Predicated region
  $region6: #{sccnet_forward.1} parent=0 // pred_check
    _
  $region7: #{sccnet_forward.1} parent=0 // pred_check_branch
    %13 = sbr.rel (0) target = $region9
  $region8: #{sccnet_forward.1} parent=0 // pred_region
    _
  $region9: #{sccnet_forward.1} parent=0 // pred_fallthru
    _
  // Predicated region
  $region10: #{sccnet_forward.1} parent=0 // pred_check
    _
  $region11: #{sccnet_forward.1} parent=0 // pred_check_branch
    %15 = sbr.rel (0) target = $region13
  $region12: #{sccnet_forward.1} parent=0 // pred_region
    _
  $region13: #{sccnet_forward.1} parent=0 // pred_fallthru
    _
  // Predicated region
  $region14: #{sccnet_forward.1} parent=0 // pred_check
    _
  $region15: #{sccnet_forward.1} parent=0 // pred_check_branch
    %17 = sbr.rel (0) target = $region17
  $region16: #{sccnet_forward.1} parent=0 // pred_region
    _
  $region17: #{sccnet_forward.1} parent=0 // pred_fallthru
    _
  // Predicated region
  $region18: #{sccnet_forward.1} parent=0 // pred_check
    _
  $region19: #{sccnet_forward.1} parent=0 // pred_check_branch
    %19 = sbr.rel (0) target = $region21
  $region20: #{sccnet_forward.1} parent=0 // pred_region
    _
  $region21: #{sccnet_forward.1} parent=0 // pred_fallthru
    _
  %v21 = vld [vmem:[%s0] sm:$0xff]
  %v22 = vld [vmem:[%s0 + $0x8] sm:$0xff]
  %v23 = vld [vmem:[%s0 + $0x10] sm:$0xff]
  %v24 = vld [vmem:[%s0 + $0x18] sm:$0xff]
  %v25 = vld [vmem:[%s0 + $0x20] sm:$0xff]
  %v26 = vld [vmem:[%s0 + $0x28] sm:$0xff]
  %v27 = vld [vmem:[%s0 + $0x30] sm:$0xff]
  %v28 = vld [vmem:[%s0 + $0x38] sm:$0xff]
  %v29 = vld [vmem:[%s0 + $0x40] sm:$0xff]
  %v30 = vld [vmem:[%s0 + $0x48] sm:$0xff]
  %v31 = vld [vmem:[%s0 + $0x50] sm:$0xff]
  %v32 = vld [vmem:[%s0 + $0x58] sm:$0xff]
  %v33 = vld [vmem:[%s0 + $0x60] sm:$0xff]
  %v34 = vld [vmem:[%s0 + $0x68] sm:$0xff]
  %v35 = vld [vmem:[%s0 + $0x70] sm:$0xff]
  %v36 = vld [vmem:[%s0 + $0x78] sm:$0xff]
  %v37 = vld [vmem:[%s0 + $0x80] sm:$0xff]
  %v38 = vld [vmem:[%s0 + $0x88] sm:$0xff]
  %v39 = vld [vmem:[%s0 + $0x90] sm:$0xff]
  %v40 = vld [vmem:[%s0 + $0x98] sm:$0xff]
  %v41 = vld [vmem:[%s0 + $0xa0] sm:$0xff]
  %v42 = vld [vmem:[%s0 + $0xa8] sm:$0xff]
  %v43 = vld [vmem:[%s0 + $0xb0] sm:$0xff]
  %v44 = vld [vmem:[%s0 + $0xb8] sm:$0xff]
  %v45 = vld [vmem:[%s0 + $0xc0] sm:$0xff]
  %v46 = vld [vmem:[%s0 + $0xc8] sm:$0xff]
  %v47 = vld [vmem:[%s0 + $0xd0] sm:$0xff]
  %v48 = vld [vmem:[%s0 + $0xd8] sm:$0xff]
  %v49 = vld [vmem:[%s0 + $0xe0] sm:$0xff]
  %v50 = vld [vmem:[%s0 + $0xe8] sm:$0xff]
  %v51 = vld [vmem:[%s0 + $0xf0] sm:$0xff]
  %v52 = vld [vmem:[%s0 + $0xf8] sm:$0xff]
  %v53 = vld [vmem:[%s3] sm:$0xff]
  %v54 = vld [vmem:[%s3 + $0x8] sm:$0xff]
  %v55 = vld [vmem:[%s3 + $0x10] sm:$0xff]
  %v56 = vld [vmem:[%s3 + $0x18] sm:$0xff]
  %v57 = vld [vmem:[%s3 + $0x20] sm:$0xff]
  %v58 = vld [vmem:[%s3 + $0x28] sm:$0xff]
  %v59 = vld [vmem:[%s3 + $0x30] sm:$0xff]
  %v60 = vld [vmem:[%s3 + $0x38] sm:$0xff]
  %v61 = vld [vmem:[%s3 + $0x40] sm:$0xff]
  %v62 = vld [vmem:[%s3 + $0x48] sm:$0xff]
  %v63 = vld [vmem:[%s3 + $0x50] sm:$0xff]
  %v64 = vld [vmem:[%s3 + $0x58] sm:$0xff]
  %v65 = vld [vmem:[%s3 + $0x60] sm:$0xff]
  %v66 = vld [vmem:[%s3 + $0x68] sm:$0xff]
  %v67 = vld [vmem:[%s3 + $0x70] sm:$0xff]
  %v68 = vld [vmem:[%s3 + $0x78] sm:$0xff]
  %v69 = vld [vmem:[%s3 + $0x80] sm:$0xff]
  %v70 = vld [vmem:[%s3 + $0x88] sm:$0xff]
  %v71 = vld [vmem:[%s3 + $0x90] sm:$0xff]
  %v72 = vld [vmem:[%s3 + $0x98] sm:$0xff]
  %v73 = vld [vmem:[%s3 + $0xa0] sm:$0xff]
  %v74 = vld [vmem:[%s3 + $0xa8] sm:$0xff]
  %v75 = vld [vmem:[%s3 + $0xb0] sm:$0xff]
  %v76 = vld [vmem:[%s3 + $0xb8] sm:$0xff]
  %v77 = vld [vmem:[%s3 + $0xc0] sm:$0xff]
  %v78 = vld [vmem:[%s3 + $0xc8] sm:$0xff]
  %v79 = vld [vmem:[%s3 + $0xd0] sm:$0xff]
  %v80 = vld [vmem:[%s3 + $0xd8] sm:$0xff]
  %v81 = vld [vmem:[%s3 + $0xe0] sm:$0xff]
  %v82 = vld [vmem:[%s3 + $0xe8] sm:$0xff]
  %v83 = vld [vmem:[%s3 + $0xf0] sm:$0xff]
  %v84 = vld [vmem:[%s3 + $0xf8] sm:$0xff]
  %v85 = vld [vmem:[%s3 + $0x100] sm:$0xff]
  %v86 = vld [vmem:[%s3 + $0x108] sm:$0xff]
  %v87 = vld [vmem:[%s3 + $0x110] sm:$0xff]
  %v88 = vld [vmem:[%s3 + $0x118] sm:$0xff]
  %v89 = vld [vmem:[%s3 + $0x120] sm:$0xff]
  %v90 = vld [vmem:[%s3 + $0x128] sm:$0xff]
  %v91 = vld [vmem:[%s3 + $0x130] sm:$0xff]
  %v92 = vld [vmem:[%s3 + $0x138] sm:$0xff]
  %v93 = vld [vmem:[%s3 + $0x140] sm:$0xff]
  %v94 = vld [vmem:[%s3 + $0x148] sm:$0xff]
  %v95 = vld [vmem:[%s3 + $0x150] sm:$0xff]
  %v96 = vld [vmem:[%s3 + $0x158] sm:$0xff]
  %v97 = vld [vmem:[%s3 + $0x160] sm:$0xff]
  %v98 = vld [vmem:[%s3 + $0x168] sm:$0xff]
  %v99 = vld [vmem:[%s3 + $0x170] sm:$0xff]
  %v100 = vld [vmem:[%s3 + $0x178] sm:$0xff]
  %v101 = vld [vmem:[%s3 + $0x180] sm:$0xff]
  %v102 = vld [vmem:[%s3 + $0x188] sm:$0xff]
  %v103 = vld [vmem:[%s3 + $0x190] sm:$0xff]
  %v104 = vld [vmem:[%s3 + $0x198] sm:$0xff]
  %v105 = vld [vmem:[%s3 + $0x1a0] sm:$0xff]
  %v106 = vld [vmem:[%s3 + $0x1a8] sm:$0xff]
  %v107 = vld [vmem:[%s3 + $0x1b0] sm:$0xff]
  %v108 = vld [vmem:[%s3 + $0x1b8] sm:$0xff]
  %v109 = vld [vmem:[%s3 + $0x1c0] sm:$0xff]
  %v110 = vld [vmem:[%s3 + $0x1c8] sm:$0xff]
  %v111 = vld [vmem:[%s3 + $0x1d0] sm:$0xff]
  %v112 = vld [vmem:[%s3 + $0x1d8] sm:$0xff]
  %v113 = vld [vmem:[%s3 + $0x1e0] sm:$0xff]
  %v114 = vld [vmem:[%s3 + $0x1e8] sm:$0xff]
  %v115 = vld [vmem:[%s3 + $0x1f0] sm:$0xff]
  %v116 = vld [vmem:[%s3 + $0x1f8] sm:$0xff]
  %v117 = vld [vmem:[%s3 + $0x200] sm:$0xff]
  %v118 = vld [vmem:[%s3 + $0x208] sm:$0xff]
  %v119 = vld [vmem:[%s3 + $0x210] sm:$0xff]
  %v120 = vld [vmem:[%s3 + $0x218] sm:$0xff]
  %v121 = vld [vmem:[%s3 + $0x220] sm:$0xff]
  %v122 = vld [vmem:[%s3 + $0x228] sm:$0xff]
  %v123 = vld [vmem:[%s3 + $0x230] sm:$0xff]
  %v124 = vld [vmem:[%s3 + $0x238] sm:$0xff]
  %v125 = vld [vmem:[%s3 + $0x240] sm:$0xff]
  %v126 = vld [vmem:[%s3 + $0x248] sm:$0xff]
  %v127 = vld [vmem:[%s3 + $0x250] sm:$0xff]
  %v128 = vld [vmem:[%s3 + $0x258] sm:$0xff]
  %v129 = vld [vmem:[%s3 + $0x260] sm:$0xff]
  %v130 = vld [vmem:[%s3 + $0x268] sm:$0xff]
  %v131 = vld [vmem:[%s3 + $0x270] sm:$0xff]
  %v132 = vld [vmem:[%s3 + $0x278] sm:$0xff]
  %v133 = vld [vmem:[%s3 + $0x280] sm:$0xff]
  %v134 = vld [vmem:[%s3 + $0x288] sm:$0xff]
  %v135 = vld [vmem:[%s3 + $0x290] sm:$0xff]
  %v136 = vld [vmem:[%s3 + $0x298] sm:$0xff]
  %v137 = vld [vmem:[%s3 + $0x2a0] sm:$0xff]
  %v138 = vld [vmem:[%s3 + $0x2a8] sm:$0xff]
  %v139 = vld [vmem:[%s3 + $0x2b0] sm:$0xff]
  %v140 = vld [vmem:[%s3 + $0x2b8] sm:$0xff]
  %v141 = vld [vmem:[%s3 + $0x2c0] sm:$0xff]
  %v142 = vld [vmem:[%s3 + $0x2c8] sm:$0xff]
  %v143 = vld [vmem:[%s3 + $0x2d0] sm:$0xff]
  %v144 = vld [vmem:[%s3 + $0x2d8] sm:$0xff]
  %v145 = vld [vmem:[%s3 + $0x2e0] sm:$0xff]
  %v146 = vld [vmem:[%s3 + $0x2e8] sm:$0xff]
  %v147 = vld [vmem:[%s3 + $0x2f0] sm:$0xff]
  %v148 = vld [vmem:[%s3 + $0x2f8] sm:$0xff]
  %149 = vrot.lane.b32.xlu0 %v21, 1
  %v150 = vpop.permute.xlu0 %149
  %151 = vrot.lane.b32.xlu0 %v22, 1
  %v152 = vpop.permute.xlu0 %151
  %153 = vrot.lane.b32.xlu0 %v23, 1
  %v154 = vpop.permute.xlu0 %153
  %155 = vrot.lane.b32.xlu0 %v24, 1
  %v156 = vpop.permute.xlu0 %155
  %157 = vrot.lane.b32.xlu0 %v25, 1
  %v158 = vpop.permute.xlu0 %157
  %159 = vrot.lane.b32.xlu0 %v26, 1
  %v160 = vpop.permute.xlu0 %159
  %161 = vrot.lane.b32.xlu0 %v27, 1
  %v162 = vpop.permute.xlu0 %161
  %163 = vrot.lane.b32.xlu0 %v28, 1
  %v164 = vpop.permute.xlu0 %163
  %165 = vrot.lane.b32.xlu0 %v29, 1
  %v166 = vpop.permute.xlu0 %165
  %167 = vrot.lane.b32.xlu0 %v30, 1
  %v168 = vpop.permute.xlu0 %167
  %169 = vrot.lane.b32.xlu0 %v31, 1
  %v170 = vpop.permute.xlu0 %169
  %171 = vrot.lane.b32.xlu0 %v32, 1
  %v172 = vpop.permute.xlu0 %171
  %173 = vrot.lane.b32.xlu0 %v33, 1
  %v174 = vpop.permute.xlu0 %173
  %175 = vrot.lane.b32.xlu0 %v34, 1
  %v176 = vpop.permute.xlu0 %175
  %177 = vrot.lane.b32.xlu0 %v35, 1
  %v178 = vpop.permute.xlu0 %177
  %179 = vrot.lane.b32.xlu0 %v36, 1
  %v180 = vpop.permute.xlu0 %179
  %181 = vrot.lane.b32.xlu0 %v37, 1
  %v182 = vpop.permute.xlu0 %181
  %183 = vrot.lane.b32.xlu0 %v38, 1
  %v184 = vpop.permute.xlu0 %183
  %185 = vrot.lane.b32.xlu0 %v39, 1
  %v186 = vpop.permute.xlu0 %185
  %187 = vrot.lane.b32.xlu0 %v40, 1
  %v188 = vpop.permute.xlu0 %187
  %189 = vrot.lane.b32.xlu0 %v41, 1
  %v190 = vpop.permute.xlu0 %189
  %191 = vrot.lane.b32.xlu0 %v42, 1
  %v192 = vpop.permute.xlu0 %191
  %193 = vrot.lane.b32.xlu0 %v43, 1
  %v194 = vpop.permute.xlu0 %193
  %195 = vrot.lane.b32.xlu0 %v44, 1
  %v196 = vpop.permute.xlu0 %195
  %197 = vrot.lane.b32.xlu0 %v45, 1
  %v198 = vpop.permute.xlu0 %197
  %199 = vrot.lane.b32.xlu0 %v46, 1
  %v200 = vpop.permute.xlu0 %199
  %201 = vrot.lane.b32.xlu0 %v47, 1
  %v202 = vpop.permute.xlu0 %201
  %203 = vrot.lane.b32.xlu0 %v48, 1
  %v204 = vpop.permute.xlu0 %203
  %205 = vrot.lane.b32.xlu0 %v49, 1
  %v206 = vpop.permute.xlu0 %205
  %207 = vrot.lane.b32.xlu0 %v50, 1
  %v208 = vpop.permute.xlu0 %207
  %209 = vrot.lane.b32.xlu0 %v51, 1
  %v210 = vpop.permute.xlu0 %209
  %211 = vrot.lane.b32.xlu0 %v52, 1
  %v212 = vpop.permute.xlu0 %211
  %v213 = vlaneseq
  %v214 = vand.u32 %v213, 127
  %vm215 = vcmp.lt.s32.totalorder %v214, 1
  %v216 = vsel %vm215, %v210, %v212
  %v217 = vsel %vm215, %v208, %v210
  %v218 = vsel %vm215, %v206, %v208
  %v219 = vsel %vm215, %v204, %v206
  %v220 = vsel %vm215, %v202, %v204
  %v221 = vsel %vm215, %v200, %v202
  %v222 = vsel %vm215, %v198, %v200
  %v223 = vsel %vm215, %v196, %v198
  %v224 = vsel %vm215, %v194, %v196
  %v225 = vsel %vm215, %v192, %v194
  %v226 = vsel %vm215, %v190, %v192
  %v227 = vsel %vm215, %v188, %v190
  %v228 = vsel %vm215, %v186, %v188
  %v229 = vsel %vm215, %v184, %v186
  %v230 = vsel %vm215, %v182, %v184
  %v231 = vsel %vm215, %v180, %v182
  %v232 = vsel %vm215, %v178, %v180
  %v233 = vsel %vm215, %v176, %v178
  %v234 = vsel %vm215, %v174, %v176
  %v235 = vsel %vm215, %v172, %v174
  %v236 = vsel %vm215, %v170, %v172
  %v237 = vsel %vm215, %v168, %v170
  %v238 = vsel %vm215, %v166, %v168
  %v239 = vsel %vm215, %v164, %v166
  %v240 = vsel %vm215, %v162, %v164
  %v241 = vsel %vm215, %v160, %v162
  %v242 = vsel %vm215, %v158, %v160
  %v243 = vsel %vm215, %v156, %v158
  %v244 = vsel %vm215, %v154, %v156
  %v245 = vsel %vm215, %v152, %v154
  %v246 = vsel %vm215, %v150, %v152
  %v247 = vsel %vm215, %v212, %v150
  %v248 = vld [vmem:[%s2] sm:$0xff]
  %v249 = vld [vmem:[%s2 + $0x8] sm:$0xff]
  %v250 = vld [vmem:[%s2 + $0x10] sm:$0xff]
  %v251 = vld [vmem:[%s2 + $0x18] sm:$0xff]
  %v256 = vperm.slane %v248, 0
  %v257 = vperm.slane %v248, 1
  %v258 = vperm.slane %v248, 2
  %v259 = vperm.slane %v248, 3
  %v260 = vperm.slane %v248, 4
  %v261 = vperm.slane %v248, 5
  %v262 = vperm.slane %v248, 6
  %v263 = vperm.slane %v248, 7
  %v264 = vperm.slane %v249, 0
  %v265 = vperm.slane %v249, 1
  %v266 = vperm.slane %v249, 2
  %v267 = vperm.slane %v249, 3
  %v268 = vperm.slane %v249, 4
  %v269 = vperm.slane %v249, 5
  %v270 = vperm.slane %v249, 6
  %v271 = vperm.slane %v249, 7
  %v272 = vperm.slane %v250, 0
  %v273 = vperm.slane %v250, 1
  %v274 = vperm.slane %v250, 2
  %v275 = vperm.slane %v250, 3
  %v276 = vperm.slane %v250, 4
  %v277 = vperm.slane %v250, 5
  %v278 = vperm.slane %v250, 6
  %v279 = vperm.slane %v250, 7
  %v280 = vperm.slane %v251, 0
  %v281 = vperm.slane %v251, 1
  %v282 = vperm.slane %v251, 2
  %v283 = vperm.slane %v251, 3
  %v284 = vperm.slane %v251, 4
  %v285 = vperm.slane %v251, 5
  %v286 = vperm.slane %v251, 6
  %v287 = vperm.slane %v251, 7
  %v320 = vmul.f32 %v247, %v256
  %v321 = vmul.f32 %v246, %v257
  %v322 = vmul.f32 %v245, %v258
  %v323 = vmul.f32 %v244, %v259
  %v324 = vmul.f32 %v243, %v260
  %v325 = vmul.f32 %v242, %v261
  %v326 = vmul.f32 %v241, %v262
  %v327 = vmul.f32 %v240, %v263
  %v328 = vmul.f32 %v239, %v264
  %v329 = vmul.f32 %v238, %v265
  %v330 = vmul.f32 %v237, %v266
  %v331 = vmul.f32 %v236, %v267
  %v332 = vmul.f32 %v235, %v268
  %v333 = vmul.f32 %v234, %v269
  %v334 = vmul.f32 %v233, %v270
  %v335 = vmul.f32 %v232, %v271
  %v336 = vmul.f32 %v231, %v272
  %v337 = vmul.f32 %v230, %v273
  %v338 = vmul.f32 %v229, %v274
  %v339 = vmul.f32 %v228, %v275
  %v340 = vmul.f32 %v227, %v276
  %v341 = vmul.f32 %v226, %v277
  %v342 = vmul.f32 %v225, %v278
  %v343 = vmul.f32 %v224, %v279
  %v344 = vmul.f32 %v223, %v280
  %v345 = vmul.f32 %v222, %v281
  %v346 = vmul.f32 %v221, %v282
  %v347 = vmul.f32 %v220, %v283
  %v348 = vmul.f32 %v219, %v284
  %v349 = vmul.f32 %v218, %v285
  %v350 = vmul.f32 %v217, %v286
  %v351 = vmul.f32 %v216, %v287
  %v352 = vld [vmem:[%s1] sm:$0xf]
  %v353 = vld [vmem:[%s1 + $0x4] sm:$0xf]
  %v354 = vld [vmem:[%s1 + $0x8] sm:$0xf]
  %v355 = vpack.c.bf16 %v320, %v320
  %v356 = vpack.c.bf16 %v321, %v321
  %v357 = vpack.c.bf16 %v322, %v322
  %v358 = vpack.c.bf16 %v323, %v323
  %v359 = vpack.c.bf16 %v324, %v324
  %v360 = vpack.c.bf16 %v325, %v325
  %v361 = vpack.c.bf16 %v326, %v326
  %v362 = vpack.c.bf16 %v327, %v327
  %v363 = vpack.c.bf16 %v328, %v328
  %v364 = vpack.c.bf16 %v329, %v329
  %v365 = vpack.c.bf16 %v330, %v330
  %v366 = vpack.c.bf16 %v331, %v331
  %v367 = vpack.c.bf16 %v332, %v332
  %v368 = vpack.c.bf16 %v333, %v333
  %v369 = vpack.c.bf16 %v334, %v334
  %v370 = vpack.c.bf16 %v335, %v335
  %v371 = vpack.c.bf16 %v336, %v336
  %v372 = vpack.c.bf16 %v337, %v337
  %v373 = vpack.c.bf16 %v338, %v338
  %v374 = vpack.c.bf16 %v339, %v339
  %v375 = vpack.c.bf16 %v340, %v340
  %v376 = vpack.c.bf16 %v341, %v341
  %v377 = vpack.c.bf16 %v342, %v342
  %v378 = vpack.c.bf16 %v343, %v343
  %v379 = vpack.c.bf16 %v344, %v344
  %v380 = vpack.c.bf16 %v345, %v345
  %v381 = vpack.c.bf16 %v346, %v346
  %v382 = vpack.c.bf16 %v347, %v347
  %v383 = vpack.c.bf16 %v348, %v348
  %v384 = vpack.c.bf16 %v349, %v349
  %v385 = vpack.c.bf16 %v350, %v350
  %v386 = vpack.c.bf16 %v351, %v351
  %v390 = vunpack.c.l.b16 %v352
  %v391 = vunpack.c.l.b16 %v353
  %v392 = vunpack.c.l.b16 %v354
  %v393 = vpack.c.b16 %v391, %v390
  %v394 = vpack.c.b16 %v392, %v392
  %vm395 = vcmask 64512
  %v397 = vsel %vm395, %v393, 0
  %v400 = vsel %vm395, %v394, 0
  %vm402 = vcmask 1043456
  %v404 = vsel %vm402, %v355, 0
  %v407 = vsel %vm402, %v356, 0
  %v410 = vsel %vm402, %v357, 0
  %v413 = vsel %vm402, %v358, 0
  %v416 = vsel %vm402, %v359, 0
  %v419 = vsel %vm402, %v360, 0
  %v422 = vsel %vm402, %v361, 0
  %v425 = vsel %vm402, %v362, 0
  %v428 = vsel %vm402, %v363, 0
  %v431 = vsel %vm402, %v364, 0
  %v434 = vsel %vm402, %v365, 0
  %v437 = vsel %vm402, %v366, 0
  %v440 = vsel %vm402, %v367, 0
  %v443 = vsel %vm402, %v368, 0
  %v446 = vsel %vm402, %v369, 0
  %v449 = vsel %vm402, %v370, 0
  %v452 = vsel %vm402, %v371, 0
  %v455 = vsel %vm402, %v372, 0
  %v458 = vsel %vm402, %v373, 0
  %v461 = vsel %vm402, %v374, 0
  %v464 = vsel %vm402, %v375, 0
  %v467 = vsel %vm402, %v376, 0
  %v470 = vsel %vm402, %v377, 0
  %v473 = vsel %vm402, %v378, 0
  %v476 = vsel %vm402, %v379, 0
  %v479 = vsel %vm402, %v380, 0
  %v482 = vsel %vm402, %v381, 0
  %v485 = vsel %vm402, %v382, 0
  %v488 = vsel %vm402, %v383, 0
  %v491 = vsel %vm402, %v384, 0
  %v494 = vsel %vm402, %v385, 0
  %v497 = vsel %vm402, %v386, 0
  %499 = vmatpush.bf16.msra.mxu0 0
  %500 = vmatpush.bf16.msra.mxu0 0
  %501 = vmatpush.bf16.msra.mxu0 0
  %502 = vmatpush.bf16.msra.mxu0 0
  %503 = vmatpush.bf16.msra.mxu0 0
  %504 = vmatpush.bf16.msra.mxu0 0
  %505 = vmatpush.bf16.msra.mxu0 0
  %506 = vmatpush.bf16.msra.mxu0 %v404
  %507 = vmatmul.bf16.gmra.mxu0 %v397
  %v508 = vpop.f32.mrf.mxu0
  %v509 = vadd.f32 0.0, %v508
  %v510 = vpop.f32.mrf.mxu0
  %v511 = vadd.f32 0.0, %v510
  %512 = vmatmul.bf16.gmra.mxu0 %v400
  %v513 = vpop.f32.mrf.mxu0
  %v514 = vadd.f32 0.0, %v513
  %v515 = vpop.f32.mrf.mxu0
  %516 = vdwg.mxu0
  %517 = vmatpush.bf16.msra.mxu0 0
  %518 = vmatpush.bf16.msra.mxu0 0
  %519 = vmatpush.bf16.msra.mxu0 0
  %520 = vmatpush.bf16.msra.mxu0 0
  %521 = vmatpush.bf16.msra.mxu0 0
  %522 = vmatpush.bf16.msra.mxu0 0
  %523 = vmatpush.bf16.msra.mxu0 0
  %524 = vmatpush.bf16.msra.mxu0 %v407
  %525 = vmatmul.bf16.gmra.mxu0 %v397
  %v526 = vpop.f32.mrf.mxu0
  %v527 = vadd.f32 0.0, %v526
  %v528 = vpop.f32.mrf.mxu0
  %v529 = vadd.f32 0.0, %v528
  %530 = vmatmul.bf16.gmra.mxu0 %v400
  %v531 = vpop.f32.mrf.mxu0
  %v532 = vadd.f32 0.0, %v531
  %v533 = vpop.f32.mrf.mxu0
  %534 = vdwg.mxu0
  %535 = vmatpush.bf16.msra.mxu0 0
  %536 = vmatpush.bf16.msra.mxu0 0
  %537 = vmatpush.bf16.msra.mxu0 0
  %538 = vmatpush.bf16.msra.mxu0 0
  %539 = vmatpush.bf16.msra.mxu0 0
  %540 = vmatpush.bf16.msra.mxu0 0
  %541 = vmatpush.bf16.msra.mxu0 0
  %542 = vmatpush.bf16.msra.mxu0 %v410
  %543 = vmatmul.bf16.gmra.mxu0 %v397
  %v544 = vpop.f32.mrf.mxu0
  %v545 = vadd.f32 0.0, %v544
  %v546 = vpop.f32.mrf.mxu0
  %v547 = vadd.f32 0.0, %v546
  %548 = vmatmul.bf16.gmra.mxu0 %v400
  %v549 = vpop.f32.mrf.mxu0
  %v550 = vadd.f32 0.0, %v549
  %v551 = vpop.f32.mrf.mxu0
  %552 = vdwg.mxu0
  %553 = vmatpush.bf16.msra.mxu0 0
  %554 = vmatpush.bf16.msra.mxu0 0
  %555 = vmatpush.bf16.msra.mxu0 0
  %556 = vmatpush.bf16.msra.mxu0 0
  %557 = vmatpush.bf16.msra.mxu0 0
  %558 = vmatpush.bf16.msra.mxu0 0
  %559 = vmatpush.bf16.msra.mxu0 0
  %560 = vmatpush.bf16.msra.mxu0 %v413
  %561 = vmatmul.bf16.gmra.mxu0 %v397
  %v562 = vpop.f32.mrf.mxu0
  %v563 = vadd.f32 0.0, %v562
  %v564 = vpop.f32.mrf.mxu0
  %v565 = vadd.f32 0.0, %v564
  %566 = vmatmul.bf16.gmra.mxu0 %v400
  %v567 = vpop.f32.mrf.mxu0
  %v568 = vadd.f32 0.0, %v567
  %v569 = vpop.f32.mrf.mxu0
  %570 = vdwg.mxu0
  %571 = vmatpush.bf16.msra.mxu0 0
  %572 = vmatpush.bf16.msra.mxu0 0
  %573 = vmatpush.bf16.msra.mxu0 0
  %574 = vmatpush.bf16.msra.mxu0 0
  %575 = vmatpush.bf16.msra.mxu0 0
  %576 = vmatpush.bf16.msra.mxu0 0
  %577 = vmatpush.bf16.msra.mxu0 0
  %578 = vmatpush.bf16.msra.mxu0 %v416
  %579 = vmatmul.bf16.gmra.mxu0 %v397
  %v580 = vpop.f32.mrf.mxu0
  %v581 = vadd.f32 0.0, %v580
  %v582 = vpop.f32.mrf.mxu0
  %v583 = vadd.f32 0.0, %v582
  %584 = vmatmul.bf16.gmra.mxu0 %v400
  %v585 = vpop.f32.mrf.mxu0
  %v586 = vadd.f32 0.0, %v585
  %v587 = vpop.f32.mrf.mxu0
  %588 = vdwg.mxu0
  %589 = vmatpush.bf16.msra.mxu0 0
  %590 = vmatpush.bf16.msra.mxu0 0
  %591 = vmatpush.bf16.msra.mxu0 0
  %592 = vmatpush.bf16.msra.mxu0 0
  %593 = vmatpush.bf16.msra.mxu0 0
  %594 = vmatpush.bf16.msra.mxu0 0
  %595 = vmatpush.bf16.msra.mxu0 0
  %596 = vmatpush.bf16.msra.mxu0 %v419
  %597 = vmatmul.bf16.gmra.mxu0 %v397
  %v598 = vpop.f32.mrf.mxu0
  %v599 = vadd.f32 0.0, %v598
  %v600 = vpop.f32.mrf.mxu0
  %v601 = vadd.f32 0.0, %v600
  %602 = vmatmul.bf16.gmra.mxu0 %v400
  %v603 = vpop.f32.mrf.mxu0
  %v604 = vadd.f32 0.0, %v603
  %v605 = vpop.f32.mrf.mxu0
  %606 = vdwg.mxu0
  %607 = vmatpush.bf16.msra.mxu0 0
  %608 = vmatpush.bf16.msra.mxu0 0
  %609 = vmatpush.bf16.msra.mxu0 0
  %610 = vmatpush.bf16.msra.mxu0 0
  %611 = vmatpush.bf16.msra.mxu0 0
  %612 = vmatpush.bf16.msra.mxu0 0
  %613 = vmatpush.bf16.msra.mxu0 0
  %614 = vmatpush.bf16.msra.mxu0 %v422
  %615 = vmatmul.bf16.gmra.mxu0 %v397
  %v616 = vpop.f32.mrf.mxu0
  %v617 = vadd.f32 0.0, %v616
  %v618 = vpop.f32.mrf.mxu0
  %v619 = vadd.f32 0.0, %v618
  %620 = vmatmul.bf16.gmra.mxu0 %v400
  %v621 = vpop.f32.mrf.mxu0
  %v622 = vadd.f32 0.0, %v621
  %v623 = vpop.f32.mrf.mxu0
  %624 = vdwg.mxu0
  %625 = vmatpush.bf16.msra.mxu0 0
  %626 = vmatpush.bf16.msra.mxu0 0
  %627 = vmatpush.bf16.msra.mxu0 0
  %628 = vmatpush.bf16.msra.mxu0 0
  %629 = vmatpush.bf16.msra.mxu0 0
  %630 = vmatpush.bf16.msra.mxu0 0
  %631 = vmatpush.bf16.msra.mxu0 0
  %632 = vmatpush.bf16.msra.mxu0 %v425
  %633 = vmatmul.bf16.gmra.mxu0 %v397
  %v634 = vpop.f32.mrf.mxu0
  %v635 = vadd.f32 0.0, %v634
  %v636 = vpop.f32.mrf.mxu0
  %v637 = vadd.f32 0.0, %v636
  %638 = vmatmul.bf16.gmra.mxu0 %v400
  %v639 = vpop.f32.mrf.mxu0
  %v640 = vadd.f32 0.0, %v639
  %v641 = vpop.f32.mrf.mxu0
  %642 = vdwg.mxu0
  %643 = vmatpush.bf16.msra.mxu0 0
  %644 = vmatpush.bf16.msra.mxu0 0
  %645 = vmatpush.bf16.msra.mxu0 0
  %646 = vmatpush.bf16.msra.mxu0 0
  %647 = vmatpush.bf16.msra.mxu0 0
  %648 = vmatpush.bf16.msra.mxu0 0
  %649 = vmatpush.bf16.msra.mxu0 0
  %650 = vmatpush.bf16.msra.mxu0 %v428
  %651 = vmatmul.bf16.gmra.mxu0 %v397
  %v652 = vpop.f32.mrf.mxu0
  %v653 = vadd.f32 0.0, %v652
  %v654 = vpop.f32.mrf.mxu0
  %v655 = vadd.f32 0.0, %v654
  %656 = vmatmul.bf16.gmra.mxu0 %v400
  %v657 = vpop.f32.mrf.mxu0
  %v658 = vadd.f32 0.0, %v657
  %v659 = vpop.f32.mrf.mxu0
  %660 = vdwg.mxu0
  %661 = vmatpush.bf16.msra.mxu0 0
  %662 = vmatpush.bf16.msra.mxu0 0
  %663 = vmatpush.bf16.msra.mxu0 0
  %664 = vmatpush.bf16.msra.mxu0 0
  %665 = vmatpush.bf16.msra.mxu0 0
  %666 = vmatpush.bf16.msra.mxu0 0
  %667 = vmatpush.bf16.msra.mxu0 0
  %668 = vmatpush.bf16.msra.mxu0 %v431
  %669 = vmatmul.bf16.gmra.mxu0 %v397
  %v670 = vpop.f32.mrf.mxu0
  %v671 = vadd.f32 0.0, %v670
  %v672 = vpop.f32.mrf.mxu0
  %v673 = vadd.f32 0.0, %v672
  %674 = vmatmul.bf16.gmra.mxu0 %v400
  %v675 = vpop.f32.mrf.mxu0
  %v676 = vadd.f32 0.0, %v675
  %v677 = vpop.f32.mrf.mxu0
  %678 = vdwg.mxu0
  %679 = vmatpush.bf16.msra.mxu0 0
  %680 = vmatpush.bf16.msra.mxu0 0
  %681 = vmatpush.bf16.msra.mxu0 0
  %682 = vmatpush.bf16.msra.mxu0 0
  %683 = vmatpush.bf16.msra.mxu0 0
  %684 = vmatpush.bf16.msra.mxu0 0
  %685 = vmatpush.bf16.msra.mxu0 0
  %686 = vmatpush.bf16.msra.mxu0 %v434
  %687 = vmatmul.bf16.gmra.mxu0 %v397
  %v688 = vpop.f32.mrf.mxu0
  %v689 = vadd.f32 0.0, %v688
  %v690 = vpop.f32.mrf.mxu0
  %v691 = vadd.f32 0.0, %v690
  %692 = vmatmul.bf16.gmra.mxu0 %v400
  %v693 = vpop.f32.mrf.mxu0
  %v694 = vadd.f32 0.0, %v693
  %v695 = vpop.f32.mrf.mxu0
  %696 = vdwg.mxu0
  %697 = vmatpush.bf16.msra.mxu0 0
  %698 = vmatpush.bf16.msra.mxu0 0
  %699 = vmatpush.bf16.msra.mxu0 0
  %700 = vmatpush.bf16.msra.mxu0 0
  %701 = vmatpush.bf16.msra.mxu0 0
  %702 = vmatpush.bf16.msra.mxu0 0
  %703 = vmatpush.bf16.msra.mxu0 0
  %704 = vmatpush.bf16.msra.mxu0 %v437
  %705 = vmatmul.bf16.gmra.mxu0 %v397
  %v706 = vpop.f32.mrf.mxu0
  %v707 = vadd.f32 0.0, %v706
  %v708 = vpop.f32.mrf.mxu0
  %v709 = vadd.f32 0.0, %v708
  %710 = vmatmul.bf16.gmra.mxu0 %v400
  %v711 = vpop.f32.mrf.mxu0
  %v712 = vadd.f32 0.0, %v711
  %v713 = vpop.f32.mrf.mxu0
  %714 = vdwg.mxu0
  %715 = vmatpush.bf16.msra.mxu0 0
  %716 = vmatpush.bf16.msra.mxu0 0
  %717 = vmatpush.bf16.msra.mxu0 0
  %718 = vmatpush.bf16.msra.mxu0 0
  %719 = vmatpush.bf16.msra.mxu0 0
  %720 = vmatpush.bf16.msra.mxu0 0
  %721 = vmatpush.bf16.msra.mxu0 0
  %722 = vmatpush.bf16.msra.mxu0 %v440
  %723 = vmatmul.bf16.gmra.mxu0 %v397
  %v724 = vpop.f32.mrf.mxu0
  %v725 = vadd.f32 0.0, %v724
  %v726 = vpop.f32.mrf.mxu0
  %v727 = vadd.f32 0.0, %v726
  %728 = vmatmul.bf16.gmra.mxu0 %v400
  %v729 = vpop.f32.mrf.mxu0
  %v730 = vadd.f32 0.0, %v729
  %v731 = vpop.f32.mrf.mxu0
  %732 = vdwg.mxu0
  %733 = vmatpush.bf16.msra.mxu0 0
  %734 = vmatpush.bf16.msra.mxu0 0
  %735 = vmatpush.bf16.msra.mxu0 0
  %736 = vmatpush.bf16.msra.mxu0 0
  %737 = vmatpush.bf16.msra.mxu0 0
  %738 = vmatpush.bf16.msra.mxu0 0
  %739 = vmatpush.bf16.msra.mxu0 0
  %740 = vmatpush.bf16.msra.mxu0 %v443
  %741 = vmatmul.bf16.gmra.mxu0 %v397
  %v742 = vpop.f32.mrf.mxu0
  %v743 = vadd.f32 0.0, %v742
  %v744 = vpop.f32.mrf.mxu0
  %v745 = vadd.f32 0.0, %v744
  %746 = vmatmul.bf16.gmra.mxu0 %v400
  %v747 = vpop.f32.mrf.mxu0
  %v748 = vadd.f32 0.0, %v747
  %v749 = vpop.f32.mrf.mxu0
  %750 = vdwg.mxu0
  %751 = vmatpush.bf16.msra.mxu0 0
  %752 = vmatpush.bf16.msra.mxu0 0
  %753 = vmatpush.bf16.msra.mxu0 0
  %754 = vmatpush.bf16.msra.mxu0 0
  %755 = vmatpush.bf16.msra.mxu0 0
  %756 = vmatpush.bf16.msra.mxu0 0
  %757 = vmatpush.bf16.msra.mxu0 0
  %758 = vmatpush.bf16.msra.mxu0 %v446
  %759 = vmatmul.bf16.gmra.mxu0 %v397
  %v760 = vpop.f32.mrf.mxu0
  %v761 = vadd.f32 0.0, %v760
  %v762 = vpop.f32.mrf.mxu0
  %v763 = vadd.f32 0.0, %v762
  %764 = vmatmul.bf16.gmra.mxu0 %v400
  %v765 = vpop.f32.mrf.mxu0
  %v766 = vadd.f32 0.0, %v765
  %v767 = vpop.f32.mrf.mxu0
  %768 = vdwg.mxu0
  %769 = vmatpush.bf16.msra.mxu0 0
  %770 = vmatpush.bf16.msra.mxu0 0
  %771 = vmatpush.bf16.msra.mxu0 0
  %772 = vmatpush.bf16.msra.mxu0 0
  %773 = vmatpush.bf16.msra.mxu0 0
  %774 = vmatpush.bf16.msra.mxu0 0
  %775 = vmatpush.bf16.msra.mxu0 0
  %776 = vmatpush.bf16.msra.mxu0 %v449
  %777 = vmatmul.bf16.gmra.mxu0 %v397
  %v778 = vpop.f32.mrf.mxu0
  %v779 = vadd.f32 0.0, %v778
  %v780 = vpop.f32.mrf.mxu0
  %v781 = vadd.f32 0.0, %v780
  %782 = vmatmul.bf16.gmra.mxu0 %v400
  %v783 = vpop.f32.mrf.mxu0
  %v784 = vadd.f32 0.0, %v783
  %v785 = vpop.f32.mrf.mxu0
  %786 = vdwg.mxu0
  %787 = vmatpush.bf16.msra.mxu0 0
  %788 = vmatpush.bf16.msra.mxu0 0
  %789 = vmatpush.bf16.msra.mxu0 0
  %790 = vmatpush.bf16.msra.mxu0 0
  %791 = vmatpush.bf16.msra.mxu0 0
  %792 = vmatpush.bf16.msra.mxu0 0
  %793 = vmatpush.bf16.msra.mxu0 0
  %794 = vmatpush.bf16.msra.mxu0 %v452
  %795 = vmatmul.bf16.gmra.mxu0 %v397
  %v796 = vpop.f32.mrf.mxu0
  %v797 = vadd.f32 0.0, %v796
  %v798 = vpop.f32.mrf.mxu0
  %v799 = vadd.f32 0.0, %v798
  %800 = vmatmul.bf16.gmra.mxu0 %v400
  %v801 = vpop.f32.mrf.mxu0
  %v802 = vadd.f32 0.0, %v801
  %v803 = vpop.f32.mrf.mxu0
  %804 = vdwg.mxu0
  %805 = vmatpush.bf16.msra.mxu0 0
  %806 = vmatpush.bf16.msra.mxu0 0
  %807 = vmatpush.bf16.msra.mxu0 0
  %808 = vmatpush.bf16.msra.mxu0 0
  %809 = vmatpush.bf16.msra.mxu0 0
  %810 = vmatpush.bf16.msra.mxu0 0
  %811 = vmatpush.bf16.msra.mxu0 0
  %812 = vmatpush.bf16.msra.mxu0 %v455
  %813 = vmatmul.bf16.gmra.mxu0 %v397
  %v814 = vpop.f32.mrf.mxu0
  %v815 = vadd.f32 0.0, %v814
  %v816 = vpop.f32.mrf.mxu0
  %v817 = vadd.f32 0.0, %v816
  %818 = vmatmul.bf16.gmra.mxu0 %v400
  %v819 = vpop.f32.mrf.mxu0
  %v820 = vadd.f32 0.0, %v819
  %v821 = vpop.f32.mrf.mxu0
  %822 = vdwg.mxu0
  %823 = vmatpush.bf16.msra.mxu0 0
  %824 = vmatpush.bf16.msra.mxu0 0
  %825 = vmatpush.bf16.msra.mxu0 0
  %826 = vmatpush.bf16.msra.mxu0 0
  %827 = vmatpush.bf16.msra.mxu0 0
  %828 = vmatpush.bf16.msra.mxu0 0
  %829 = vmatpush.bf16.msra.mxu0 0
  %830 = vmatpush.bf16.msra.mxu0 %v458
  %831 = vmatmul.bf16.gmra.mxu0 %v397
  %v832 = vpop.f32.mrf.mxu0
  %v833 = vadd.f32 0.0, %v832
  %v834 = vpop.f32.mrf.mxu0
  %v835 = vadd.f32 0.0, %v834
  %836 = vmatmul.bf16.gmra.mxu0 %v400
  %v837 = vpop.f32.mrf.mxu0
  %v838 = vadd.f32 0.0, %v837
  %v839 = vpop.f32.mrf.mxu0
  %840 = vdwg.mxu0
  %841 = vmatpush.bf16.msra.mxu0 0
  %842 = vmatpush.bf16.msra.mxu0 0
  %843 = vmatpush.bf16.msra.mxu0 0
  %844 = vmatpush.bf16.msra.mxu0 0
  %845 = vmatpush.bf16.msra.mxu0 0
  %846 = vmatpush.bf16.msra.mxu0 0
  %847 = vmatpush.bf16.msra.mxu0 0
  %848 = vmatpush.bf16.msra.mxu0 %v461
  %849 = vmatmul.bf16.gmra.mxu0 %v397
  %v850 = vpop.f32.mrf.mxu0
  %v851 = vadd.f32 0.0, %v850
  %v852 = vpop.f32.mrf.mxu0
  %v853 = vadd.f32 0.0, %v852
  %854 = vmatmul.bf16.gmra.mxu0 %v400
  %v855 = vpop.f32.mrf.mxu0
  %v856 = vadd.f32 0.0, %v855
  %v857 = vpop.f32.mrf.mxu0
  %858 = vdwg.mxu0
  %859 = vmatpush.bf16.msra.mxu0 0
  %860 = vmatpush.bf16.msra.mxu0 0
  %861 = vmatpush.bf16.msra.mxu0 0
  %862 = vmatpush.bf16.msra.mxu0 0
  %863 = vmatpush.bf16.msra.mxu0 0
  %864 = vmatpush.bf16.msra.mxu0 0
  %865 = vmatpush.bf16.msra.mxu0 0
  %866 = vmatpush.bf16.msra.mxu0 %v464
  %867 = vmatmul.bf16.gmra.mxu0 %v397
  %v868 = vpop.f32.mrf.mxu0
  %v869 = vadd.f32 0.0, %v868
  %v870 = vpop.f32.mrf.mxu0
  %v871 = vadd.f32 0.0, %v870
  %872 = vmatmul.bf16.gmra.mxu0 %v400
  %v873 = vpop.f32.mrf.mxu0
  %v874 = vadd.f32 0.0, %v873
  %v875 = vpop.f32.mrf.mxu0
  %876 = vdwg.mxu0
  %877 = vmatpush.bf16.msra.mxu0 0
  %878 = vmatpush.bf16.msra.mxu0 0
  %879 = vmatpush.bf16.msra.mxu0 0
  %880 = vmatpush.bf16.msra.mxu0 0
  %881 = vmatpush.bf16.msra.mxu0 0
  %882 = vmatpush.bf16.msra.mxu0 0
  %883 = vmatpush.bf16.msra.mxu0 0
  %884 = vmatpush.bf16.msra.mxu0 %v467
  %885 = vmatmul.bf16.gmra.mxu0 %v397
  %v886 = vpop.f32.mrf.mxu0
  %v887 = vadd.f32 0.0, %v886
  %v888 = vpop.f32.mrf.mxu0
  %v889 = vadd.f32 0.0, %v888
  %890 = vmatmul.bf16.gmra.mxu0 %v400
  %v891 = vpop.f32.mrf.mxu0
  %v892 = vadd.f32 0.0, %v891
  %v893 = vpop.f32.mrf.mxu0
  %894 = vdwg.mxu0
  %895 = vmatpush.bf16.msra.mxu0 0
  %896 = vmatpush.bf16.msra.mxu0 0
  %897 = vmatpush.bf16.msra.mxu0 0
  %898 = vmatpush.bf16.msra.mxu0 0
  %899 = vmatpush.bf16.msra.mxu0 0
  %900 = vmatpush.bf16.msra.mxu0 0
  %901 = vmatpush.bf16.msra.mxu0 0
  %902 = vmatpush.bf16.msra.mxu0 %v470
  %903 = vmatmul.bf16.gmra.mxu0 %v397
  %v904 = vpop.f32.mrf.mxu0
  %v905 = vadd.f32 0.0, %v904
  %v906 = vpop.f32.mrf.mxu0
  %v907 = vadd.f32 0.0, %v906
  %908 = vmatmul.bf16.gmra.mxu0 %v400
  %v909 = vpop.f32.mrf.mxu0
  %v910 = vadd.f32 0.0, %v909
  %v911 = vpop.f32.mrf.mxu0
  %912 = vdwg.mxu0
  %913 = vmatpush.bf16.msra.mxu0 0
  %914 = vmatpush.bf16.msra.mxu0 0
  %915 = vmatpush.bf16.msra.mxu0 0
  %916 = vmatpush.bf16.msra.mxu0 0
  %917 = vmatpush.bf16.msra.mxu0 0
  %918 = vmatpush.bf16.msra.mxu0 0
  %919 = vmatpush.bf16.msra.mxu0 0
  %920 = vmatpush.bf16.msra.mxu0 %v473
  %921 = vmatmul.bf16.gmra.mxu0 %v397
  %v922 = vpop.f32.mrf.mxu0
  %v923 = vadd.f32 0.0, %v922
  %v924 = vpop.f32.mrf.mxu0
  %v925 = vadd.f32 0.0, %v924
  %926 = vmatmul.bf16.gmra.mxu0 %v400
  %v927 = vpop.f32.mrf.mxu0
  %v928 = vadd.f32 0.0, %v927
  %v929 = vpop.f32.mrf.mxu0
  %930 = vdwg.mxu0
  %931 = vmatpush.bf16.msra.mxu0 0
  %932 = vmatpush.bf16.msra.mxu0 0
  %933 = vmatpush.bf16.msra.mxu0 0
  %934 = vmatpush.bf16.msra.mxu0 0
  %935 = vmatpush.bf16.msra.mxu0 0
  %936 = vmatpush.bf16.msra.mxu0 0
  %937 = vmatpush.bf16.msra.mxu0 0
  %938 = vmatpush.bf16.msra.mxu0 %v476
  %939 = vmatmul.bf16.gmra.mxu0 %v397
  %v940 = vpop.f32.mrf.mxu0
  %v941 = vadd.f32 0.0, %v940
  %v942 = vpop.f32.mrf.mxu0
  %v943 = vadd.f32 0.0, %v942
  %944 = vmatmul.bf16.gmra.mxu0 %v400
  %v945 = vpop.f32.mrf.mxu0
  %v946 = vadd.f32 0.0, %v945
  %v947 = vpop.f32.mrf.mxu0
  %948 = vdwg.mxu0
  %949 = vmatpush.bf16.msra.mxu0 0
  %950 = vmatpush.bf16.msra.mxu0 0
  %951 = vmatpush.bf16.msra.mxu0 0
  %952 = vmatpush.bf16.msra.mxu0 0
  %953 = vmatpush.bf16.msra.mxu0 0
  %954 = vmatpush.bf16.msra.mxu0 0
  %955 = vmatpush.bf16.msra.mxu0 0
  %956 = vmatpush.bf16.msra.mxu0 %v479
  %957 = vmatmul.bf16.gmra.mxu0 %v397
  %v958 = vpop.f32.mrf.mxu0
  %v959 = vadd.f32 0.0, %v958
  %v960 = vpop.f32.mrf.mxu0
  %v961 = vadd.f32 0.0, %v960
  %962 = vmatmul.bf16.gmra.mxu0 %v400
  %v963 = vpop.f32.mrf.mxu0
  %v964 = vadd.f32 0.0, %v963
  %v965 = vpop.f32.mrf.mxu0
  %966 = vdwg.mxu0
  %967 = vmatpush.bf16.msra.mxu0 0
  %968 = vmatpush.bf16.msra.mxu0 0
  %969 = vmatpush.bf16.msra.mxu0 0
  %970 = vmatpush.bf16.msra.mxu0 0
  %971 = vmatpush.bf16.msra.mxu0 0
  %972 = vmatpush.bf16.msra.mxu0 0
  %973 = vmatpush.bf16.msra.mxu0 0
  %974 = vmatpush.bf16.msra.mxu0 %v482
  %975 = vmatmul.bf16.gmra.mxu0 %v397
  %v976 = vpop.f32.mrf.mxu0
  %v977 = vadd.f32 0.0, %v976
  %v978 = vpop.f32.mrf.mxu0
  %v979 = vadd.f32 0.0, %v978
  %980 = vmatmul.bf16.gmra.mxu0 %v400
  %v981 = vpop.f32.mrf.mxu0
  %v982 = vadd.f32 0.0, %v981
  %v983 = vpop.f32.mrf.mxu0
  %984 = vdwg.mxu0
  %985 = vmatpush.bf16.msra.mxu0 0
  %986 = vmatpush.bf16.msra.mxu0 0
  %987 = vmatpush.bf16.msra.mxu0 0
  %988 = vmatpush.bf16.msra.mxu0 0
  %989 = vmatpush.bf16.msra.mxu0 0
  %990 = vmatpush.bf16.msra.mxu0 0
  %991 = vmatpush.bf16.msra.mxu0 0
  %992 = vmatpush.bf16.msra.mxu0 %v485
  %993 = vmatmul.bf16.gmra.mxu0 %v397
  %v994 = vpop.f32.mrf.mxu0
  %v995 = vadd.f32 0.0, %v994
  %v996 = vpop.f32.mrf.mxu0
  %v997 = vadd.f32 0.0, %v996
  %998 = vmatmul.bf16.gmra.mxu0 %v400
  %v999 = vpop.f32.mrf.mxu0
  %v1000 = vadd.f32 0.0, %v999
  %v1001 = vpop.f32.mrf.mxu0
  %1002 = vdwg.mxu0
  %1003 = vmatpush.bf16.msra.mxu0 0
  %1004 = vmatpush.bf16.msra.mxu0 0
  %1005 = vmatpush.bf16.msra.mxu0 0
  %1006 = vmatpush.bf16.msra.mxu0 0
  %1007 = vmatpush.bf16.msra.mxu0 0
  %1008 = vmatpush.bf16.msra.mxu0 0
  %1009 = vmatpush.bf16.msra.mxu0 0
  %1010 = vmatpush.bf16.msra.mxu0 %v488
  %1011 = vmatmul.bf16.gmra.mxu0 %v397
  %v1012 = vpop.f32.mrf.mxu0
  %v1013 = vadd.f32 0.0, %v1012
  %v1014 = vpop.f32.mrf.mxu0
  %v1015 = vadd.f32 0.0, %v1014
  %1016 = vmatmul.bf16.gmra.mxu0 %v400
  %v1017 = vpop.f32.mrf.mxu0
  %v1018 = vadd.f32 0.0, %v1017
  %v1019 = vpop.f32.mrf.mxu0
  %1020 = vdwg.mxu0
  %1021 = vmatpush.bf16.msra.mxu0 0
  %1022 = vmatpush.bf16.msra.mxu0 0
  %1023 = vmatpush.bf16.msra.mxu0 0
  %1024 = vmatpush.bf16.msra.mxu0 0
  %1025 = vmatpush.bf16.msra.mxu0 0
  %1026 = vmatpush.bf16.msra.mxu0 0
  %1027 = vmatpush.bf16.msra.mxu0 0
  %1028 = vmatpush.bf16.msra.mxu0 %v491
  %1029 = vmatmul.bf16.gmra.mxu0 %v397
  %v1030 = vpop.f32.mrf.mxu0
  %v1031 = vadd.f32 0.0, %v1030
  %v1032 = vpop.f32.mrf.mxu0
  %v1033 = vadd.f32 0.0, %v1032
  %1034 = vmatmul.bf16.gmra.mxu0 %v400
  %v1035 = vpop.f32.mrf.mxu0
  %v1036 = vadd.f32 0.0, %v1035
  %v1037 = vpop.f32.mrf.mxu0
  %1038 = vdwg.mxu0
  %1039 = vmatpush.bf16.msra.mxu0 0
  %1040 = vmatpush.bf16.msra.mxu0 0
  %1041 = vmatpush.bf16.msra.mxu0 0
  %1042 = vmatpush.bf16.msra.mxu0 0
  %1043 = vmatpush.bf16.msra.mxu0 0
  %1044 = vmatpush.bf16.msra.mxu0 0
  %1045 = vmatpush.bf16.msra.mxu0 0
  %1046 = vmatpush.bf16.msra.mxu0 %v494
  %1047 = vmatmul.bf16.gmra.mxu0 %v397
  %v1048 = vpop.f32.mrf.mxu0
  %v1049 = vadd.f32 0.0, %v1048
  %v1050 = vpop.f32.mrf.mxu0
  %v1051 = vadd.f32 0.0, %v1050
  %1052 = vmatmul.bf16.gmra.mxu0 %v400
  %v1053 = vpop.f32.mrf.mxu0
  %v1054 = vadd.f32 0.0, %v1053
  %v1055 = vpop.f32.mrf.mxu0
  %1056 = vdwg.mxu0
  %1057 = vmatpush.bf16.msra.mxu0 0
  %1058 = vmatpush.bf16.msra.mxu0 0
  %1059 = vmatpush.bf16.msra.mxu0 0
  %1060 = vmatpush.bf16.msra.mxu0 0
  %1061 = vmatpush.bf16.msra.mxu0 0
  %1062 = vmatpush.bf16.msra.mxu0 0
  %1063 = vmatpush.bf16.msra.mxu0 0
  %1064 = vmatpush.bf16.msra.mxu0 %v497
  %1065 = vmatmul.bf16.gmra.mxu0 %v397
  %v1066 = vpop.f32.mrf.mxu0
  %v1067 = vadd.f32 0.0, %v1066
  %v1068 = vpop.f32.mrf.mxu0
  %v1069 = vadd.f32 0.0, %v1068
  %1070 = vmatmul.bf16.gmra.mxu0 %v400
  %v1071 = vpop.f32.mrf.mxu0
  %v1072 = vadd.f32 0.0, %v1071
  %v1073 = vpop.f32.mrf.mxu0
  %1074 = vdwg.mxu0
  %v1075 = vadd.f32 %v53, %v509
  %v1076 = vadd.f32 %v54, %v527
  %v1077 = vadd.f32 %v55, %v545
  %v1078 = vadd.f32 %v56, %v563
  %v1079 = vadd.f32 %v57, %v581
  %v1080 = vadd.f32 %v58, %v599
  %v1081 = vadd.f32 %v59, %v617
  %v1082 = vadd.f32 %v60, %v635
  %v1083 = vadd.f32 %v61, %v653
  %v1084 = vadd.f32 %v62, %v671
  %v1085 = vadd.f32 %v63, %v689
  %v1086 = vadd.f32 %v64, %v707
  %v1087 = vadd.f32 %v65, %v725
  %v1088 = vadd.f32 %v66, %v743
  %v1089 = vadd.f32 %v67, %v761
  %v1090 = vadd.f32 %v68, %v779
  %v1091 = vadd.f32 %v69, %v797
  %v1092 = vadd.f32 %v70, %v815
  %v1093 = vadd.f32 %v71, %v833
  %v1094 = vadd.f32 %v72, %v851
  %v1095 = vadd.f32 %v73, %v869
  %v1096 = vadd.f32 %v74, %v887
  %v1097 = vadd.f32 %v75, %v905
  %v1098 = vadd.f32 %v76, %v923
  %v1099 = vadd.f32 %v77, %v941
  %v1100 = vadd.f32 %v78, %v959
  %v1101 = vadd.f32 %v79, %v977
  %v1102 = vadd.f32 %v80, %v995
  %v1103 = vadd.f32 %v81, %v1013
  %v1104 = vadd.f32 %v82, %v1031
  %v1105 = vadd.f32 %v83, %v1049
  %v1106 = vadd.f32 %v84, %v1067
  %v1107 = vadd.f32 %v85, %v511
  %v1108 = vadd.f32 %v86, %v529
  %v1109 = vadd.f32 %v87, %v547
  %v1110 = vadd.f32 %v88, %v565
  %v1111 = vadd.f32 %v89, %v583
  %v1112 = vadd.f32 %v90, %v601
  %v1113 = vadd.f32 %v91, %v619
  %v1114 = vadd.f32 %v92, %v637
  %v1115 = vadd.f32 %v93, %v655
  %v1116 = vadd.f32 %v94, %v673
  %v1117 = vadd.f32 %v95, %v691
  %v1118 = vadd.f32 %v96, %v709
  %v1119 = vadd.f32 %v97, %v727
  %v1120 = vadd.f32 %v98, %v745
  %v1121 = vadd.f32 %v99, %v763
  %v1122 = vadd.f32 %v100, %v781
  %v1123 = vadd.f32 %v101, %v799
  %v1124 = vadd.f32 %v102, %v817
  %v1125 = vadd.f32 %v103, %v835
  %v1126 = vadd.f32 %v104, %v853
  %v1127 = vadd.f32 %v105, %v871
  %v1128 = vadd.f32 %v106, %v889
  %v1129 = vadd.f32 %v107, %v907
  %v1130 = vadd.f32 %v108, %v925
  %v1131 = vadd.f32 %v109, %v943
  %v1132 = vadd.f32 %v110, %v961
  %v1133 = vadd.f32 %v111, %v979
  %v1134 = vadd.f32 %v112, %v997
  %v1135 = vadd.f32 %v113, %v1015
  %v1136 = vadd.f32 %v114, %v1033
  %v1137 = vadd.f32 %v115, %v1051
  %v1138 = vadd.f32 %v116, %v1069
  %v1139 = vadd.f32 %v117, %v514
  %v1140 = vadd.f32 %v118, %v532
  %v1141 = vadd.f32 %v119, %v550
  %v1142 = vadd.f32 %v120, %v568
  %v1143 = vadd.f32 %v121, %v586
  %v1144 = vadd.f32 %v122, %v604
  %v1145 = vadd.f32 %v123, %v622
  %v1146 = vadd.f32 %v124, %v640
  %v1147 = vadd.f32 %v125, %v658
  %v1148 = vadd.f32 %v126, %v676
  %v1149 = vadd.f32 %v127, %v694
  %v1150 = vadd.f32 %v128, %v712
  %v1151 = vadd.f32 %v129, %v730
  %v1152 = vadd.f32 %v130, %v748
  %v1153 = vadd.f32 %v131, %v766
  %v1154 = vadd.f32 %v132, %v784
  %v1155 = vadd.f32 %v133, %v802
  %v1156 = vadd.f32 %v134, %v820
  %v1157 = vadd.f32 %v135, %v838
  %v1158 = vadd.f32 %v136, %v856
  %v1159 = vadd.f32 %v137, %v874
  %v1160 = vadd.f32 %v138, %v892
  %v1161 = vadd.f32 %v139, %v910
  %v1162 = vadd.f32 %v140, %v928
  %v1163 = vadd.f32 %v141, %v946
  %v1164 = vadd.f32 %v142, %v964
  %v1165 = vadd.f32 %v143, %v982
  %v1166 = vadd.f32 %v144, %v1000
  %v1167 = vadd.f32 %v145, %v1018
  %v1168 = vadd.f32 %v146, %v1036
  %v1169 = vadd.f32 %v147, %v1054
  %v1170 = vadd.f32 %v148, %v1072
  %s1171 = scalar_lea.vmem %s1, 12
  %v1172 = vld [vmem:[%s1171] sm:$0xf]
  %v1173 = vld [vmem:[%s1171 + $0x4] sm:$0xf]
  %v1174 = vld [vmem:[%s1171 + $0x8] sm:$0xf]
  %v1175 = vpack.c.bf16 %v21, %v21
  %v1176 = vpack.c.bf16 %v22, %v22
  %v1177 = vpack.c.bf16 %v23, %v23
  %v1178 = vpack.c.bf16 %v24, %v24
  %v1179 = vpack.c.bf16 %v25, %v25
  %v1180 = vpack.c.bf16 %v26, %v26
  %v1181 = vpack.c.bf16 %v27, %v27
  %v1182 = vpack.c.bf16 %v28, %v28
  %v1183 = vpack.c.bf16 %v29, %v29
  %v1184 = vpack.c.bf16 %v30, %v30
  %v1185 = vpack.c.bf16 %v31, %v31
  %v1186 = vpack.c.bf16 %v32, %v32
  %v1187 = vpack.c.bf16 %v33, %v33
  %v1188 = vpack.c.bf16 %v34, %v34
  %v1189 = vpack.c.bf16 %v35, %v35
  %v1190 = vpack.c.bf16 %v36, %v36
  %v1191 = vpack.c.bf16 %v37, %v37
  %v1192 = vpack.c.bf16 %v38, %v38
  %v1193 = vpack.c.bf16 %v39, %v39
  %v1194 = vpack.c.bf16 %v40, %v40
  %v1195 = vpack.c.bf16 %v41, %v41
  %v1196 = vpack.c.bf16 %v42, %v42
  %v1197 = vpack.c.bf16 %v43, %v43
  %v1198 = vpack.c.bf16 %v44, %v44
  %v1199 = vpack.c.bf16 %v45, %v45
  %v1200 = vpack.c.bf16 %v46, %v46
  %v1201 = vpack.c.bf16 %v47, %v47
  %v1202 = vpack.c.bf16 %v48, %v48
  %v1203 = vpack.c.bf16 %v49, %v49
  %v1204 = vpack.c.bf16 %v50, %v50
  %v1205 = vpack.c.bf16 %v51, %v51
  %v1206 = vpack.c.bf16 %v52, %v52
  %v1210 = vunpack.c.l.b16 %v1172
  %v1211 = vunpack.c.l.b16 %v1173
  %v1212 = vunpack.c.l.b16 %v1174
  %v1213 = vpack.c.b16 %v1211, %v1210
  %v1214 = vpack.c.b16 %v1212, %v1212
  %v1216 = vsel %vm395, %v1213, 0
  %v1219 = vsel %vm395, %v1214, 0
  %v1222 = vsel %vm402, %v1175, 0
  %v1225 = vsel %vm402, %v1176, 0
  %v1228 = vsel %vm402, %v1177, 0
  %v1231 = vsel %vm402, %v1178, 0
  %v1234 = vsel %vm402, %v1179, 0
  %v1237 = vsel %vm402, %v1180, 0
  %v1240 = vsel %vm402, %v1181, 0
  %v1243 = vsel %vm402, %v1182, 0
  %v1246 = vsel %vm402, %v1183, 0
  %v1249 = vsel %vm402, %v1184, 0
  %v1252 = vsel %vm402, %v1185, 0
  %v1255 = vsel %vm402, %v1186, 0
  %v1258 = vsel %vm402, %v1187, 0
  %v1261 = vsel %vm402, %v1188, 0
  %v1264 = vsel %vm402, %v1189, 0
  %v1267 = vsel %vm402, %v1190, 0
  %v1270 = vsel %vm402, %v1191, 0
  %v1273 = vsel %vm402, %v1192, 0
  %v1276 = vsel %vm402, %v1193, 0
  %v1279 = vsel %vm402, %v1194, 0
  %v1282 = vsel %vm402, %v1195, 0
  %v1285 = vsel %vm402, %v1196, 0
  %v1288 = vsel %vm402, %v1197, 0
  %v1291 = vsel %vm402, %v1198, 0
  %v1294 = vsel %vm402, %v1199, 0
  %v1297 = vsel %vm402, %v1200, 0
  %v1300 = vsel %vm402, %v1201, 0
  %v1303 = vsel %vm402, %v1202, 0
  %v1306 = vsel %vm402, %v1203, 0
  %v1309 = vsel %vm402, %v1204, 0
  %v1312 = vsel %vm402, %v1205, 0
  %v1315 = vsel %vm402, %v1206, 0
  %1317 = vmatpush.bf16.msra.mxu0 0
  %1318 = vmatpush.bf16.msra.mxu0 0
  %1319 = vmatpush.bf16.msra.mxu0 0
  %1320 = vmatpush.bf16.msra.mxu0 0
  %1321 = vmatpush.bf16.msra.mxu0 0
  %1322 = vmatpush.bf16.msra.mxu0 0
  %1323 = vmatpush.bf16.msra.mxu0 0
  %1324 = vmatpush.bf16.msra.mxu0 %v1222
  %1325 = vmatmul.bf16.gmra.mxu0 %v1216
  %v1326 = vpop.f32.mrf.mxu0
  %v1327 = vadd.f32 0.0, %v1326
  %v1328 = vpop.f32.mrf.mxu0
  %v1329 = vadd.f32 0.0, %v1328
  %1330 = vmatmul.bf16.gmra.mxu0 %v1219
  %v1331 = vpop.f32.mrf.mxu0
  %v1332 = vadd.f32 0.0, %v1331
  %v1333 = vpop.f32.mrf.mxu0
  %1334 = vdwg.mxu0
  %1335 = vmatpush.bf16.msra.mxu0 0
  %1336 = vmatpush.bf16.msra.mxu0 0
  %1337 = vmatpush.bf16.msra.mxu0 0
  %1338 = vmatpush.bf16.msra.mxu0 0
  %1339 = vmatpush.bf16.msra.mxu0 0
  %1340 = vmatpush.bf16.msra.mxu0 0
  %1341 = vmatpush.bf16.msra.mxu0 0
  %1342 = vmatpush.bf16.msra.mxu0 %v1225
  %1343 = vmatmul.bf16.gmra.mxu0 %v1216
  %v1344 = vpop.f32.mrf.mxu0
  %v1345 = vadd.f32 0.0, %v1344
  %v1346 = vpop.f32.mrf.mxu0
  %v1347 = vadd.f32 0.0, %v1346
  %1348 = vmatmul.bf16.gmra.mxu0 %v1219
  %v1349 = vpop.f32.mrf.mxu0
  %v1350 = vadd.f32 0.0, %v1349
  %v1351 = vpop.f32.mrf.mxu0
  %1352 = vdwg.mxu0
  %1353 = vmatpush.bf16.msra.mxu0 0
  %1354 = vmatpush.bf16.msra.mxu0 0
  %1355 = vmatpush.bf16.msra.mxu0 0
  %1356 = vmatpush.bf16.msra.mxu0 0
  %1357 = vmatpush.bf16.msra.mxu0 0
  %1358 = vmatpush.bf16.msra.mxu0 0
  %1359 = vmatpush.bf16.msra.mxu0 0
  %1360 = vmatpush.bf16.msra.mxu0 %v1228
  %1361 = vmatmul.bf16.gmra.mxu0 %v1216
  %v1362 = vpop.f32.mrf.mxu0
  %v1363 = vadd.f32 0.0, %v1362
  %v1364 = vpop.f32.mrf.mxu0
  %v1365 = vadd.f32 0.0, %v1364
  %1366 = vmatmul.bf16.gmra.mxu0 %v1219
  %v1367 = vpop.f32.mrf.mxu0
  %v1368 = vadd.f32 0.0, %v1367
  %v1369 = vpop.f32.mrf.mxu0
  %1370 = vdwg.mxu0
  %1371 = vmatpush.bf16.msra.mxu0 0
  %1372 = vmatpush.bf16.msra.mxu0 0
  %1373 = vmatpush.bf16.msra.mxu0 0
  %1374 = vmatpush.bf16.msra.mxu0 0
  %1375 = vmatpush.bf16.msra.mxu0 0
  %1376 = vmatpush.bf16.msra.mxu0 0
  %1377 = vmatpush.bf16.msra.mxu0 0
  %1378 = vmatpush.bf16.msra.mxu0 %v1231
  %1379 = vmatmul.bf16.gmra.mxu0 %v1216
  %v1380 = vpop.f32.mrf.mxu0
  %v1381 = vadd.f32 0.0, %v1380
  %v1382 = vpop.f32.mrf.mxu0
  %v1383 = vadd.f32 0.0, %v1382
  %1384 = vmatmul.bf16.gmra.mxu0 %v1219
  %v1385 = vpop.f32.mrf.mxu0
  %v1386 = vadd.f32 0.0, %v1385
  %v1387 = vpop.f32.mrf.mxu0
  %1388 = vdwg.mxu0
  %1389 = vmatpush.bf16.msra.mxu0 0
  %1390 = vmatpush.bf16.msra.mxu0 0
  %1391 = vmatpush.bf16.msra.mxu0 0
  %1392 = vmatpush.bf16.msra.mxu0 0
  %1393 = vmatpush.bf16.msra.mxu0 0
  %1394 = vmatpush.bf16.msra.mxu0 0
  %1395 = vmatpush.bf16.msra.mxu0 0
  %1396 = vmatpush.bf16.msra.mxu0 %v1234
  %1397 = vmatmul.bf16.gmra.mxu0 %v1216
  %v1398 = vpop.f32.mrf.mxu0
  %v1399 = vadd.f32 0.0, %v1398
  %v1400 = vpop.f32.mrf.mxu0
  %v1401 = vadd.f32 0.0, %v1400
  %1402 = vmatmul.bf16.gmra.mxu0 %v1219
  %v1403 = vpop.f32.mrf.mxu0
  %v1404 = vadd.f32 0.0, %v1403
  %v1405 = vpop.f32.mrf.mxu0
  %1406 = vdwg.mxu0
  %1407 = vmatpush.bf16.msra.mxu0 0
  %1408 = vmatpush.bf16.msra.mxu0 0
  %1409 = vmatpush.bf16.msra.mxu0 0
  %1410 = vmatpush.bf16.msra.mxu0 0
  %1411 = vmatpush.bf16.msra.mxu0 0
  %1412 = vmatpush.bf16.msra.mxu0 0
  %1413 = vmatpush.bf16.msra.mxu0 0
  %1414 = vmatpush.bf16.msra.mxu0 %v1237
  %1415 = vmatmul.bf16.gmra.mxu0 %v1216
  %v1416 = vpop.f32.mrf.mxu0
  %v1417 = vadd.f32 0.0, %v1416
  %v1418 = vpop.f32.mrf.mxu0
  %v1419 = vadd.f32 0.0, %v1418
  %1420 = vmatmul.bf16.gmra.mxu0 %v1219
  %v1421 = vpop.f32.mrf.mxu0
  %v1422 = vadd.f32 0.0, %v1421
  %v1423 = vpop.f32.mrf.mxu0
  %1424 = vdwg.mxu0
  %1425 = vmatpush.bf16.msra.mxu0 0
  %1426 = vmatpush.bf16.msra.mxu0 0
  %1427 = vmatpush.bf16.msra.mxu0 0
  %1428 = vmatpush.bf16.msra.mxu0 0
  %1429 = vmatpush.bf16.msra.mxu0 0
  %1430 = vmatpush.bf16.msra.mxu0 0
  %1431 = vmatpush.bf16.msra.mxu0 0
  %1432 = vmatpush.bf16.msra.mxu0 %v1240
  %1433 = vmatmul.bf16.gmra.mxu0 %v1216
  %v1434 = vpop.f32.mrf.mxu0
  %v1435 = vadd.f32 0.0, %v1434
  %v1436 = vpop.f32.mrf.mxu0
  %v1437 = vadd.f32 0.0, %v1436
  %1438 = vmatmul.bf16.gmra.mxu0 %v1219
  %v1439 = vpop.f32.mrf.mxu0
  %v1440 = vadd.f32 0.0, %v1439
  %v1441 = vpop.f32.mrf.mxu0
  %1442 = vdwg.mxu0
  %1443 = vmatpush.bf16.msra.mxu0 0
  %1444 = vmatpush.bf16.msra.mxu0 0
  %1445 = vmatpush.bf16.msra.mxu0 0
  %1446 = vmatpush.bf16.msra.mxu0 0
  %1447 = vmatpush.bf16.msra.mxu0 0
  %1448 = vmatpush.bf16.msra.mxu0 0
  %1449 = vmatpush.bf16.msra.mxu0 0
  %1450 = vmatpush.bf16.msra.mxu0 %v1243
  %1451 = vmatmul.bf16.gmra.mxu0 %v1216
  %v1452 = vpop.f32.mrf.mxu0
  %v1453 = vadd.f32 0.0, %v1452
  %v1454 = vpop.f32.mrf.mxu0
  %v1455 = vadd.f32 0.0, %v1454
  %1456 = vmatmul.bf16.gmra.mxu0 %v1219
  %v1457 = vpop.f32.mrf.mxu0
  %v1458 = vadd.f32 0.0, %v1457
  %v1459 = vpop.f32.mrf.mxu0
  %1460 = vdwg.mxu0
  %1461 = vmatpush.bf16.msra.mxu0 0
  %1462 = vmatpush.bf16.msra.mxu0 0
  %1463 = vmatpush.bf16.msra.mxu0 0
  %1464 = vmatpush.bf16.msra.mxu0 0
  %1465 = vmatpush.bf16.msra.mxu0 0
  %1466 = vmatpush.bf16.msra.mxu0 0
  %1467 = vmatpush.bf16.msra.mxu0 0
  %1468 = vmatpush.bf16.msra.mxu0 %v1246
  %1469 = vmatmul.bf16.gmra.mxu0 %v1216
  %v1470 = vpop.f32.mrf.mxu0
  %v1471 = vadd.f32 0.0, %v1470
  %v1472 = vpop.f32.mrf.mxu0
  %v1473 = vadd.f32 0.0, %v1472
  %1474 = vmatmul.bf16.gmra.mxu0 %v1219
  %v1475 = vpop.f32.mrf.mxu0
  %v1476 = vadd.f32 0.0, %v1475
  %v1477 = vpop.f32.mrf.mxu0
  %1478 = vdwg.mxu0
  %1479 = vmatpush.bf16.msra.mxu0 0
  %1480 = vmatpush.bf16.msra.mxu0 0
  %1481 = vmatpush.bf16.msra.mxu0 0
  %1482 = vmatpush.bf16.msra.mxu0 0
  %1483 = vmatpush.bf16.msra.mxu0 0
  %1484 = vmatpush.bf16.msra.mxu0 0
  %1485 = vmatpush.bf16.msra.mxu0 0
  %1486 = vmatpush.bf16.msra.mxu0 %v1249
  %1487 = vmatmul.bf16.gmra.mxu0 %v1216
  %v1488 = vpop.f32.mrf.mxu0
  %v1489 = vadd.f32 0.0, %v1488
  %v1490 = vpop.f32.mrf.mxu0
  %v1491 = vadd.f32 0.0, %v1490
  %1492 = vmatmul.bf16.gmra.mxu0 %v1219
  %v1493 = vpop.f32.mrf.mxu0
  %v1494 = vadd.f32 0.0, %v1493
  %v1495 = vpop.f32.mrf.mxu0
  %1496 = vdwg.mxu0
  %1497 = vmatpush.bf16.msra.mxu0 0
  %1498 = vmatpush.bf16.msra.mxu0 0
  %1499 = vmatpush.bf16.msra.mxu0 0
  %1500 = vmatpush.bf16.msra.mxu0 0
  %1501 = vmatpush.bf16.msra.mxu0 0
  %1502 = vmatpush.bf16.msra.mxu0 0
  %1503 = vmatpush.bf16.msra.mxu0 0
  %1504 = vmatpush.bf16.msra.mxu0 %v1252
  %1505 = vmatmul.bf16.gmra.mxu0 %v1216
  %v1506 = vpop.f32.mrf.mxu0
  %v1507 = vadd.f32 0.0, %v1506
  %v1508 = vpop.f32.mrf.mxu0
  %v1509 = vadd.f32 0.0, %v1508
  %1510 = vmatmul.bf16.gmra.mxu0 %v1219
  %v1511 = vpop.f32.mrf.mxu0
  %v1512 = vadd.f32 0.0, %v1511
  %v1513 = vpop.f32.mrf.mxu0
  %1514 = vdwg.mxu0
  %1515 = vmatpush.bf16.msra.mxu0 0
  %1516 = vmatpush.bf16.msra.mxu0 0
  %1517 = vmatpush.bf16.msra.mxu0 0
  %1518 = vmatpush.bf16.msra.mxu0 0
  %1519 = vmatpush.bf16.msra.mxu0 0
  %1520 = vmatpush.bf16.msra.mxu0 0
  %1521 = vmatpush.bf16.msra.mxu0 0
  %1522 = vmatpush.bf16.msra.mxu0 %v1255
  %1523 = vmatmul.bf16.gmra.mxu0 %v1216
  %v1524 = vpop.f32.mrf.mxu0
  %v1525 = vadd.f32 0.0, %v1524
  %v1526 = vpop.f32.mrf.mxu0
  %v1527 = vadd.f32 0.0, %v1526
  %1528 = vmatmul.bf16.gmra.mxu0 %v1219
  %v1529 = vpop.f32.mrf.mxu0
  %v1530 = vadd.f32 0.0, %v1529
  %v1531 = vpop.f32.mrf.mxu0
  %1532 = vdwg.mxu0
  %1533 = vmatpush.bf16.msra.mxu0 0
  %1534 = vmatpush.bf16.msra.mxu0 0
  %1535 = vmatpush.bf16.msra.mxu0 0
  %1536 = vmatpush.bf16.msra.mxu0 0
  %1537 = vmatpush.bf16.msra.mxu0 0
  %1538 = vmatpush.bf16.msra.mxu0 0
  %1539 = vmatpush.bf16.msra.mxu0 0
  %1540 = vmatpush.bf16.msra.mxu0 %v1258
  %1541 = vmatmul.bf16.gmra.mxu0 %v1216
  %v1542 = vpop.f32.mrf.mxu0
  %v1543 = vadd.f32 0.0, %v1542
  %v1544 = vpop.f32.mrf.mxu0
  %v1545 = vadd.f32 0.0, %v1544
  %1546 = vmatmul.bf16.gmra.mxu0 %v1219
  %v1547 = vpop.f32.mrf.mxu0
  %v1548 = vadd.f32 0.0, %v1547
  %v1549 = vpop.f32.mrf.mxu0
  %1550 = vdwg.mxu0
  %1551 = vmatpush.bf16.msra.mxu0 0
  %1552 = vmatpush.bf16.msra.mxu0 0
  %1553 = vmatpush.bf16.msra.mxu0 0
  %1554 = vmatpush.bf16.msra.mxu0 0
  %1555 = vmatpush.bf16.msra.mxu0 0
  %1556 = vmatpush.bf16.msra.mxu0 0
  %1557 = vmatpush.bf16.msra.mxu0 0
  %1558 = vmatpush.bf16.msra.mxu0 %v1261
  %1559 = vmatmul.bf16.gmra.mxu0 %v1216
  %v1560 = vpop.f32.mrf.mxu0
  %v1561 = vadd.f32 0.0, %v1560
  %v1562 = vpop.f32.mrf.mxu0
  %v1563 = vadd.f32 0.0, %v1562
  %1564 = vmatmul.bf16.gmra.mxu0 %v1219
  %v1565 = vpop.f32.mrf.mxu0
  %v1566 = vadd.f32 0.0, %v1565
  %v1567 = vpop.f32.mrf.mxu0
  %1568 = vdwg.mxu0
  %1569 = vmatpush.bf16.msra.mxu0 0
  %1570 = vmatpush.bf16.msra.mxu0 0
  %1571 = vmatpush.bf16.msra.mxu0 0
  %1572 = vmatpush.bf16.msra.mxu0 0
  %1573 = vmatpush.bf16.msra.mxu0 0
  %1574 = vmatpush.bf16.msra.mxu0 0
  %1575 = vmatpush.bf16.msra.mxu0 0
  %1576 = vmatpush.bf16.msra.mxu0 %v1264
  %1577 = vmatmul.bf16.gmra.mxu0 %v1216
  %v1578 = vpop.f32.mrf.mxu0
  %v1579 = vadd.f32 0.0, %v1578
  %v1580 = vpop.f32.mrf.mxu0
  %v1581 = vadd.f32 0.0, %v1580
  %1582 = vmatmul.bf16.gmra.mxu0 %v1219
  %v1583 = vpop.f32.mrf.mxu0
  %v1584 = vadd.f32 0.0, %v1583
  %v1585 = vpop.f32.mrf.mxu0
  %1586 = vdwg.mxu0
  %1587 = vmatpush.bf16.msra.mxu0 0
  %1588 = vmatpush.bf16.msra.mxu0 0
  %1589 = vmatpush.bf16.msra.mxu0 0
  %1590 = vmatpush.bf16.msra.mxu0 0
  %1591 = vmatpush.bf16.msra.mxu0 0
  %1592 = vmatpush.bf16.msra.mxu0 0
  %1593 = vmatpush.bf16.msra.mxu0 0
  %1594 = vmatpush.bf16.msra.mxu0 %v1267
  %1595 = vmatmul.bf16.gmra.mxu0 %v1216
  %v1596 = vpop.f32.mrf.mxu0
  %v1597 = vadd.f32 0.0, %v1596
  %v1598 = vpop.f32.mrf.mxu0
  %v1599 = vadd.f32 0.0, %v1598
  %1600 = vmatmul.bf16.gmra.mxu0 %v1219
  %v1601 = vpop.f32.mrf.mxu0
  %v1602 = vadd.f32 0.0, %v1601
  %v1603 = vpop.f32.mrf.mxu0
  %1604 = vdwg.mxu0
  %1605 = vmatpush.bf16.msra.mxu0 0
  %1606 = vmatpush.bf16.msra.mxu0 0
  %1607 = vmatpush.bf16.msra.mxu0 0
  %1608 = vmatpush.bf16.msra.mxu0 0
  %1609 = vmatpush.bf16.msra.mxu0 0
  %1610 = vmatpush.bf16.msra.mxu0 0
  %1611 = vmatpush.bf16.msra.mxu0 0
  %1612 = vmatpush.bf16.msra.mxu0 %v1270
  %1613 = vmatmul.bf16.gmra.mxu0 %v1216
  %v1614 = vpop.f32.mrf.mxu0
  %v1615 = vadd.f32 0.0, %v1614
  %v1616 = vpop.f32.mrf.mxu0
  %v1617 = vadd.f32 0.0, %v1616
  %1618 = vmatmul.bf16.gmra.mxu0 %v1219
  %v1619 = vpop.f32.mrf.mxu0
  %v1620 = vadd.f32 0.0, %v1619
  %v1621 = vpop.f32.mrf.mxu0
  %1622 = vdwg.mxu0
  %1623 = vmatpush.bf16.msra.mxu0 0
  %1624 = vmatpush.bf16.msra.mxu0 0
  %1625 = vmatpush.bf16.msra.mxu0 0
  %1626 = vmatpush.bf16.msra.mxu0 0
  %1627 = vmatpush.bf16.msra.mxu0 0
  %1628 = vmatpush.bf16.msra.mxu0 0
  %1629 = vmatpush.bf16.msra.mxu0 0
  %1630 = vmatpush.bf16.msra.mxu0 %v1273
  %1631 = vmatmul.bf16.gmra.mxu0 %v1216
  %v1632 = vpop.f32.mrf.mxu0
  %v1633 = vadd.f32 0.0, %v1632
  %v1634 = vpop.f32.mrf.mxu0
  %v1635 = vadd.f32 0.0, %v1634
  %1636 = vmatmul.bf16.gmra.mxu0 %v1219
  %v1637 = vpop.f32.mrf.mxu0
  %v1638 = vadd.f32 0.0, %v1637
  %v1639 = vpop.f32.mrf.mxu0
  %1640 = vdwg.mxu0
  %1641 = vmatpush.bf16.msra.mxu0 0
  %1642 = vmatpush.bf16.msra.mxu0 0
  %1643 = vmatpush.bf16.msra.mxu0 0
  %1644 = vmatpush.bf16.msra.mxu0 0
  %1645 = vmatpush.bf16.msra.mxu0 0
  %1646 = vmatpush.bf16.msra.mxu0 0
  %1647 = vmatpush.bf16.msra.mxu0 0
  %1648 = vmatpush.bf16.msra.mxu0 %v1276
  %1649 = vmatmul.bf16.gmra.mxu0 %v1216
  %v1650 = vpop.f32.mrf.mxu0
  %v1651 = vadd.f32 0.0, %v1650
  %v1652 = vpop.f32.mrf.mxu0
  %v1653 = vadd.f32 0.0, %v1652
  %1654 = vmatmul.bf16.gmra.mxu0 %v1219
  %v1655 = vpop.f32.mrf.mxu0
  %v1656 = vadd.f32 0.0, %v1655
  %v1657 = vpop.f32.mrf.mxu0
  %1658 = vdwg.mxu0
  %1659 = vmatpush.bf16.msra.mxu0 0
  %1660 = vmatpush.bf16.msra.mxu0 0
  %1661 = vmatpush.bf16.msra.mxu0 0
  %1662 = vmatpush.bf16.msra.mxu0 0
  %1663 = vmatpush.bf16.msra.mxu0 0
  %1664 = vmatpush.bf16.msra.mxu0 0
  %1665 = vmatpush.bf16.msra.mxu0 0
  %1666 = vmatpush.bf16.msra.mxu0 %v1279
  %1667 = vmatmul.bf16.gmra.mxu0 %v1216
  %v1668 = vpop.f32.mrf.mxu0
  %v1669 = vadd.f32 0.0, %v1668
  %v1670 = vpop.f32.mrf.mxu0
  %v1671 = vadd.f32 0.0, %v1670
  %1672 = vmatmul.bf16.gmra.mxu0 %v1219
  %v1673 = vpop.f32.mrf.mxu0
  %v1674 = vadd.f32 0.0, %v1673
  %v1675 = vpop.f32.mrf.mxu0
  %1676 = vdwg.mxu0
  %1677 = vmatpush.bf16.msra.mxu0 0
  %1678 = vmatpush.bf16.msra.mxu0 0
  %1679 = vmatpush.bf16.msra.mxu0 0
  %1680 = vmatpush.bf16.msra.mxu0 0
  %1681 = vmatpush.bf16.msra.mxu0 0
  %1682 = vmatpush.bf16.msra.mxu0 0
  %1683 = vmatpush.bf16.msra.mxu0 0
  %1684 = vmatpush.bf16.msra.mxu0 %v1282
  %1685 = vmatmul.bf16.gmra.mxu0 %v1216
  %v1686 = vpop.f32.mrf.mxu0
  %v1687 = vadd.f32 0.0, %v1686
  %v1688 = vpop.f32.mrf.mxu0
  %v1689 = vadd.f32 0.0, %v1688
  %1690 = vmatmul.bf16.gmra.mxu0 %v1219
  %v1691 = vpop.f32.mrf.mxu0
  %v1692 = vadd.f32 0.0, %v1691
  %v1693 = vpop.f32.mrf.mxu0
  %1694 = vdwg.mxu0
  %1695 = vmatpush.bf16.msra.mxu0 0
  %1696 = vmatpush.bf16.msra.mxu0 0
  %1697 = vmatpush.bf16.msra.mxu0 0
  %1698 = vmatpush.bf16.msra.mxu0 0
  %1699 = vmatpush.bf16.msra.mxu0 0
  %1700 = vmatpush.bf16.msra.mxu0 0
  %1701 = vmatpush.bf16.msra.mxu0 0
  %1702 = vmatpush.bf16.msra.mxu0 %v1285
  %1703 = vmatmul.bf16.gmra.mxu0 %v1216
  %v1704 = vpop.f32.mrf.mxu0
  %v1705 = vadd.f32 0.0, %v1704
  %v1706 = vpop.f32.mrf.mxu0
  %v1707 = vadd.f32 0.0, %v1706
  %1708 = vmatmul.bf16.gmra.mxu0 %v1219
  %v1709 = vpop.f32.mrf.mxu0
  %v1710 = vadd.f32 0.0, %v1709
  %v1711 = vpop.f32.mrf.mxu0
  %1712 = vdwg.mxu0
  %1713 = vmatpush.bf16.msra.mxu0 0
  %1714 = vmatpush.bf16.msra.mxu0 0
  %1715 = vmatpush.bf16.msra.mxu0 0
  %1716 = vmatpush.bf16.msra.mxu0 0
  %1717 = vmatpush.bf16.msra.mxu0 0
  %1718 = vmatpush.bf16.msra.mxu0 0
  %1719 = vmatpush.bf16.msra.mxu0 0
  %1720 = vmatpush.bf16.msra.mxu0 %v1288
  %1721 = vmatmul.bf16.gmra.mxu0 %v1216
  %v1722 = vpop.f32.mrf.mxu0
  %v1723 = vadd.f32 0.0, %v1722
  %v1724 = vpop.f32.mrf.mxu0
  %v1725 = vadd.f32 0.0, %v1724
  %1726 = vmatmul.bf16.gmra.mxu0 %v1219
  %v1727 = vpop.f32.mrf.mxu0
  %v1728 = vadd.f32 0.0, %v1727
  %v1729 = vpop.f32.mrf.mxu0
  %1730 = vdwg.mxu0
  %1731 = vmatpush.bf16.msra.mxu0 0
  %1732 = vmatpush.bf16.msra.mxu0 0
  %1733 = vmatpush.bf16.msra.mxu0 0
  %1734 = vmatpush.bf16.msra.mxu0 0
  %1735 = vmatpush.bf16.msra.mxu0 0
  %1736 = vmatpush.bf16.msra.mxu0 0
  %1737 = vmatpush.bf16.msra.mxu0 0
  %1738 = vmatpush.bf16.msra.mxu0 %v1291
  %1739 = vmatmul.bf16.gmra.mxu0 %v1216
  %v1740 = vpop.f32.mrf.mxu0
  %v1741 = vadd.f32 0.0, %v1740
  %v1742 = vpop.f32.mrf.mxu0
  %v1743 = vadd.f32 0.0, %v1742
  %1744 = vmatmul.bf16.gmra.mxu0 %v1219
  %v1745 = vpop.f32.mrf.mxu0
  %v1746 = vadd.f32 0.0, %v1745
  %v1747 = vpop.f32.mrf.mxu0
  %1748 = vdwg.mxu0
  %1749 = vmatpush.bf16.msra.mxu0 0
  %1750 = vmatpush.bf16.msra.mxu0 0
  %1751 = vmatpush.bf16.msra.mxu0 0
  %1752 = vmatpush.bf16.msra.mxu0 0
  %1753 = vmatpush.bf16.msra.mxu0 0
  %1754 = vmatpush.bf16.msra.mxu0 0
  %1755 = vmatpush.bf16.msra.mxu0 0
  %1756 = vmatpush.bf16.msra.mxu0 %v1294
  %1757 = vmatmul.bf16.gmra.mxu0 %v1216
  %v1758 = vpop.f32.mrf.mxu0
  %v1759 = vadd.f32 0.0, %v1758
  %v1760 = vpop.f32.mrf.mxu0
  %v1761 = vadd.f32 0.0, %v1760
  %1762 = vmatmul.bf16.gmra.mxu0 %v1219
  %v1763 = vpop.f32.mrf.mxu0
  %v1764 = vadd.f32 0.0, %v1763
  %v1765 = vpop.f32.mrf.mxu0
  %1766 = vdwg.mxu0
  %1767 = vmatpush.bf16.msra.mxu0 0
  %1768 = vmatpush.bf16.msra.mxu0 0
  %1769 = vmatpush.bf16.msra.mxu0 0
  %1770 = vmatpush.bf16.msra.mxu0 0
  %1771 = vmatpush.bf16.msra.mxu0 0
  %1772 = vmatpush.bf16.msra.mxu0 0
  %1773 = vmatpush.bf16.msra.mxu0 0
  %1774 = vmatpush.bf16.msra.mxu0 %v1297
  %1775 = vmatmul.bf16.gmra.mxu0 %v1216
  %v1776 = vpop.f32.mrf.mxu0
  %v1777 = vadd.f32 0.0, %v1776
  %v1778 = vpop.f32.mrf.mxu0
  %v1779 = vadd.f32 0.0, %v1778
  %1780 = vmatmul.bf16.gmra.mxu0 %v1219
  %v1781 = vpop.f32.mrf.mxu0
  %v1782 = vadd.f32 0.0, %v1781
  %v1783 = vpop.f32.mrf.mxu0
  %1784 = vdwg.mxu0
  %1785 = vmatpush.bf16.msra.mxu0 0
  %1786 = vmatpush.bf16.msra.mxu0 0
  %1787 = vmatpush.bf16.msra.mxu0 0
  %1788 = vmatpush.bf16.msra.mxu0 0
  %1789 = vmatpush.bf16.msra.mxu0 0
  %1790 = vmatpush.bf16.msra.mxu0 0
  %1791 = vmatpush.bf16.msra.mxu0 0
  %1792 = vmatpush.bf16.msra.mxu0 %v1300
  %1793 = vmatmul.bf16.gmra.mxu0 %v1216
  %v1794 = vpop.f32.mrf.mxu0
  %v1795 = vadd.f32 0.0, %v1794
  %v1796 = vpop.f32.mrf.mxu0
  %v1797 = vadd.f32 0.0, %v1796
  %1798 = vmatmul.bf16.gmra.mxu0 %v1219
  %v1799 = vpop.f32.mrf.mxu0
  %v1800 = vadd.f32 0.0, %v1799
  %v1801 = vpop.f32.mrf.mxu0
  %1802 = vdwg.mxu0
  %1803 = vmatpush.bf16.msra.mxu0 0
  %1804 = vmatpush.bf16.msra.mxu0 0
  %1805 = vmatpush.bf16.msra.mxu0 0
  %1806 = vmatpush.bf16.msra.mxu0 0
  %1807 = vmatpush.bf16.msra.mxu0 0
  %1808 = vmatpush.bf16.msra.mxu0 0
  %1809 = vmatpush.bf16.msra.mxu0 0
  %1810 = vmatpush.bf16.msra.mxu0 %v1303
  %1811 = vmatmul.bf16.gmra.mxu0 %v1216
  %v1812 = vpop.f32.mrf.mxu0
  %v1813 = vadd.f32 0.0, %v1812
  %v1814 = vpop.f32.mrf.mxu0
  %v1815 = vadd.f32 0.0, %v1814
  %1816 = vmatmul.bf16.gmra.mxu0 %v1219
  %v1817 = vpop.f32.mrf.mxu0
  %v1818 = vadd.f32 0.0, %v1817
  %v1819 = vpop.f32.mrf.mxu0
  %1820 = vdwg.mxu0
  %1821 = vmatpush.bf16.msra.mxu0 0
  %1822 = vmatpush.bf16.msra.mxu0 0
  %1823 = vmatpush.bf16.msra.mxu0 0
  %1824 = vmatpush.bf16.msra.mxu0 0
  %1825 = vmatpush.bf16.msra.mxu0 0
  %1826 = vmatpush.bf16.msra.mxu0 0
  %1827 = vmatpush.bf16.msra.mxu0 0
  %1828 = vmatpush.bf16.msra.mxu0 %v1306
  %1829 = vmatmul.bf16.gmra.mxu0 %v1216
  %v1830 = vpop.f32.mrf.mxu0
  %v1831 = vadd.f32 0.0, %v1830
  %v1832 = vpop.f32.mrf.mxu0
  %v1833 = vadd.f32 0.0, %v1832
  %1834 = vmatmul.bf16.gmra.mxu0 %v1219
  %v1835 = vpop.f32.mrf.mxu0
  %v1836 = vadd.f32 0.0, %v1835
  %v1837 = vpop.f32.mrf.mxu0
  %1838 = vdwg.mxu0
  %1839 = vmatpush.bf16.msra.mxu0 0
  %1840 = vmatpush.bf16.msra.mxu0 0
  %1841 = vmatpush.bf16.msra.mxu0 0
  %1842 = vmatpush.bf16.msra.mxu0 0
  %1843 = vmatpush.bf16.msra.mxu0 0
  %1844 = vmatpush.bf16.msra.mxu0 0
  %1845 = vmatpush.bf16.msra.mxu0 0
  %1846 = vmatpush.bf16.msra.mxu0 %v1309
  %1847 = vmatmul.bf16.gmra.mxu0 %v1216
  %v1848 = vpop.f32.mrf.mxu0
  %v1849 = vadd.f32 0.0, %v1848
  %v1850 = vpop.f32.mrf.mxu0
  %v1851 = vadd.f32 0.0, %v1850
  %1852 = vmatmul.bf16.gmra.mxu0 %v1219
  %v1853 = vpop.f32.mrf.mxu0
  %v1854 = vadd.f32 0.0, %v1853
  %v1855 = vpop.f32.mrf.mxu0
  %1856 = vdwg.mxu0
  %1857 = vmatpush.bf16.msra.mxu0 0
  %1858 = vmatpush.bf16.msra.mxu0 0
  %1859 = vmatpush.bf16.msra.mxu0 0
  %1860 = vmatpush.bf16.msra.mxu0 0
  %1861 = vmatpush.bf16.msra.mxu0 0
  %1862 = vmatpush.bf16.msra.mxu0 0
  %1863 = vmatpush.bf16.msra.mxu0 0
  %1864 = vmatpush.bf16.msra.mxu0 %v1312
  %1865 = vmatmul.bf16.gmra.mxu0 %v1216
  %v1866 = vpop.f32.mrf.mxu0
  %v1867 = vadd.f32 0.0, %v1866
  %v1868 = vpop.f32.mrf.mxu0
  %v1869 = vadd.f32 0.0, %v1868
  %1870 = vmatmul.bf16.gmra.mxu0 %v1219
  %v1871 = vpop.f32.mrf.mxu0
  %v1872 = vadd.f32 0.0, %v1871
  %v1873 = vpop.f32.mrf.mxu0
  %1874 = vdwg.mxu0
  %1875 = vmatpush.bf16.msra.mxu0 0
  %1876 = vmatpush.bf16.msra.mxu0 0
  %1877 = vmatpush.bf16.msra.mxu0 0
  %1878 = vmatpush.bf16.msra.mxu0 0
  %1879 = vmatpush.bf16.msra.mxu0 0
  %1880 = vmatpush.bf16.msra.mxu0 0
  %1881 = vmatpush.bf16.msra.mxu0 0
  %1882 = vmatpush.bf16.msra.mxu0 %v1315
  %1883 = vmatmul.bf16.gmra.mxu0 %v1216
  %v1884 = vpop.f32.mrf.mxu0
  %v1885 = vadd.f32 0.0, %v1884
  %v1886 = vpop.f32.mrf.mxu0
  %v1887 = vadd.f32 0.0, %v1886
  %1888 = vmatmul.bf16.gmra.mxu0 %v1219
  %v1889 = vpop.f32.mrf.mxu0
  %v1890 = vadd.f32 0.0, %v1889
  %v1891 = vpop.f32.mrf.mxu0
  %1892 = vdwg.mxu0
  %v1893 = vadd.f32 %v1075, %v1327
  %v1894 = vadd.f32 %v1076, %v1345
  %v1895 = vadd.f32 %v1077, %v1363
  %v1896 = vadd.f32 %v1078, %v1381
  %v1897 = vadd.f32 %v1079, %v1399
  %v1898 = vadd.f32 %v1080, %v1417
  %v1899 = vadd.f32 %v1081, %v1435
  %v1900 = vadd.f32 %v1082, %v1453
  %v1901 = vadd.f32 %v1083, %v1471
  %v1902 = vadd.f32 %v1084, %v1489
  %v1903 = vadd.f32 %v1085, %v1507
  %v1904 = vadd.f32 %v1086, %v1525
  %v1905 = vadd.f32 %v1087, %v1543
  %v1906 = vadd.f32 %v1088, %v1561
  %v1907 = vadd.f32 %v1089, %v1579
  %v1908 = vadd.f32 %v1090, %v1597
  %v1909 = vadd.f32 %v1091, %v1615
  %v1910 = vadd.f32 %v1092, %v1633
  %v1911 = vadd.f32 %v1093, %v1651
  %v1912 = vadd.f32 %v1094, %v1669
  %v1913 = vadd.f32 %v1095, %v1687
  %v1914 = vadd.f32 %v1096, %v1705
  %v1915 = vadd.f32 %v1097, %v1723
  %v1916 = vadd.f32 %v1098, %v1741
  %v1917 = vadd.f32 %v1099, %v1759
  %v1918 = vadd.f32 %v1100, %v1777
  %v1919 = vadd.f32 %v1101, %v1795
  %v1920 = vadd.f32 %v1102, %v1813
  %v1921 = vadd.f32 %v1103, %v1831
  %v1922 = vadd.f32 %v1104, %v1849
  %v1923 = vadd.f32 %v1105, %v1867
  %v1924 = vadd.f32 %v1106, %v1885
  %v1925 = vadd.f32 %v1107, %v1329
  %v1926 = vadd.f32 %v1108, %v1347
  %v1927 = vadd.f32 %v1109, %v1365
  %v1928 = vadd.f32 %v1110, %v1383
  %v1929 = vadd.f32 %v1111, %v1401
  %v1930 = vadd.f32 %v1112, %v1419
  %v1931 = vadd.f32 %v1113, %v1437
  %v1932 = vadd.f32 %v1114, %v1455
  %v1933 = vadd.f32 %v1115, %v1473
  %v1934 = vadd.f32 %v1116, %v1491
  %v1935 = vadd.f32 %v1117, %v1509
  %v1936 = vadd.f32 %v1118, %v1527
  %v1937 = vadd.f32 %v1119, %v1545
  %v1938 = vadd.f32 %v1120, %v1563
  %v1939 = vadd.f32 %v1121, %v1581
  %v1940 = vadd.f32 %v1122, %v1599
  %v1941 = vadd.f32 %v1123, %v1617
  %v1942 = vadd.f32 %v1124, %v1635
  %v1943 = vadd.f32 %v1125, %v1653
  %v1944 = vadd.f32 %v1126, %v1671
  %v1945 = vadd.f32 %v1127, %v1689
  %v1946 = vadd.f32 %v1128, %v1707
  %v1947 = vadd.f32 %v1129, %v1725
  %v1948 = vadd.f32 %v1130, %v1743
  %v1949 = vadd.f32 %v1131, %v1761
  %v1950 = vadd.f32 %v1132, %v1779
  %v1951 = vadd.f32 %v1133, %v1797
  %v1952 = vadd.f32 %v1134, %v1815
  %v1953 = vadd.f32 %v1135, %v1833
  %v1954 = vadd.f32 %v1136, %v1851
  %v1955 = vadd.f32 %v1137, %v1869
  %v1956 = vadd.f32 %v1138, %v1887
  %v1957 = vadd.f32 %v1139, %v1332
  %v1958 = vadd.f32 %v1140, %v1350
  %v1959 = vadd.f32 %v1141, %v1368
  %v1960 = vadd.f32 %v1142, %v1386
  %v1961 = vadd.f32 %v1143, %v1404
  %v1962 = vadd.f32 %v1144, %v1422
  %v1963 = vadd.f32 %v1145, %v1440
  %v1964 = vadd.f32 %v1146, %v1458
  %v1965 = vadd.f32 %v1147, %v1476
  %v1966 = vadd.f32 %v1148, %v1494
  %v1967 = vadd.f32 %v1149, %v1512
  %v1968 = vadd.f32 %v1150, %v1530
  %v1969 = vadd.f32 %v1151, %v1548
  %v1970 = vadd.f32 %v1152, %v1566
  %v1971 = vadd.f32 %v1153, %v1584
  %v1972 = vadd.f32 %v1154, %v1602
  %v1973 = vadd.f32 %v1155, %v1620
  %v1974 = vadd.f32 %v1156, %v1638
  %v1975 = vadd.f32 %v1157, %v1656
  %v1976 = vadd.f32 %v1158, %v1674
  %v1977 = vadd.f32 %v1159, %v1692
  %v1978 = vadd.f32 %v1160, %v1710
  %v1979 = vadd.f32 %v1161, %v1728
  %v1980 = vadd.f32 %v1162, %v1746
  %v1981 = vadd.f32 %v1163, %v1764
  %v1982 = vadd.f32 %v1164, %v1782
  %v1983 = vadd.f32 %v1165, %v1800
  %v1984 = vadd.f32 %v1166, %v1818
  %v1985 = vadd.f32 %v1167, %v1836
  %v1986 = vadd.f32 %v1168, %v1854
  %v1987 = vadd.f32 %v1169, %v1872
  %v1988 = vadd.f32 %v1170, %v1890
  %1989 = vrot.lane.b32.xlu0 %v21, 127
  %v1990 = vpop.permute.xlu0 %1989
  %1991 = vrot.lane.b32.xlu0 %v22, 127
  %v1992 = vpop.permute.xlu0 %1991
  %1993 = vrot.lane.b32.xlu0 %v23, 127
  %v1994 = vpop.permute.xlu0 %1993
  %1995 = vrot.lane.b32.xlu0 %v24, 127
  %v1996 = vpop.permute.xlu0 %1995
  %1997 = vrot.lane.b32.xlu0 %v25, 127
  %v1998 = vpop.permute.xlu0 %1997
  %1999 = vrot.lane.b32.xlu0 %v26, 127
  %v2000 = vpop.permute.xlu0 %1999
  %2001 = vrot.lane.b32.xlu0 %v27, 127
  %v2002 = vpop.permute.xlu0 %2001
  %2003 = vrot.lane.b32.xlu0 %v28, 127
  %v2004 = vpop.permute.xlu0 %2003
  %2005 = vrot.lane.b32.xlu0 %v29, 127
  %v2006 = vpop.permute.xlu0 %2005
  %2007 = vrot.lane.b32.xlu0 %v30, 127
  %v2008 = vpop.permute.xlu0 %2007
  %2009 = vrot.lane.b32.xlu0 %v31, 127
  %v2010 = vpop.permute.xlu0 %2009
  %2011 = vrot.lane.b32.xlu0 %v32, 127
  %v2012 = vpop.permute.xlu0 %2011
  %2013 = vrot.lane.b32.xlu0 %v33, 127
  %v2014 = vpop.permute.xlu0 %2013
  %2015 = vrot.lane.b32.xlu0 %v34, 127
  %v2016 = vpop.permute.xlu0 %2015
  %2017 = vrot.lane.b32.xlu0 %v35, 127
  %v2018 = vpop.permute.xlu0 %2017
  %2019 = vrot.lane.b32.xlu0 %v36, 127
  %v2020 = vpop.permute.xlu0 %2019
  %2021 = vrot.lane.b32.xlu0 %v37, 127
  %v2022 = vpop.permute.xlu0 %2021
  %2023 = vrot.lane.b32.xlu0 %v38, 127
  %v2024 = vpop.permute.xlu0 %2023
  %2025 = vrot.lane.b32.xlu0 %v39, 127
  %v2026 = vpop.permute.xlu0 %2025
  %2027 = vrot.lane.b32.xlu0 %v40, 127
  %v2028 = vpop.permute.xlu0 %2027
  %2029 = vrot.lane.b32.xlu0 %v41, 127
  %v2030 = vpop.permute.xlu0 %2029
  %2031 = vrot.lane.b32.xlu0 %v42, 127
  %v2032 = vpop.permute.xlu0 %2031
  %2033 = vrot.lane.b32.xlu0 %v43, 127
  %v2034 = vpop.permute.xlu0 %2033
  %2035 = vrot.lane.b32.xlu0 %v44, 127
  %v2036 = vpop.permute.xlu0 %2035
  %2037 = vrot.lane.b32.xlu0 %v45, 127
  %v2038 = vpop.permute.xlu0 %2037
  %2039 = vrot.lane.b32.xlu0 %v46, 127
  %v2040 = vpop.permute.xlu0 %2039
  %2041 = vrot.lane.b32.xlu0 %v47, 127
  %v2042 = vpop.permute.xlu0 %2041
  %2043 = vrot.lane.b32.xlu0 %v48, 127
  %v2044 = vpop.permute.xlu0 %2043
  %2045 = vrot.lane.b32.xlu0 %v49, 127
  %v2046 = vpop.permute.xlu0 %2045
  %2047 = vrot.lane.b32.xlu0 %v50, 127
  %v2048 = vpop.permute.xlu0 %2047
  %2049 = vrot.lane.b32.xlu0 %v51, 127
  %v2050 = vpop.permute.xlu0 %2049
  %2051 = vrot.lane.b32.xlu0 %v52, 127
  %v2052 = vpop.permute.xlu0 %2051
  %vm2053 = vcmp.lt.s32.totalorder %v214, 127
  %v2054 = vsel %vm2053, %v2050, %v2052
  %v2055 = vsel %vm2053, %v2048, %v2050
  %v2056 = vsel %vm2053, %v2046, %v2048
  %v2057 = vsel %vm2053, %v2044, %v2046
  %v2058 = vsel %vm2053, %v2042, %v2044
  %v2059 = vsel %vm2053, %v2040, %v2042
  %v2060 = vsel %vm2053, %v2038, %v2040
  %v2061 = vsel %vm2053, %v2036, %v2038
  %v2062 = vsel %vm2053, %v2034, %v2036
  %v2063 = vsel %vm2053, %v2032, %v2034
  %v2064 = vsel %vm2053, %v2030, %v2032
  %v2065 = vsel %vm2053, %v2028, %v2030
  %v2066 = vsel %vm2053, %v2026, %v2028
  %v2067 = vsel %vm2053, %v2024, %v2026
  %v2068 = vsel %vm2053, %v2022, %v2024
  %v2069 = vsel %vm2053, %v2020, %v2022
  %v2070 = vsel %vm2053, %v2018, %v2020
  %v2071 = vsel %vm2053, %v2016, %v2018
  %v2072 = vsel %vm2053, %v2014, %v2016
  %v2073 = vsel %vm2053, %v2012, %v2014
  %v2074 = vsel %vm2053, %v2010, %v2012
  %v2075 = vsel %vm2053, %v2008, %v2010
  %v2076 = vsel %vm2053, %v2006, %v2008
  %v2077 = vsel %vm2053, %v2004, %v2006
  %v2078 = vsel %vm2053, %v2002, %v2004
  %v2079 = vsel %vm2053, %v2000, %v2002
  %v2080 = vsel %vm2053, %v1998, %v2000
  %v2081 = vsel %vm2053, %v1996, %v1998
  %v2082 = vsel %vm2053, %v1994, %v1996
  %v2083 = vsel %vm2053, %v1992, %v1994
  %v2084 = vsel %vm2053, %v1990, %v1992
  %v2085 = vsel %vm2053, %v2052, %v1990
  %s2086 = scalar_lea.vmem %s2, 64
  %v2087 = vld [vmem:[%s2086] sm:$0xff]
  %v2088 = vld [vmem:[%s2086 + $0x8] sm:$0xff]
  %v2089 = vld [vmem:[%s2086 + $0x10] sm:$0xff]
  %v2090 = vld [vmem:[%s2086 + $0x18] sm:$0xff]
  %v2095 = vperm.slane %v2087, 0
  %v2096 = vperm.slane %v2087, 1
  %v2097 = vperm.slane %v2087, 2
  %v2098 = vperm.slane %v2087, 3
  %v2099 = vperm.slane %v2087, 4
  %v2100 = vperm.slane %v2087, 5
  %v2101 = vperm.slane %v2087, 6
  %v2102 = vperm.slane %v2087, 7
  %v2103 = vperm.slane %v2088, 0
  %v2104 = vperm.slane %v2088, 1
  %v2105 = vperm.slane %v2088, 2
  %v2106 = vperm.slane %v2088, 3
  %v2107 = vperm.slane %v2088, 4
  %v2108 = vperm.slane %v2088, 5
  %v2109 = vperm.slane %v2088, 6
  %v2110 = vperm.slane %v2088, 7
  %v2111 = vperm.slane %v2089, 0
  %v2112 = vperm.slane %v2089, 1
  %v2113 = vperm.slane %v2089, 2
  %v2114 = vperm.slane %v2089, 3
  %v2115 = vperm.slane %v2089, 4
  %v2116 = vperm.slane %v2089, 5
  %v2117 = vperm.slane %v2089, 6
  %v2118 = vperm.slane %v2089, 7
  %v2119 = vperm.slane %v2090, 0
  %v2120 = vperm.slane %v2090, 1
  %v2121 = vperm.slane %v2090, 2
  %v2122 = vperm.slane %v2090, 3
  %v2123 = vperm.slane %v2090, 4
  %v2124 = vperm.slane %v2090, 5
  %v2125 = vperm.slane %v2090, 6
  %v2126 = vperm.slane %v2090, 7
  %v2159 = vmul.f32 %v2084, %v2095
  %v2160 = vmul.f32 %v2083, %v2096
  %v2161 = vmul.f32 %v2082, %v2097
  %v2162 = vmul.f32 %v2081, %v2098
  %v2163 = vmul.f32 %v2080, %v2099
  %v2164 = vmul.f32 %v2079, %v2100
  %v2165 = vmul.f32 %v2078, %v2101
  %v2166 = vmul.f32 %v2077, %v2102
  %v2167 = vmul.f32 %v2076, %v2103
  %v2168 = vmul.f32 %v2075, %v2104
  %v2169 = vmul.f32 %v2074, %v2105
  %v2170 = vmul.f32 %v2073, %v2106
  %v2171 = vmul.f32 %v2072, %v2107
  %v2172 = vmul.f32 %v2071, %v2108
  %v2173 = vmul.f32 %v2070, %v2109
  %v2174 = vmul.f32 %v2069, %v2110
  %v2175 = vmul.f32 %v2068, %v2111
  %v2176 = vmul.f32 %v2067, %v2112
  %v2177 = vmul.f32 %v2066, %v2113
  %v2178 = vmul.f32 %v2065, %v2114
  %v2179 = vmul.f32 %v2064, %v2115
  %v2180 = vmul.f32 %v2063, %v2116
  %v2181 = vmul.f32 %v2062, %v2117
  %v2182 = vmul.f32 %v2061, %v2118
  %v2183 = vmul.f32 %v2060, %v2119
  %v2184 = vmul.f32 %v2059, %v2120
  %v2185 = vmul.f32 %v2058, %v2121
  %v2186 = vmul.f32 %v2057, %v2122
  %v2187 = vmul.f32 %v2056, %v2123
  %v2188 = vmul.f32 %v2055, %v2124
  %v2189 = vmul.f32 %v2054, %v2125
  %v2190 = vmul.f32 %v2085, %v2126
  %s2191 = scalar_lea.vmem %s1, 24
  %v2192 = vld [vmem:[%s2191] sm:$0xf]
  %v2193 = vld [vmem:[%s2191 + $0x4] sm:$0xf]
  %v2194 = vld [vmem:[%s2191 + $0x8] sm:$0xf]
  %v2195 = vpack.c.bf16 %v2159, %v2159
  %v2196 = vpack.c.bf16 %v2160, %v2160
  %v2197 = vpack.c.bf16 %v2161, %v2161
  %v2198 = vpack.c.bf16 %v2162, %v2162
  %v2199 = vpack.c.bf16 %v2163, %v2163
  %v2200 = vpack.c.bf16 %v2164, %v2164
  %v2201 = vpack.c.bf16 %v2165, %v2165
  %v2202 = vpack.c.bf16 %v2166, %v2166
  %v2203 = vpack.c.bf16 %v2167, %v2167
  %v2204 = vpack.c.bf16 %v2168, %v2168
  %v2205 = vpack.c.bf16 %v2169, %v2169
  %v2206 = vpack.c.bf16 %v2170, %v2170
  %v2207 = vpack.c.bf16 %v2171, %v2171
  %v2208 = vpack.c.bf16 %v2172, %v2172
  %v2209 = vpack.c.bf16 %v2173, %v2173
  %v2210 = vpack.c.bf16 %v2174, %v2174
  %v2211 = vpack.c.bf16 %v2175, %v2175
  %v2212 = vpack.c.bf16 %v2176, %v2176
  %v2213 = vpack.c.bf16 %v2177, %v2177
  %v2214 = vpack.c.bf16 %v2178, %v2178
  %v2215 = vpack.c.bf16 %v2179, %v2179
  %v2216 = vpack.c.bf16 %v2180, %v2180
  %v2217 = vpack.c.bf16 %v2181, %v2181
  %v2218 = vpack.c.bf16 %v2182, %v2182
  %v2219 = vpack.c.bf16 %v2183, %v2183
  %v2220 = vpack.c.bf16 %v2184, %v2184
  %v2221 = vpack.c.bf16 %v2185, %v2185
  %v2222 = vpack.c.bf16 %v2186, %v2186
  %v2223 = vpack.c.bf16 %v2187, %v2187
  %v2224 = vpack.c.bf16 %v2188, %v2188
  %v2225 = vpack.c.bf16 %v2189, %v2189
  %v2226 = vpack.c.bf16 %v2190, %v2190
  %v2230 = vunpack.c.l.b16 %v2192
  %v2231 = vunpack.c.l.b16 %v2193
  %v2232 = vunpack.c.l.b16 %v2194
  %v2233 = vpack.c.b16 %v2231, %v2230
  %v2234 = vpack.c.b16 %v2232, %v2232
  %v2236 = vsel %vm395, %v2233, 0
  %v2239 = vsel %vm395, %v2234, 0
  %v2242 = vsel %vm402, %v2195, 0
  %v2245 = vsel %vm402, %v2196, 0
  %v2248 = vsel %vm402, %v2197, 0
  %v2251 = vsel %vm402, %v2198, 0
  %v2254 = vsel %vm402, %v2199, 0
  %v2257 = vsel %vm402, %v2200, 0
  %v2260 = vsel %vm402, %v2201, 0
  %v2263 = vsel %vm402, %v2202, 0
  %v2266 = vsel %vm402, %v2203, 0
  %v2269 = vsel %vm402, %v2204, 0
  %v2272 = vsel %vm402, %v2205, 0
  %v2275 = vsel %vm402, %v2206, 0
  %v2278 = vsel %vm402, %v2207, 0
  %v2281 = vsel %vm402, %v2208, 0
  %v2284 = vsel %vm402, %v2209, 0
  %v2287 = vsel %vm402, %v2210, 0
  %v2290 = vsel %vm402, %v2211, 0
  %v2293 = vsel %vm402, %v2212, 0
  %v2296 = vsel %vm402, %v2213, 0
  %v2299 = vsel %vm402, %v2214, 0
  %v2302 = vsel %vm402, %v2215, 0
  %v2305 = vsel %vm402, %v2216, 0
  %v2308 = vsel %vm402, %v2217, 0
  %v2311 = vsel %vm402, %v2218, 0
  %v2314 = vsel %vm402, %v2219, 0
  %v2317 = vsel %vm402, %v2220, 0
  %v2320 = vsel %vm402, %v2221, 0
  %v2323 = vsel %vm402, %v2222, 0
  %v2326 = vsel %vm402, %v2223, 0
  %v2329 = vsel %vm402, %v2224, 0
  %v2332 = vsel %vm402, %v2225, 0
  %v2335 = vsel %vm402, %v2226, 0
  %2337 = vmatpush.bf16.msra.mxu0 0
  %2338 = vmatpush.bf16.msra.mxu0 0
  %2339 = vmatpush.bf16.msra.mxu0 0
  %2340 = vmatpush.bf16.msra.mxu0 0
  %2341 = vmatpush.bf16.msra.mxu0 0
  %2342 = vmatpush.bf16.msra.mxu0 0
  %2343 = vmatpush.bf16.msra.mxu0 0
  %2344 = vmatpush.bf16.msra.mxu0 %v2242
  %2345 = vmatmul.bf16.gmra.mxu0 %v2236
  %v2346 = vpop.f32.mrf.mxu0
  %v2347 = vadd.f32 0.0, %v2346
  %v2348 = vpop.f32.mrf.mxu0
  %v2349 = vadd.f32 0.0, %v2348
  %2350 = vmatmul.bf16.gmra.mxu0 %v2239
  %v2351 = vpop.f32.mrf.mxu0
  %v2352 = vadd.f32 0.0, %v2351
  %v2353 = vpop.f32.mrf.mxu0
  %2354 = vdwg.mxu0
  %2355 = vmatpush.bf16.msra.mxu0 0
  %2356 = vmatpush.bf16.msra.mxu0 0
  %2357 = vmatpush.bf16.msra.mxu0 0
  %2358 = vmatpush.bf16.msra.mxu0 0
  %2359 = vmatpush.bf16.msra.mxu0 0
  %2360 = vmatpush.bf16.msra.mxu0 0
  %2361 = vmatpush.bf16.msra.mxu0 0
  %2362 = vmatpush.bf16.msra.mxu0 %v2245
  %2363 = vmatmul.bf16.gmra.mxu0 %v2236
  %v2364 = vpop.f32.mrf.mxu0
  %v2365 = vadd.f32 0.0, %v2364
  %v2366 = vpop.f32.mrf.mxu0
  %v2367 = vadd.f32 0.0, %v2366
  %2368 = vmatmul.bf16.gmra.mxu0 %v2239
  %v2369 = vpop.f32.mrf.mxu0
  %v2370 = vadd.f32 0.0, %v2369
  %v2371 = vpop.f32.mrf.mxu0
  %2372 = vdwg.mxu0
  %2373 = vmatpush.bf16.msra.mxu0 0
  %2374 = vmatpush.bf16.msra.mxu0 0
  %2375 = vmatpush.bf16.msra.mxu0 0
  %2376 = vmatpush.bf16.msra.mxu0 0
  %2377 = vmatpush.bf16.msra.mxu0 0
  %2378 = vmatpush.bf16.msra.mxu0 0
  %2379 = vmatpush.bf16.msra.mxu0 0
  %2380 = vmatpush.bf16.msra.mxu0 %v2248
  %2381 = vmatmul.bf16.gmra.mxu0 %v2236
  %v2382 = vpop.f32.mrf.mxu0
  %v2383 = vadd.f32 0.0, %v2382
  %v2384 = vpop.f32.mrf.mxu0
  %v2385 = vadd.f32 0.0, %v2384
  %2386 = vmatmul.bf16.gmra.mxu0 %v2239
  %v2387 = vpop.f32.mrf.mxu0
  %v2388 = vadd.f32 0.0, %v2387
  %v2389 = vpop.f32.mrf.mxu0
  %2390 = vdwg.mxu0
  %2391 = vmatpush.bf16.msra.mxu0 0
  %2392 = vmatpush.bf16.msra.mxu0 0
  %2393 = vmatpush.bf16.msra.mxu0 0
  %2394 = vmatpush.bf16.msra.mxu0 0
  %2395 = vmatpush.bf16.msra.mxu0 0
  %2396 = vmatpush.bf16.msra.mxu0 0
  %2397 = vmatpush.bf16.msra.mxu0 0
  %2398 = vmatpush.bf16.msra.mxu0 %v2251
  %2399 = vmatmul.bf16.gmra.mxu0 %v2236
  %v2400 = vpop.f32.mrf.mxu0
  %v2401 = vadd.f32 0.0, %v2400
  %v2402 = vpop.f32.mrf.mxu0
  %v2403 = vadd.f32 0.0, %v2402
  %2404 = vmatmul.bf16.gmra.mxu0 %v2239
  %v2405 = vpop.f32.mrf.mxu0
  %v2406 = vadd.f32 0.0, %v2405
  %v2407 = vpop.f32.mrf.mxu0
  %2408 = vdwg.mxu0
  %2409 = vmatpush.bf16.msra.mxu0 0
  %2410 = vmatpush.bf16.msra.mxu0 0
  %2411 = vmatpush.bf16.msra.mxu0 0
  %2412 = vmatpush.bf16.msra.mxu0 0
  %2413 = vmatpush.bf16.msra.mxu0 0
  %2414 = vmatpush.bf16.msra.mxu0 0
  %2415 = vmatpush.bf16.msra.mxu0 0
  %2416 = vmatpush.bf16.msra.mxu0 %v2254
  %2417 = vmatmul.bf16.gmra.mxu0 %v2236
  %v2418 = vpop.f32.mrf.mxu0
  %v2419 = vadd.f32 0.0, %v2418
  %v2420 = vpop.f32.mrf.mxu0
  %v2421 = vadd.f32 0.0, %v2420
  %2422 = vmatmul.bf16.gmra.mxu0 %v2239
  %v2423 = vpop.f32.mrf.mxu0
  %v2424 = vadd.f32 0.0, %v2423
  %v2425 = vpop.f32.mrf.mxu0
  %2426 = vdwg.mxu0
  %2427 = vmatpush.bf16.msra.mxu0 0
  %2428 = vmatpush.bf16.msra.mxu0 0
  %2429 = vmatpush.bf16.msra.mxu0 0
  %2430 = vmatpush.bf16.msra.mxu0 0
  %2431 = vmatpush.bf16.msra.mxu0 0
  %2432 = vmatpush.bf16.msra.mxu0 0
  %2433 = vmatpush.bf16.msra.mxu0 0
  %2434 = vmatpush.bf16.msra.mxu0 %v2257
  %2435 = vmatmul.bf16.gmra.mxu0 %v2236
  %v2436 = vpop.f32.mrf.mxu0
  %v2437 = vadd.f32 0.0, %v2436
  %v2438 = vpop.f32.mrf.mxu0
  %v2439 = vadd.f32 0.0, %v2438
  %2440 = vmatmul.bf16.gmra.mxu0 %v2239
  %v2441 = vpop.f32.mrf.mxu0
  %v2442 = vadd.f32 0.0, %v2441
  %v2443 = vpop.f32.mrf.mxu0
  %2444 = vdwg.mxu0
  %2445 = vmatpush.bf16.msra.mxu0 0
  %2446 = vmatpush.bf16.msra.mxu0 0
  %2447 = vmatpush.bf16.msra.mxu0 0
  %2448 = vmatpush.bf16.msra.mxu0 0
  %2449 = vmatpush.bf16.msra.mxu0 0
  %2450 = vmatpush.bf16.msra.mxu0 0
  %2451 = vmatpush.bf16.msra.mxu0 0
  %2452 = vmatpush.bf16.msra.mxu0 %v2260
  %2453 = vmatmul.bf16.gmra.mxu0 %v2236
  %v2454 = vpop.f32.mrf.mxu0
  %v2455 = vadd.f32 0.0, %v2454
  %v2456 = vpop.f32.mrf.mxu0
  %v2457 = vadd.f32 0.0, %v2456
  %2458 = vmatmul.bf16.gmra.mxu0 %v2239
  %v2459 = vpop.f32.mrf.mxu0
  %v2460 = vadd.f32 0.0, %v2459
  %v2461 = vpop.f32.mrf.mxu0
  %2462 = vdwg.mxu0
  %2463 = vmatpush.bf16.msra.mxu0 0
  %2464 = vmatpush.bf16.msra.mxu0 0
  %2465 = vmatpush.bf16.msra.mxu0 0
  %2466 = vmatpush.bf16.msra.mxu0 0
  %2467 = vmatpush.bf16.msra.mxu0 0
  %2468 = vmatpush.bf16.msra.mxu0 0
  %2469 = vmatpush.bf16.msra.mxu0 0
  %2470 = vmatpush.bf16.msra.mxu0 %v2263
  %2471 = vmatmul.bf16.gmra.mxu0 %v2236
  %v2472 = vpop.f32.mrf.mxu0
  %v2473 = vadd.f32 0.0, %v2472
  %v2474 = vpop.f32.mrf.mxu0
  %v2475 = vadd.f32 0.0, %v2474
  %2476 = vmatmul.bf16.gmra.mxu0 %v2239
  %v2477 = vpop.f32.mrf.mxu0
  %v2478 = vadd.f32 0.0, %v2477
  %v2479 = vpop.f32.mrf.mxu0
  %2480 = vdwg.mxu0
  %2481 = vmatpush.bf16.msra.mxu0 0
  %2482 = vmatpush.bf16.msra.mxu0 0
  %2483 = vmatpush.bf16.msra.mxu0 0
  %2484 = vmatpush.bf16.msra.mxu0 0
  %2485 = vmatpush.bf16.msra.mxu0 0
  %2486 = vmatpush.bf16.msra.mxu0 0
  %2487 = vmatpush.bf16.msra.mxu0 0
  %2488 = vmatpush.bf16.msra.mxu0 %v2266
  %2489 = vmatmul.bf16.gmra.mxu0 %v2236
  %v2490 = vpop.f32.mrf.mxu0
  %v2491 = vadd.f32 0.0, %v2490
  %v2492 = vpop.f32.mrf.mxu0
  %v2493 = vadd.f32 0.0, %v2492
  %2494 = vmatmul.bf16.gmra.mxu0 %v2239
  %v2495 = vpop.f32.mrf.mxu0
  %v2496 = vadd.f32 0.0, %v2495
  %v2497 = vpop.f32.mrf.mxu0
  %2498 = vdwg.mxu0
  %2499 = vmatpush.bf16.msra.mxu0 0
  %2500 = vmatpush.bf16.msra.mxu0 0
  %2501 = vmatpush.bf16.msra.mxu0 0
  %2502 = vmatpush.bf16.msra.mxu0 0
  %2503 = vmatpush.bf16.msra.mxu0 0
  %2504 = vmatpush.bf16.msra.mxu0 0
  %2505 = vmatpush.bf16.msra.mxu0 0
  %2506 = vmatpush.bf16.msra.mxu0 %v2269
  %2507 = vmatmul.bf16.gmra.mxu0 %v2236
  %v2508 = vpop.f32.mrf.mxu0
  %v2509 = vadd.f32 0.0, %v2508
  %v2510 = vpop.f32.mrf.mxu0
  %v2511 = vadd.f32 0.0, %v2510
  %2512 = vmatmul.bf16.gmra.mxu0 %v2239
  %v2513 = vpop.f32.mrf.mxu0
  %v2514 = vadd.f32 0.0, %v2513
  %v2515 = vpop.f32.mrf.mxu0
  %2516 = vdwg.mxu0
  %2517 = vmatpush.bf16.msra.mxu0 0
  %2518 = vmatpush.bf16.msra.mxu0 0
  %2519 = vmatpush.bf16.msra.mxu0 0
  %2520 = vmatpush.bf16.msra.mxu0 0
  %2521 = vmatpush.bf16.msra.mxu0 0
  %2522 = vmatpush.bf16.msra.mxu0 0
  %2523 = vmatpush.bf16.msra.mxu0 0
  %2524 = vmatpush.bf16.msra.mxu0 %v2272
  %2525 = vmatmul.bf16.gmra.mxu0 %v2236
  %v2526 = vpop.f32.mrf.mxu0
  %v2527 = vadd.f32 0.0, %v2526
  %v2528 = vpop.f32.mrf.mxu0
  %v2529 = vadd.f32 0.0, %v2528
  %2530 = vmatmul.bf16.gmra.mxu0 %v2239
  %v2531 = vpop.f32.mrf.mxu0
  %v2532 = vadd.f32 0.0, %v2531
  %v2533 = vpop.f32.mrf.mxu0
  %2534 = vdwg.mxu0
  %2535 = vmatpush.bf16.msra.mxu0 0
  %2536 = vmatpush.bf16.msra.mxu0 0
  %2537 = vmatpush.bf16.msra.mxu0 0
  %2538 = vmatpush.bf16.msra.mxu0 0
  %2539 = vmatpush.bf16.msra.mxu0 0
  %2540 = vmatpush.bf16.msra.mxu0 0
  %2541 = vmatpush.bf16.msra.mxu0 0
  %2542 = vmatpush.bf16.msra.mxu0 %v2275
  %2543 = vmatmul.bf16.gmra.mxu0 %v2236
  %v2544 = vpop.f32.mrf.mxu0
  %v2545 = vadd.f32 0.0, %v2544
  %v2546 = vpop.f32.mrf.mxu0
  %v2547 = vadd.f32 0.0, %v2546
  %2548 = vmatmul.bf16.gmra.mxu0 %v2239
  %v2549 = vpop.f32.mrf.mxu0
  %v2550 = vadd.f32 0.0, %v2549
  %v2551 = vpop.f32.mrf.mxu0
  %2552 = vdwg.mxu0
  %2553 = vmatpush.bf16.msra.mxu0 0
  %2554 = vmatpush.bf16.msra.mxu0 0
  %2555 = vmatpush.bf16.msra.mxu0 0
  %2556 = vmatpush.bf16.msra.mxu0 0
  %2557 = vmatpush.bf16.msra.mxu0 0
  %2558 = vmatpush.bf16.msra.mxu0 0
  %2559 = vmatpush.bf16.msra.mxu0 0
  %2560 = vmatpush.bf16.msra.mxu0 %v2278
  %2561 = vmatmul.bf16.gmra.mxu0 %v2236
  %v2562 = vpop.f32.mrf.mxu0
  %v2563 = vadd.f32 0.0, %v2562
  %v2564 = vpop.f32.mrf.mxu0
  %v2565 = vadd.f32 0.0, %v2564
  %2566 = vmatmul.bf16.gmra.mxu0 %v2239
  %v2567 = vpop.f32.mrf.mxu0
  %v2568 = vadd.f32 0.0, %v2567
  %v2569 = vpop.f32.mrf.mxu0
  %2570 = vdwg.mxu0
  %2571 = vmatpush.bf16.msra.mxu0 0
  %2572 = vmatpush.bf16.msra.mxu0 0
  %2573 = vmatpush.bf16.msra.mxu0 0
  %2574 = vmatpush.bf16.msra.mxu0 0
  %2575 = vmatpush.bf16.msra.mxu0 0
  %2576 = vmatpush.bf16.msra.mxu0 0
  %2577 = vmatpush.bf16.msra.mxu0 0
  %2578 = vmatpush.bf16.msra.mxu0 %v2281
  %2579 = vmatmul.bf16.gmra.mxu0 %v2236
  %v2580 = vpop.f32.mrf.mxu0
  %v2581 = vadd.f32 0.0, %v2580
  %v2582 = vpop.f32.mrf.mxu0
  %v2583 = vadd.f32 0.0, %v2582
  %2584 = vmatmul.bf16.gmra.mxu0 %v2239
  %v2585 = vpop.f32.mrf.mxu0
  %v2586 = vadd.f32 0.0, %v2585
  %v2587 = vpop.f32.mrf.mxu0
  %2588 = vdwg.mxu0
  %2589 = vmatpush.bf16.msra.mxu0 0
  %2590 = vmatpush.bf16.msra.mxu0 0
  %2591 = vmatpush.bf16.msra.mxu0 0
  %2592 = vmatpush.bf16.msra.mxu0 0
  %2593 = vmatpush.bf16.msra.mxu0 0
  %2594 = vmatpush.bf16.msra.mxu0 0
  %2595 = vmatpush.bf16.msra.mxu0 0
  %2596 = vmatpush.bf16.msra.mxu0 %v2284
  %2597 = vmatmul.bf16.gmra.mxu0 %v2236
  %v2598 = vpop.f32.mrf.mxu0
  %v2599 = vadd.f32 0.0, %v2598
  %v2600 = vpop.f32.mrf.mxu0
  %v2601 = vadd.f32 0.0, %v2600
  %2602 = vmatmul.bf16.gmra.mxu0 %v2239
  %v2603 = vpop.f32.mrf.mxu0
  %v2604 = vadd.f32 0.0, %v2603
  %v2605 = vpop.f32.mrf.mxu0
  %2606 = vdwg.mxu0
  %2607 = vmatpush.bf16.msra.mxu0 0
  %2608 = vmatpush.bf16.msra.mxu0 0
  %2609 = vmatpush.bf16.msra.mxu0 0
  %2610 = vmatpush.bf16.msra.mxu0 0
  %2611 = vmatpush.bf16.msra.mxu0 0
  %2612 = vmatpush.bf16.msra.mxu0 0
  %2613 = vmatpush.bf16.msra.mxu0 0
  %2614 = vmatpush.bf16.msra.mxu0 %v2287
  %2615 = vmatmul.bf16.gmra.mxu0 %v2236
  %v2616 = vpop.f32.mrf.mxu0
  %v2617 = vadd.f32 0.0, %v2616
  %v2618 = vpop.f32.mrf.mxu0
  %v2619 = vadd.f32 0.0, %v2618
  %2620 = vmatmul.bf16.gmra.mxu0 %v2239
  %v2621 = vpop.f32.mrf.mxu0
  %v2622 = vadd.f32 0.0, %v2621
  %v2623 = vpop.f32.mrf.mxu0
  %2624 = vdwg.mxu0
  %2625 = vmatpush.bf16.msra.mxu0 0
  %2626 = vmatpush.bf16.msra.mxu0 0
  %2627 = vmatpush.bf16.msra.mxu0 0
  %2628 = vmatpush.bf16.msra.mxu0 0
  %2629 = vmatpush.bf16.msra.mxu0 0
  %2630 = vmatpush.bf16.msra.mxu0 0
  %2631 = vmatpush.bf16.msra.mxu0 0
  %2632 = vmatpush.bf16.msra.mxu0 %v2290
  %2633 = vmatmul.bf16.gmra.mxu0 %v2236
  %v2634 = vpop.f32.mrf.mxu0
  %v2635 = vadd.f32 0.0, %v2634
  %v2636 = vpop.f32.mrf.mxu0
  %v2637 = vadd.f32 0.0, %v2636
  %2638 = vmatmul.bf16.gmra.mxu0 %v2239
  %v2639 = vpop.f32.mrf.mxu0
  %v2640 = vadd.f32 0.0, %v2639
  %v2641 = vpop.f32.mrf.mxu0
  %2642 = vdwg.mxu0
  %2643 = vmatpush.bf16.msra.mxu0 0
  %2644 = vmatpush.bf16.msra.mxu0 0
  %2645 = vmatpush.bf16.msra.mxu0 0
  %2646 = vmatpush.bf16.msra.mxu0 0
  %2647 = vmatpush.bf16.msra.mxu0 0
  %2648 = vmatpush.bf16.msra.mxu0 0
  %2649 = vmatpush.bf16.msra.mxu0 0
  %2650 = vmatpush.bf16.msra.mxu0 %v2293
  %2651 = vmatmul.bf16.gmra.mxu0 %v2236
  %v2652 = vpop.f32.mrf.mxu0
  %v2653 = vadd.f32 0.0, %v2652
  %v2654 = vpop.f32.mrf.mxu0
  %v2655 = vadd.f32 0.0, %v2654
  %2656 = vmatmul.bf16.gmra.mxu0 %v2239
  %v2657 = vpop.f32.mrf.mxu0
  %v2658 = vadd.f32 0.0, %v2657
  %v2659 = vpop.f32.mrf.mxu0
  %2660 = vdwg.mxu0
  %2661 = vmatpush.bf16.msra.mxu0 0
  %2662 = vmatpush.bf16.msra.mxu0 0
  %2663 = vmatpush.bf16.msra.mxu0 0
  %2664 = vmatpush.bf16.msra.mxu0 0
  %2665 = vmatpush.bf16.msra.mxu0 0
  %2666 = vmatpush.bf16.msra.mxu0 0
  %2667 = vmatpush.bf16.msra.mxu0 0
  %2668 = vmatpush.bf16.msra.mxu0 %v2296
  %2669 = vmatmul.bf16.gmra.mxu0 %v2236
  %v2670 = vpop.f32.mrf.mxu0
  %v2671 = vadd.f32 0.0, %v2670
  %v2672 = vpop.f32.mrf.mxu0
  %v2673 = vadd.f32 0.0, %v2672
  %2674 = vmatmul.bf16.gmra.mxu0 %v2239
  %v2675 = vpop.f32.mrf.mxu0
  %v2676 = vadd.f32 0.0, %v2675
  %v2677 = vpop.f32.mrf.mxu0
  %2678 = vdwg.mxu0
  %2679 = vmatpush.bf16.msra.mxu0 0
  %2680 = vmatpush.bf16.msra.mxu0 0
  %2681 = vmatpush.bf16.msra.mxu0 0
  %2682 = vmatpush.bf16.msra.mxu0 0
  %2683 = vmatpush.bf16.msra.mxu0 0
  %2684 = vmatpush.bf16.msra.mxu0 0
  %2685 = vmatpush.bf16.msra.mxu0 0
  %2686 = vmatpush.bf16.msra.mxu0 %v2299
  %2687 = vmatmul.bf16.gmra.mxu0 %v2236
  %v2688 = vpop.f32.mrf.mxu0
  %v2689 = vadd.f32 0.0, %v2688
  %v2690 = vpop.f32.mrf.mxu0
  %v2691 = vadd.f32 0.0, %v2690
  %2692 = vmatmul.bf16.gmra.mxu0 %v2239
  %v2693 = vpop.f32.mrf.mxu0
  %v2694 = vadd.f32 0.0, %v2693
  %v2695 = vpop.f32.mrf.mxu0
  %2696 = vdwg.mxu0
  %2697 = vmatpush.bf16.msra.mxu0 0
  %2698 = vmatpush.bf16.msra.mxu0 0
  %2699 = vmatpush.bf16.msra.mxu0 0
  %2700 = vmatpush.bf16.msra.mxu0 0
  %2701 = vmatpush.bf16.msra.mxu0 0
  %2702 = vmatpush.bf16.msra.mxu0 0
  %2703 = vmatpush.bf16.msra.mxu0 0
  %2704 = vmatpush.bf16.msra.mxu0 %v2302
  %2705 = vmatmul.bf16.gmra.mxu0 %v2236
  %v2706 = vpop.f32.mrf.mxu0
  %v2707 = vadd.f32 0.0, %v2706
  %v2708 = vpop.f32.mrf.mxu0
  %v2709 = vadd.f32 0.0, %v2708
  %2710 = vmatmul.bf16.gmra.mxu0 %v2239
  %v2711 = vpop.f32.mrf.mxu0
  %v2712 = vadd.f32 0.0, %v2711
  %v2713 = vpop.f32.mrf.mxu0
  %2714 = vdwg.mxu0
  %2715 = vmatpush.bf16.msra.mxu0 0
  %2716 = vmatpush.bf16.msra.mxu0 0
  %2717 = vmatpush.bf16.msra.mxu0 0
  %2718 = vmatpush.bf16.msra.mxu0 0
  %2719 = vmatpush.bf16.msra.mxu0 0
  %2720 = vmatpush.bf16.msra.mxu0 0
  %2721 = vmatpush.bf16.msra.mxu0 0
  %2722 = vmatpush.bf16.msra.mxu0 %v2305
  %2723 = vmatmul.bf16.gmra.mxu0 %v2236
  %v2724 = vpop.f32.mrf.mxu0
  %v2725 = vadd.f32 0.0, %v2724
  %v2726 = vpop.f32.mrf.mxu0
  %v2727 = vadd.f32 0.0, %v2726
  %2728 = vmatmul.bf16.gmra.mxu0 %v2239
  %v2729 = vpop.f32.mrf.mxu0
  %v2730 = vadd.f32 0.0, %v2729
  %v2731 = vpop.f32.mrf.mxu0
  %2732 = vdwg.mxu0
  %2733 = vmatpush.bf16.msra.mxu0 0
  %2734 = vmatpush.bf16.msra.mxu0 0
  %2735 = vmatpush.bf16.msra.mxu0 0
  %2736 = vmatpush.bf16.msra.mxu0 0
  %2737 = vmatpush.bf16.msra.mxu0 0
  %2738 = vmatpush.bf16.msra.mxu0 0
  %2739 = vmatpush.bf16.msra.mxu0 0
  %2740 = vmatpush.bf16.msra.mxu0 %v2308
  %2741 = vmatmul.bf16.gmra.mxu0 %v2236
  %v2742 = vpop.f32.mrf.mxu0
  %v2743 = vadd.f32 0.0, %v2742
  %v2744 = vpop.f32.mrf.mxu0
  %v2745 = vadd.f32 0.0, %v2744
  %2746 = vmatmul.bf16.gmra.mxu0 %v2239
  %v2747 = vpop.f32.mrf.mxu0
  %v2748 = vadd.f32 0.0, %v2747
  %v2749 = vpop.f32.mrf.mxu0
  %2750 = vdwg.mxu0
  %2751 = vmatpush.bf16.msra.mxu0 0
  %2752 = vmatpush.bf16.msra.mxu0 0
  %2753 = vmatpush.bf16.msra.mxu0 0
  %2754 = vmatpush.bf16.msra.mxu0 0
  %2755 = vmatpush.bf16.msra.mxu0 0
  %2756 = vmatpush.bf16.msra.mxu0 0
  %2757 = vmatpush.bf16.msra.mxu0 0
  %2758 = vmatpush.bf16.msra.mxu0 %v2311
  %2759 = vmatmul.bf16.gmra.mxu0 %v2236
  %v2760 = vpop.f32.mrf.mxu0
  %v2761 = vadd.f32 0.0, %v2760
  %v2762 = vpop.f32.mrf.mxu0
  %v2763 = vadd.f32 0.0, %v2762
  %2764 = vmatmul.bf16.gmra.mxu0 %v2239
  %v2765 = vpop.f32.mrf.mxu0
  %v2766 = vadd.f32 0.0, %v2765
  %v2767 = vpop.f32.mrf.mxu0
  %2768 = vdwg.mxu0
  %2769 = vmatpush.bf16.msra.mxu0 0
  %2770 = vmatpush.bf16.msra.mxu0 0
  %2771 = vmatpush.bf16.msra.mxu0 0
  %2772 = vmatpush.bf16.msra.mxu0 0
  %2773 = vmatpush.bf16.msra.mxu0 0
  %2774 = vmatpush.bf16.msra.mxu0 0
  %2775 = vmatpush.bf16.msra.mxu0 0
  %2776 = vmatpush.bf16.msra.mxu0 %v2314
  %2777 = vmatmul.bf16.gmra.mxu0 %v2236
  %v2778 = vpop.f32.mrf.mxu0
  %v2779 = vadd.f32 0.0, %v2778
  %v2780 = vpop.f32.mrf.mxu0
  %v2781 = vadd.f32 0.0, %v2780
  %2782 = vmatmul.bf16.gmra.mxu0 %v2239
  %v2783 = vpop.f32.mrf.mxu0
  %v2784 = vadd.f32 0.0, %v2783
  %v2785 = vpop.f32.mrf.mxu0
  %2786 = vdwg.mxu0
  %2787 = vmatpush.bf16.msra.mxu0 0
  %2788 = vmatpush.bf16.msra.mxu0 0
  %2789 = vmatpush.bf16.msra.mxu0 0
  %2790 = vmatpush.bf16.msra.mxu0 0
  %2791 = vmatpush.bf16.msra.mxu0 0
  %2792 = vmatpush.bf16.msra.mxu0 0
  %2793 = vmatpush.bf16.msra.mxu0 0
  %2794 = vmatpush.bf16.msra.mxu0 %v2317
  %2795 = vmatmul.bf16.gmra.mxu0 %v2236
  %v2796 = vpop.f32.mrf.mxu0
  %v2797 = vadd.f32 0.0, %v2796
  %v2798 = vpop.f32.mrf.mxu0
  %v2799 = vadd.f32 0.0, %v2798
  %2800 = vmatmul.bf16.gmra.mxu0 %v2239
  %v2801 = vpop.f32.mrf.mxu0
  %v2802 = vadd.f32 0.0, %v2801
  %v2803 = vpop.f32.mrf.mxu0
  %2804 = vdwg.mxu0
  %2805 = vmatpush.bf16.msra.mxu0 0
  %2806 = vmatpush.bf16.msra.mxu0 0
  %2807 = vmatpush.bf16.msra.mxu0 0
  %2808 = vmatpush.bf16.msra.mxu0 0
  %2809 = vmatpush.bf16.msra.mxu0 0
  %2810 = vmatpush.bf16.msra.mxu0 0
  %2811 = vmatpush.bf16.msra.mxu0 0
  %2812 = vmatpush.bf16.msra.mxu0 %v2320
  %2813 = vmatmul.bf16.gmra.mxu0 %v2236
  %v2814 = vpop.f32.mrf.mxu0
  %v2815 = vadd.f32 0.0, %v2814
  %v2816 = vpop.f32.mrf.mxu0
  %v2817 = vadd.f32 0.0, %v2816
  %2818 = vmatmul.bf16.gmra.mxu0 %v2239
  %v2819 = vpop.f32.mrf.mxu0
  %v2820 = vadd.f32 0.0, %v2819
  %v2821 = vpop.f32.mrf.mxu0
  %2822 = vdwg.mxu0
  %2823 = vmatpush.bf16.msra.mxu0 0
  %2824 = vmatpush.bf16.msra.mxu0 0
  %2825 = vmatpush.bf16.msra.mxu0 0
  %2826 = vmatpush.bf16.msra.mxu0 0
  %2827 = vmatpush.bf16.msra.mxu0 0
  %2828 = vmatpush.bf16.msra.mxu0 0
  %2829 = vmatpush.bf16.msra.mxu0 0
  %2830 = vmatpush.bf16.msra.mxu0 %v2323
  %2831 = vmatmul.bf16.gmra.mxu0 %v2236
  %v2832 = vpop.f32.mrf.mxu0
  %v2833 = vadd.f32 0.0, %v2832
  %v2834 = vpop.f32.mrf.mxu0
  %v2835 = vadd.f32 0.0, %v2834
  %2836 = vmatmul.bf16.gmra.mxu0 %v2239
  %v2837 = vpop.f32.mrf.mxu0
  %v2838 = vadd.f32 0.0, %v2837
  %v2839 = vpop.f32.mrf.mxu0
  %2840 = vdwg.mxu0
  %2841 = vmatpush.bf16.msra.mxu0 0
  %2842 = vmatpush.bf16.msra.mxu0 0
  %2843 = vmatpush.bf16.msra.mxu0 0
  %2844 = vmatpush.bf16.msra.mxu0 0
  %2845 = vmatpush.bf16.msra.mxu0 0
  %2846 = vmatpush.bf16.msra.mxu0 0
  %2847 = vmatpush.bf16.msra.mxu0 0
  %2848 = vmatpush.bf16.msra.mxu0 %v2326
  %2849 = vmatmul.bf16.gmra.mxu0 %v2236
  %v2850 = vpop.f32.mrf.mxu0
  %v2851 = vadd.f32 0.0, %v2850
  %v2852 = vpop.f32.mrf.mxu0
  %v2853 = vadd.f32 0.0, %v2852
  %2854 = vmatmul.bf16.gmra.mxu0 %v2239
  %v2855 = vpop.f32.mrf.mxu0
  %v2856 = vadd.f32 0.0, %v2855
  %v2857 = vpop.f32.mrf.mxu0
  %2858 = vdwg.mxu0
  %2859 = vmatpush.bf16.msra.mxu0 0
  %2860 = vmatpush.bf16.msra.mxu0 0
  %2861 = vmatpush.bf16.msra.mxu0 0
  %2862 = vmatpush.bf16.msra.mxu0 0
  %2863 = vmatpush.bf16.msra.mxu0 0
  %2864 = vmatpush.bf16.msra.mxu0 0
  %2865 = vmatpush.bf16.msra.mxu0 0
  %2866 = vmatpush.bf16.msra.mxu0 %v2329
  %2867 = vmatmul.bf16.gmra.mxu0 %v2236
  %v2868 = vpop.f32.mrf.mxu0
  %v2869 = vadd.f32 0.0, %v2868
  %v2870 = vpop.f32.mrf.mxu0
  %v2871 = vadd.f32 0.0, %v2870
  %2872 = vmatmul.bf16.gmra.mxu0 %v2239
  %v2873 = vpop.f32.mrf.mxu0
  %v2874 = vadd.f32 0.0, %v2873
  %v2875 = vpop.f32.mrf.mxu0
  %2876 = vdwg.mxu0
  %2877 = vmatpush.bf16.msra.mxu0 0
  %2878 = vmatpush.bf16.msra.mxu0 0
  %2879 = vmatpush.bf16.msra.mxu0 0
  %2880 = vmatpush.bf16.msra.mxu0 0
  %2881 = vmatpush.bf16.msra.mxu0 0
  %2882 = vmatpush.bf16.msra.mxu0 0
  %2883 = vmatpush.bf16.msra.mxu0 0
  %2884 = vmatpush.bf16.msra.mxu0 %v2332
  %2885 = vmatmul.bf16.gmra.mxu0 %v2236
  %v2886 = vpop.f32.mrf.mxu0
  %v2887 = vadd.f32 0.0, %v2886
  %v2888 = vpop.f32.mrf.mxu0
  %v2889 = vadd.f32 0.0, %v2888
  %2890 = vmatmul.bf16.gmra.mxu0 %v2239
  %v2891 = vpop.f32.mrf.mxu0
  %v2892 = vadd.f32 0.0, %v2891
  %v2893 = vpop.f32.mrf.mxu0
  %2894 = vdwg.mxu0
  %2895 = vmatpush.bf16.msra.mxu0 0
  %2896 = vmatpush.bf16.msra.mxu0 0
  %2897 = vmatpush.bf16.msra.mxu0 0
  %2898 = vmatpush.bf16.msra.mxu0 0
  %2899 = vmatpush.bf16.msra.mxu0 0
  %2900 = vmatpush.bf16.msra.mxu0 0
  %2901 = vmatpush.bf16.msra.mxu0 0
  %2902 = vmatpush.bf16.msra.mxu0 %v2335
  %2903 = vmatmul.bf16.gmra.mxu0 %v2236
  %v2904 = vpop.f32.mrf.mxu0
  %v2905 = vadd.f32 0.0, %v2904
  %v2906 = vpop.f32.mrf.mxu0
  %v2907 = vadd.f32 0.0, %v2906
  %2908 = vmatmul.bf16.gmra.mxu0 %v2239
  %v2909 = vpop.f32.mrf.mxu0
  %v2910 = vadd.f32 0.0, %v2909
  %v2911 = vpop.f32.mrf.mxu0
  %2912 = vdwg.mxu0
  %v2913 = vadd.f32 %v1893, %v2347
  %v2914 = vadd.f32 %v1894, %v2365
  %v2915 = vadd.f32 %v1895, %v2383
  %v2916 = vadd.f32 %v1896, %v2401
  %v2917 = vadd.f32 %v1897, %v2419
  %v2918 = vadd.f32 %v1898, %v2437
  %v2919 = vadd.f32 %v1899, %v2455
  %v2920 = vadd.f32 %v1900, %v2473
  %v2921 = vadd.f32 %v1901, %v2491
  %v2922 = vadd.f32 %v1902, %v2509
  %v2923 = vadd.f32 %v1903, %v2527
  %v2924 = vadd.f32 %v1904, %v2545
  %v2925 = vadd.f32 %v1905, %v2563
  %v2926 = vadd.f32 %v1906, %v2581
  %v2927 = vadd.f32 %v1907, %v2599
  %v2928 = vadd.f32 %v1908, %v2617
  %v2929 = vadd.f32 %v1909, %v2635
  %v2930 = vadd.f32 %v1910, %v2653
  %v2931 = vadd.f32 %v1911, %v2671
  %v2932 = vadd.f32 %v1912, %v2689
  %v2933 = vadd.f32 %v1913, %v2707
  %v2934 = vadd.f32 %v1914, %v2725
  %v2935 = vadd.f32 %v1915, %v2743
  %v2936 = vadd.f32 %v1916, %v2761
  %v2937 = vadd.f32 %v1917, %v2779
  %v2938 = vadd.f32 %v1918, %v2797
  %v2939 = vadd.f32 %v1919, %v2815
  %v2940 = vadd.f32 %v1920, %v2833
  %v2941 = vadd.f32 %v1921, %v2851
  %v2942 = vadd.f32 %v1922, %v2869
  %v2943 = vadd.f32 %v1923, %v2887
  %v2944 = vadd.f32 %v1924, %v2905
  %v2945 = vadd.f32 %v1925, %v2349
  %v2946 = vadd.f32 %v1926, %v2367
  %v2947 = vadd.f32 %v1927, %v2385
  %v2948 = vadd.f32 %v1928, %v2403
  %v2949 = vadd.f32 %v1929, %v2421
  %v2950 = vadd.f32 %v1930, %v2439
  %v2951 = vadd.f32 %v1931, %v2457
  %v2952 = vadd.f32 %v1932, %v2475
  %v2953 = vadd.f32 %v1933, %v2493
  %v2954 = vadd.f32 %v1934, %v2511
  %v2955 = vadd.f32 %v1935, %v2529
  %v2956 = vadd.f32 %v1936, %v2547
  %v2957 = vadd.f32 %v1937, %v2565
  %v2958 = vadd.f32 %v1938, %v2583
  %v2959 = vadd.f32 %v1939, %v2601
  %v2960 = vadd.f32 %v1940, %v2619
  %v2961 = vadd.f32 %v1941, %v2637
  %v2962 = vadd.f32 %v1942, %v2655
  %v2963 = vadd.f32 %v1943, %v2673
  %v2964 = vadd.f32 %v1944, %v2691
  %v2965 = vadd.f32 %v1945, %v2709
  %v2966 = vadd.f32 %v1946, %v2727
  %v2967 = vadd.f32 %v1947, %v2745
  %v2968 = vadd.f32 %v1948, %v2763
  %v2969 = vadd.f32 %v1949, %v2781
  %v2970 = vadd.f32 %v1950, %v2799
  %v2971 = vadd.f32 %v1951, %v2817
  %v2972 = vadd.f32 %v1952, %v2835
  %v2973 = vadd.f32 %v1953, %v2853
  %v2974 = vadd.f32 %v1954, %v2871
  %v2975 = vadd.f32 %v1955, %v2889
  %v2976 = vadd.f32 %v1956, %v2907
  %v2977 = vadd.f32 %v1957, %v2352
  %v2978 = vadd.f32 %v1958, %v2370
  %v2979 = vadd.f32 %v1959, %v2388
  %v2980 = vadd.f32 %v1960, %v2406
  %v2981 = vadd.f32 %v1961, %v2424
  %v2982 = vadd.f32 %v1962, %v2442
  %v2983 = vadd.f32 %v1963, %v2460
  %v2984 = vadd.f32 %v1964, %v2478
  %v2985 = vadd.f32 %v1965, %v2496
  %v2986 = vadd.f32 %v1966, %v2514
  %v2987 = vadd.f32 %v1967, %v2532
  %v2988 = vadd.f32 %v1968, %v2550
  %v2989 = vadd.f32 %v1969, %v2568
  %v2990 = vadd.f32 %v1970, %v2586
  %v2991 = vadd.f32 %v1971, %v2604
  %v2992 = vadd.f32 %v1972, %v2622
  %v2993 = vadd.f32 %v1973, %v2640
  %v2994 = vadd.f32 %v1974, %v2658
  %v2995 = vadd.f32 %v1975, %v2676
  %v2996 = vadd.f32 %v1976, %v2694
  %v2997 = vadd.f32 %v1977, %v2712
  %v2998 = vadd.f32 %v1978, %v2730
  %v2999 = vadd.f32 %v1979, %v2748
  %v3000 = vadd.f32 %v1980, %v2766
  %v3001 = vadd.f32 %v1981, %v2784
  %v3002 = vadd.f32 %v1982, %v2802
  %v3003 = vadd.f32 %v1983, %v2820
  %v3004 = vadd.f32 %v1984, %v2838
  %v3005 = vadd.f32 %v1985, %v2856
  %v3006 = vadd.f32 %v1986, %v2874
  %v3007 = vadd.f32 %v1987, %v2892
  %v3008 = vadd.f32 %v1988, %v2910
  %v3009 = vmul.f32 %v2913, %v2913
  %v3010 = vmul.f32 %v2914, %v2914
  %v3011 = vmul.f32 %v2915, %v2915
  %v3012 = vmul.f32 %v2916, %v2916
  %v3013 = vmul.f32 %v2917, %v2917
  %v3014 = vmul.f32 %v2918, %v2918
  %v3015 = vmul.f32 %v2919, %v2919
  %v3016 = vmul.f32 %v2920, %v2920
  %v3017 = vmul.f32 %v2921, %v2921
  %v3018 = vmul.f32 %v2922, %v2922
  %v3019 = vmul.f32 %v2923, %v2923
  %v3020 = vmul.f32 %v2924, %v2924
  %v3021 = vmul.f32 %v2925, %v2925
  %v3022 = vmul.f32 %v2926, %v2926
  %v3023 = vmul.f32 %v2927, %v2927
  %v3024 = vmul.f32 %v2928, %v2928
  %v3025 = vmul.f32 %v2929, %v2929
  %v3026 = vmul.f32 %v2930, %v2930
  %v3027 = vmul.f32 %v2931, %v2931
  %v3028 = vmul.f32 %v2932, %v2932
  %v3029 = vmul.f32 %v2933, %v2933
  %v3030 = vmul.f32 %v2934, %v2934
  %v3031 = vmul.f32 %v2935, %v2935
  %v3032 = vmul.f32 %v2936, %v2936
  %v3033 = vmul.f32 %v2937, %v2937
  %v3034 = vmul.f32 %v2938, %v2938
  %v3035 = vmul.f32 %v2939, %v2939
  %v3036 = vmul.f32 %v2940, %v2940
  %v3037 = vmul.f32 %v2941, %v2941
  %v3038 = vmul.f32 %v2942, %v2942
  %v3039 = vmul.f32 %v2943, %v2943
  %v3040 = vmul.f32 %v2944, %v2944
  %v3041 = vmul.f32 %v2945, %v2945
  %v3042 = vmul.f32 %v2946, %v2946
  %v3043 = vmul.f32 %v2947, %v2947
  %v3044 = vmul.f32 %v2948, %v2948
  %v3045 = vmul.f32 %v2949, %v2949
  %v3046 = vmul.f32 %v2950, %v2950
  %v3047 = vmul.f32 %v2951, %v2951
  %v3048 = vmul.f32 %v2952, %v2952
  %v3049 = vmul.f32 %v2953, %v2953
  %v3050 = vmul.f32 %v2954, %v2954
  %v3051 = vmul.f32 %v2955, %v2955
  %v3052 = vmul.f32 %v2956, %v2956
  %v3053 = vmul.f32 %v2957, %v2957
  %v3054 = vmul.f32 %v2958, %v2958
  %v3055 = vmul.f32 %v2959, %v2959
  %v3056 = vmul.f32 %v2960, %v2960
  %v3057 = vmul.f32 %v2961, %v2961
  %v3058 = vmul.f32 %v2962, %v2962
  %v3059 = vmul.f32 %v2963, %v2963
  %v3060 = vmul.f32 %v2964, %v2964
  %v3061 = vmul.f32 %v2965, %v2965
  %v3062 = vmul.f32 %v2966, %v2966
  %v3063 = vmul.f32 %v2967, %v2967
  %v3064 = vmul.f32 %v2968, %v2968
  %v3065 = vmul.f32 %v2969, %v2969
  %v3066 = vmul.f32 %v2970, %v2970
  %v3067 = vmul.f32 %v2971, %v2971
  %v3068 = vmul.f32 %v2972, %v2972
  %v3069 = vmul.f32 %v2973, %v2973
  %v3070 = vmul.f32 %v2974, %v2974
  %v3071 = vmul.f32 %v2975, %v2975
  %v3072 = vmul.f32 %v2976, %v2976
  %v3073 = vmul.f32 %v2977, %v2977
  %v3074 = vmul.f32 %v2978, %v2978
  %v3075 = vmul.f32 %v2979, %v2979
  %v3076 = vmul.f32 %v2980, %v2980
  %v3077 = vmul.f32 %v2981, %v2981
  %v3078 = vmul.f32 %v2982, %v2982
  %v3079 = vmul.f32 %v2983, %v2983
  %v3080 = vmul.f32 %v2984, %v2984
  %v3081 = vmul.f32 %v2985, %v2985
  %v3082 = vmul.f32 %v2986, %v2986
  %v3083 = vmul.f32 %v2987, %v2987
  %v3084 = vmul.f32 %v2988, %v2988
  %v3085 = vmul.f32 %v2989, %v2989
  %v3086 = vmul.f32 %v2990, %v2990
  %v3087 = vmul.f32 %v2991, %v2991
  %v3088 = vmul.f32 %v2992, %v2992
  %v3089 = vmul.f32 %v2993, %v2993
  %v3090 = vmul.f32 %v2994, %v2994
  %v3091 = vmul.f32 %v2995, %v2995
  %v3092 = vmul.f32 %v2996, %v2996
  %v3093 = vmul.f32 %v2997, %v2997
  %v3094 = vmul.f32 %v2998, %v2998
  %v3095 = vmul.f32 %v2999, %v2999
  %v3096 = vmul.f32 %v3000, %v3000
  %v3097 = vmul.f32 %v3001, %v3001
  %v3098 = vmul.f32 %v3002, %v3002
  %v3099 = vmul.f32 %v3003, %v3003
  %v3100 = vmul.f32 %v3004, %v3004
  %v3101 = vmul.f32 %v3005, %v3005
  %v3102 = vmul.f32 %v3006, %v3006
  %v3103 = vmul.f32 %v3007, %v3007
  %v3104 = vmul.f32 %v3008, %v3008
  %v3201 = vrot.slane %v3010, 7
  %v3202 = vrot.slane %v3011, 6
  %v3203 = vrot.slane %v3012, 5
  %v3204 = vrot.slane %v3013, 4
  %v3205 = vrot.slane %v3014, 3
  %v3206 = vrot.slane %v3015, 2
  %v3207 = vrot.slane %v3016, 1
  %v3208 = vrot.slane %v3018, 7
  %v3209 = vrot.slane %v3019, 6
  %v3210 = vrot.slane %v3020, 5
  %v3211 = vrot.slane %v3021, 4
  %v3212 = vrot.slane %v3022, 3
  %v3213 = vrot.slane %v3023, 2
  %v3214 = vrot.slane %v3024, 1
  %v3215 = vrot.slane %v3026, 7
  %v3216 = vrot.slane %v3027, 6
  %v3217 = vrot.slane %v3028, 5
  %v3218 = vrot.slane %v3029, 4
  %v3219 = vrot.slane %v3030, 3
  %v3220 = vrot.slane %v3031, 2
  %v3221 = vrot.slane %v3032, 1
  %v3222 = vrot.slane %v3034, 7
  %v3223 = vrot.slane %v3035, 6
  %v3224 = vrot.slane %v3036, 5
  %v3225 = vrot.slane %v3037, 4
  %v3226 = vrot.slane %v3038, 3
  %v3227 = vrot.slane %v3039, 2
  %v3228 = vrot.slane %v3040, 1
  %v3229 = vrot.slane %v3042, 7
  %v3230 = vrot.slane %v3043, 6
  %v3231 = vrot.slane %v3044, 5
  %v3232 = vrot.slane %v3045, 4
  %v3233 = vrot.slane %v3046, 3
  %v3234 = vrot.slane %v3047, 2
  %v3235 = vrot.slane %v3048, 1
  %v3236 = vrot.slane %v3050, 7
  %v3237 = vrot.slane %v3051, 6
  %v3238 = vrot.slane %v3052, 5
  %v3239 = vrot.slane %v3053, 4
  %v3240 = vrot.slane %v3054, 3
  %v3241 = vrot.slane %v3055, 2
  %v3242 = vrot.slane %v3056, 1
  %v3243 = vrot.slane %v3058, 7
  %v3244 = vrot.slane %v3059, 6
  %v3245 = vrot.slane %v3060, 5
  %v3246 = vrot.slane %v3061, 4
  %v3247 = vrot.slane %v3062, 3
  %v3248 = vrot.slane %v3063, 2
  %v3249 = vrot.slane %v3064, 1
  %v3250 = vrot.slane %v3066, 7
  %v3251 = vrot.slane %v3067, 6
  %v3252 = vrot.slane %v3068, 5
  %v3253 = vrot.slane %v3069, 4
  %v3254 = vrot.slane %v3070, 3
  %v3255 = vrot.slane %v3071, 2
  %v3256 = vrot.slane %v3072, 1
  %v3257 = vrot.slane %v3074, 7
  %v3258 = vrot.slane %v3075, 6
  %v3259 = vrot.slane %v3076, 5
  %v3260 = vrot.slane %v3077, 4
  %v3261 = vrot.slane %v3078, 3
  %v3262 = vrot.slane %v3079, 2
  %v3263 = vrot.slane %v3080, 1
  %v3264 = vrot.slane %v3082, 7
  %v3265 = vrot.slane %v3083, 6
  %v3266 = vrot.slane %v3084, 5
  %v3267 = vrot.slane %v3085, 4
  %v3268 = vrot.slane %v3086, 3
  %v3269 = vrot.slane %v3087, 2
  %v3270 = vrot.slane %v3088, 1
  %v3271 = vrot.slane %v3090, 7
  %v3272 = vrot.slane %v3091, 6
  %v3273 = vrot.slane %v3092, 5
  %v3274 = vrot.slane %v3093, 4
  %v3275 = vrot.slane %v3094, 3
  %v3276 = vrot.slane %v3095, 2
  %v3277 = vrot.slane %v3096, 1
  %v3278 = vrot.slane %v3098, 7
  %v3279 = vrot.slane %v3099, 6
  %v3280 = vrot.slane %v3100, 5
  %v3281 = vrot.slane %v3101, 4
  %v3282 = vrot.slane %v3102, 3
  %v3283 = vrot.slane %v3103, 2
  %v3284 = vrot.slane %v3104, 1
  %vm3285 = vcmask 1040384
  %v3286 = vsel %vm3285, %v3009, %v3201
  %vm3287 = vcmask 1042434
  %v3288 = vsel %vm3287, %v3202, %v3203
  %vm3289 = vcmask 1041408
  %v3290 = vsel %vm3289, %v3286, %v3288
  %vm3291 = vcmask 1044484
  %v3292 = vsel %vm3291, %v3204, %v3205
  %vm3293 = vcmask 1046534
  %v3294 = vsel %vm3293, %v3206, %v3207
  %vm3295 = vcmask 1045508
  %v3296 = vsel %vm3295, %v3292, %v3294
  %v3297 = vsel %vm402, %v3290, %v3296
  %v3298 = vsel %vm3285, %v3017, %v3208
  %v3299 = vsel %vm3287, %v3209, %v3210
  %v3300 = vsel %vm3289, %v3298, %v3299
  %v3301 = vsel %vm3291, %v3211, %v3212
  %v3302 = vsel %vm3293, %v3213, %v3214
  %v3303 = vsel %vm3295, %v3301, %v3302
  %v3304 = vsel %vm402, %v3300, %v3303
  %v3305 = vsel %vm3285, %v3025, %v3215
  %v3306 = vsel %vm3287, %v3216, %v3217
  %v3307 = vsel %vm3289, %v3305, %v3306
  %v3308 = vsel %vm3291, %v3218, %v3219
  %v3309 = vsel %vm3293, %v3220, %v3221
  %v3310 = vsel %vm3295, %v3308, %v3309
  %v3311 = vsel %vm402, %v3307, %v3310
  %v3312 = vsel %vm3285, %v3033, %v3222
  %v3313 = vsel %vm3287, %v3223, %v3224
  %v3314 = vsel %vm3289, %v3312, %v3313
  %v3315 = vsel %vm3291, %v3225, %v3226
  %v3316 = vsel %vm3293, %v3227, %v3228
  %v3317 = vsel %vm3295, %v3315, %v3316
  %v3318 = vsel %vm402, %v3314, %v3317
  %vm3319 = vcmask 1041409
  %v3320 = vsel %vm3319, %v3009, %v3201
  %vm3321 = vcmask 1043459
  %v3322 = vsel %vm3321, %v3202, %v3203
  %vm3323 = vcmask 1042433
  %v3324 = vsel %vm3323, %v3320, %v3322
  %vm3325 = vcmask 1045509
  %v3326 = vsel %vm3325, %v3204, %v3205
  %vm3327 = vcmask 1046528
  %v3328 = vsel %vm3327, %v3207, %v3206
  %vm3329 = vcmask 1046533
  %v3330 = vsel %vm3329, %v3326, %v3328
  %vm3331 = vcmask 1044481
  %v3332 = vsel %vm3331, %v3324, %v3330
  %v3333 = vrot.slane %v3332, 1
  %v3334 = vsel %vm3319, %v3017, %v3208
  %v3335 = vsel %vm3321, %v3209, %v3210
  %v3336 = vsel %vm3323, %v3334, %v3335
  %v3337 = vsel %vm3325, %v3211, %v3212
  %v3338 = vsel %vm3327, %v3214, %v3213
  %v3339 = vsel %vm3329, %v3337, %v3338
  %v3340 = vsel %vm3331, %v3336, %v3339
  %v3341 = vrot.slane %v3340, 1
  %v3342 = vsel %vm3319, %v3025, %v3215
  %v3343 = vsel %vm3321, %v3216, %v3217
  %v3344 = vsel %vm3323, %v3342, %v3343
  %v3345 = vsel %vm3325, %v3218, %v3219
  %v3346 = vsel %vm3327, %v3221, %v3220
  %v3347 = vsel %vm3329, %v3345, %v3346
  %v3348 = vsel %vm3331, %v3344, %v3347
  %v3349 = vrot.slane %v3348, 1
  %v3350 = vsel %vm3319, %v3033, %v3222
  %v3351 = vsel %vm3321, %v3223, %v3224
  %v3352 = vsel %vm3323, %v3350, %v3351
  %v3353 = vsel %vm3325, %v3225, %v3226
  %v3354 = vsel %vm3327, %v3228, %v3227
  %v3355 = vsel %vm3329, %v3353, %v3354
  %v3356 = vsel %vm3331, %v3352, %v3355
  %v3357 = vrot.slane %v3356, 1
  %v3358 = vsel %vm3287, %v3009, %v3201
  %v3359 = vsel %vm3291, %v3202, %v3203
  %vm3360 = vcmask 1043458
  %v3361 = vsel %vm3360, %v3358, %v3359
  %v3362 = vsel %vm3293, %v3204, %v3205
  %v3363 = vsel %vm3285, %v3206, %v3207
  %vm3364 = vcmask 1045504
  %v3365 = vsel %vm3364, %v3363, %v3362
  %vm3366 = vcmask 1045506
  %v3367 = vsel %vm3366, %v3361, %v3365
  %v3368 = vrot.slane %v3367, 2
  %v3369 = vsel %vm3287, %v3017, %v3208
  %v3370 = vsel %vm3291, %v3209, %v3210
  %v3371 = vsel %vm3360, %v3369, %v3370
  %v3372 = vsel %vm3293, %v3211, %v3212
  %v3373 = vsel %vm3285, %v3213, %v3214
  %v3374 = vsel %vm3364, %v3373, %v3372
  %v3375 = vsel %vm3366, %v3371, %v3374
  %v3376 = vrot.slane %v3375, 2
  %v3377 = vsel %vm3287, %v3025, %v3215
  %v3378 = vsel %vm3291, %v3216, %v3217
  %v3379 = vsel %vm3360, %v3377, %v3378
  %v3380 = vsel %vm3293, %v3218, %v3219
  %v3381 = vsel %vm3285, %v3220, %v3221
  %v3382 = vsel %vm3364, %v3381, %v3380
  %v3383 = vsel %vm3366, %v3379, %v3382
  %v3384 = vrot.slane %v3383, 2
  %v3385 = vsel %vm3287, %v3033, %v3222
  %v3386 = vsel %vm3291, %v3223, %v3224
  %v3387 = vsel %vm3360, %v3385, %v3386
  %v3388 = vsel %vm3293, %v3225, %v3226
  %v3389 = vsel %vm3285, %v3227, %v3228
  %v3390 = vsel %vm3364, %v3389, %v3388
  %v3391 = vsel %vm3366, %v3387, %v3390
  %v3392 = vrot.slane %v3391, 2
  %v3393 = vsel %vm3321, %v3009, %v3201
  %v3394 = vsel %vm3325, %v3202, %v3203
  %vm3395 = vcmask 1044483
  %v3396 = vsel %vm3395, %v3393, %v3394
  %v3397 = vsel %vm3327, %v3205, %v3204
  %v3398 = vsel %vm3319, %v3206, %v3207
  %vm3399 = vcmask 1046529
  %v3400 = vsel %vm3399, %v3398, %v3397
  %vm3401 = vcmask 1046531
  %v3402 = vsel %vm3401, %v3396, %v3400
  %v3403 = vrot.slane %v3402, 3
  %v3404 = vsel %vm3321, %v3017, %v3208
  %v3405 = vsel %vm3325, %v3209, %v3210
  %v3406 = vsel %vm3395, %v3404, %v3405
  %v3407 = vsel %vm3327, %v3212, %v3211
  %v3408 = vsel %vm3319, %v3213, %v3214
  %v3409 = vsel %vm3399, %v3408, %v3407
  %v3410 = vsel %vm3401, %v3406, %v3409
  %v3411 = vrot.slane %v3410, 3
  %v3412 = vsel %vm3321, %v3025, %v3215
  %v3413 = vsel %vm3325, %v3216, %v3217
  %v3414 = vsel %vm3395, %v3412, %v3413
  %v3415 = vsel %vm3327, %v3219, %v3218
  %v3416 = vsel %vm3319, %v3220, %v3221
  %v3417 = vsel %vm3399, %v3416, %v3415
  %v3418 = vsel %vm3401, %v3414, %v3417
  %v3419 = vrot.slane %v3418, 3
  %v3420 = vsel %vm3321, %v3033, %v3222
  %v3421 = vsel %vm3325, %v3223, %v3224
  %v3422 = vsel %vm3395, %v3420, %v3421
  %v3423 = vsel %vm3327, %v3226, %v3225
  %v3424 = vsel %vm3319, %v3227, %v3228
  %v3425 = vsel %vm3399, %v3424, %v3423
  %v3426 = vsel %vm3401, %v3422, %v3425
  %v3427 = vrot.slane %v3426, 3
  %v3428 = vsel %vm3291, %v3009, %v3201
  %v3429 = vsel %vm3293, %v3202, %v3203
  %v3430 = vsel %vm3295, %v3428, %v3429
  %v3431 = vsel %vm3285, %v3204, %v3205
  %v3432 = vsel %vm3287, %v3206, %v3207
  %v3433 = vsel %vm3289, %v3431, %v3432
  %v3434 = vsel %vm402, %v3433, %v3430
  %v3435 = vrot.slane %v3434, 4
  %v3436 = vsel %vm3291, %v3017, %v3208
  %v3437 = vsel %vm3293, %v3209, %v3210
  %v3438 = vsel %vm3295, %v3436, %v3437
  %v3439 = vsel %vm3285, %v3211, %v3212
  %v3440 = vsel %vm3287, %v3213, %v3214
  %v3441 = vsel %vm3289, %v3439, %v3440
  %v3442 = vsel %vm402, %v3441, %v3438
  %v3443 = vrot.slane %v3442, 4
  %v3444 = vsel %vm3291, %v3025, %v3215
  %v3445 = vsel %vm3293, %v3216, %v3217
  %v3446 = vsel %vm3295, %v3444, %v3445
  %v3447 = vsel %vm3285, %v3218, %v3219
  %v3448 = vsel %vm3287, %v3220, %v3221
  %v3449 = vsel %vm3289, %v3447, %v3448
  %v3450 = vsel %vm402, %v3449, %v3446
  %v3451 = vrot.slane %v3450, 4
  %v3452 = vsel %vm3291, %v3033, %v3222
  %v3453 = vsel %vm3293, %v3223, %v3224
  %v3454 = vsel %vm3295, %v3452, %v3453
  %v3455 = vsel %vm3285, %v3225, %v3226
  %v3456 = vsel %vm3287, %v3227, %v3228
  %v3457 = vsel %vm3289, %v3455, %v3456
  %v3458 = vsel %vm402, %v3457, %v3454
  %v3459 = vrot.slane %v3458, 4
  %v3460 = vsel %vm3325, %v3009, %v3201
  %v3461 = vsel %vm3327, %v3203, %v3202
  %v3462 = vsel %vm3329, %v3460, %v3461
  %v3463 = vsel %vm3319, %v3204, %v3205
  %v3464 = vsel %vm3321, %v3206, %v3207
  %v3465 = vsel %vm3323, %v3463, %v3464
  %v3466 = vsel %vm3331, %v3465, %v3462
  %v3467 = vrot.slane %v3466, 5
  %v3468 = vsel %vm3325, %v3017, %v3208
  %v3469 = vsel %vm3327, %v3210, %v3209
  %v3470 = vsel %vm3329, %v3468, %v3469
  %v3471 = vsel %vm3319, %v3211, %v3212
  %v3472 = vsel %vm3321, %v3213, %v3214
  %v3473 = vsel %vm3323, %v3471, %v3472
  %v3474 = vsel %vm3331, %v3473, %v3470
  %v3475 = vrot.slane %v3474, 5
  %v3476 = vsel %vm3325, %v3025, %v3215
  %v3477 = vsel %vm3327, %v3217, %v3216
  %v3478 = vsel %vm3329, %v3476, %v3477
  %v3479 = vsel %vm3319, %v3218, %v3219
  %v3480 = vsel %vm3321, %v3220, %v3221
  %v3481 = vsel %vm3323, %v3479, %v3480
  %v3482 = vsel %vm3331, %v3481, %v3478
  %v3483 = vrot.slane %v3482, 5
  %v3484 = vsel %vm3325, %v3033, %v3222
  %v3485 = vsel %vm3327, %v3224, %v3223
  %v3486 = vsel %vm3329, %v3484, %v3485
  %v3487 = vsel %vm3319, %v3225, %v3226
  %v3488 = vsel %vm3321, %v3227, %v3228
  %v3489 = vsel %vm3323, %v3487, %v3488
  %v3490 = vsel %vm3331, %v3489, %v3486
  %v3491 = vrot.slane %v3490, 5
  %v3492 = vsel %vm3293, %v3009, %v3201
  %v3493 = vsel %vm3285, %v3202, %v3203
  %v3494 = vsel %vm3364, %v3493, %v3492
  %v3495 = vsel %vm3287, %v3204, %v3205
  %v3496 = vsel %vm3291, %v3206, %v3207
  %v3497 = vsel %vm3360, %v3495, %v3496
  %v3498 = vsel %vm3366, %v3497, %v3494
  %v3499 = vrot.slane %v3498, 6
  %v3500 = vsel %vm3293, %v3017, %v3208
  %v3501 = vsel %vm3285, %v3209, %v3210
  %v3502 = vsel %vm3364, %v3501, %v3500
  %v3503 = vsel %vm3287, %v3211, %v3212
  %v3504 = vsel %vm3291, %v3213, %v3214
  %v3505 = vsel %vm3360, %v3503, %v3504
  %v3506 = vsel %vm3366, %v3505, %v3502
  %v3507 = vrot.slane %v3506, 6
  %v3508 = vsel %vm3293, %v3025, %v3215
  %v3509 = vsel %vm3285, %v3216, %v3217
  %v3510 = vsel %vm3364, %v3509, %v3508
  %v3511 = vsel %vm3287, %v3218, %v3219
  %v3512 = vsel %vm3291, %v3220, %v3221
  %v3513 = vsel %vm3360, %v3511, %v3512
  %v3514 = vsel %vm3366, %v3513, %v3510
  %v3515 = vrot.slane %v3514, 6
  %v3516 = vsel %vm3293, %v3033, %v3222
  %v3517 = vsel %vm3285, %v3223, %v3224
  %v3518 = vsel %vm3364, %v3517, %v3516
  %v3519 = vsel %vm3287, %v3225, %v3226
  %v3520 = vsel %vm3291, %v3227, %v3228
  %v3521 = vsel %vm3360, %v3519, %v3520
  %v3522 = vsel %vm3366, %v3521, %v3518
  %v3523 = vrot.slane %v3522, 6
  %v3524 = vsel %vm3327, %v3201, %v3009
  %v3525 = vsel %vm3319, %v3202, %v3203
  %v3526 = vsel %vm3399, %v3525, %v3524
  %v3527 = vsel %vm3321, %v3204, %v3205
  %v3528 = vsel %vm3325, %v3206, %v3207
  %v3529 = vsel %vm3395, %v3527, %v3528
  %v3530 = vsel %vm3401, %v3529, %v3526
  %v3531 = vrot.slane %v3530, 7
  %v3532 = vsel %vm3327, %v3208, %v3017
  %v3533 = vsel %vm3319, %v3209, %v3210
  %v3534 = vsel %vm3399, %v3533, %v3532
  %v3535 = vsel %vm3321, %v3211, %v3212
  %v3536 = vsel %vm3325, %v3213, %v3214
  %v3537 = vsel %vm3395, %v3535, %v3536
  %v3538 = vsel %vm3401, %v3537, %v3534
  %v3539 = vrot.slane %v3538, 7
  %v3540 = vsel %vm3327, %v3215, %v3025
  %v3541 = vsel %vm3319, %v3216, %v3217
  %v3542 = vsel %vm3399, %v3541, %v3540
  %v3543 = vsel %vm3321, %v3218, %v3219
  %v3544 = vsel %vm3325, %v3220, %v3221
  %v3545 = vsel %vm3395, %v3543, %v3544
  %v3546 = vsel %vm3401, %v3545, %v3542
  %v3547 = vrot.slane %v3546, 7
  %v3548 = vsel %vm3327, %v3222, %v3033
  %v3549 = vsel %vm3319, %v3223, %v3224
  %v3550 = vsel %vm3399, %v3549, %v3548
  %v3551 = vsel %vm3321, %v3225, %v3226
  %v3552 = vsel %vm3325, %v3227, %v3228
  %v3553 = vsel %vm3395, %v3551, %v3552
  %v3554 = vsel %vm3401, %v3553, %v3550
  %v3555 = vrot.slane %v3554, 7
  %v3556 = vsel %vm3285, %v3041, %v3229
  %v3557 = vsel %vm3287, %v3230, %v3231
  %v3558 = vsel %vm3289, %v3556, %v3557
  %v3559 = vsel %vm3291, %v3232, %v3233
  %v3560 = vsel %vm3293, %v3234, %v3235
  %v3561 = vsel %vm3295, %v3559, %v3560
  %v3562 = vsel %vm402, %v3558, %v3561
  %v3563 = vsel %vm3285, %v3049, %v3236
  %v3564 = vsel %vm3287, %v3237, %v3238
  %v3565 = vsel %vm3289, %v3563, %v3564
  %v3566 = vsel %vm3291, %v3239, %v3240
  %v3567 = vsel %vm3293, %v3241, %v3242
  %v3568 = vsel %vm3295, %v3566, %v3567
  %v3569 = vsel %vm402, %v3565, %v3568
  %v3570 = vsel %vm3285, %v3057, %v3243
  %v3571 = vsel %vm3287, %v3244, %v3245
  %v3572 = vsel %vm3289, %v3570, %v3571
  %v3573 = vsel %vm3291, %v3246, %v3247
  %v3574 = vsel %vm3293, %v3248, %v3249
  %v3575 = vsel %vm3295, %v3573, %v3574
  %v3576 = vsel %vm402, %v3572, %v3575
  %v3577 = vsel %vm3285, %v3065, %v3250
  %v3578 = vsel %vm3287, %v3251, %v3252
  %v3579 = vsel %vm3289, %v3577, %v3578
  %v3580 = vsel %vm3291, %v3253, %v3254
  %v3581 = vsel %vm3293, %v3255, %v3256
  %v3582 = vsel %vm3295, %v3580, %v3581
  %v3583 = vsel %vm402, %v3579, %v3582
  %v3584 = vsel %vm3319, %v3041, %v3229
  %v3585 = vsel %vm3321, %v3230, %v3231
  %v3586 = vsel %vm3323, %v3584, %v3585
  %v3587 = vsel %vm3325, %v3232, %v3233
  %v3588 = vsel %vm3327, %v3235, %v3234
  %v3589 = vsel %vm3329, %v3587, %v3588
  %v3590 = vsel %vm3331, %v3586, %v3589
  %v3591 = vrot.slane %v3590, 1
  %v3592 = vsel %vm3319, %v3049, %v3236
  %v3593 = vsel %vm3321, %v3237, %v3238
  %v3594 = vsel %vm3323, %v3592, %v3593
  %v3595 = vsel %vm3325, %v3239, %v3240
  %v3596 = vsel %vm3327, %v3242, %v3241
  %v3597 = vsel %vm3329, %v3595, %v3596
  %v3598 = vsel %vm3331, %v3594, %v3597
  %v3599 = vrot.slane %v3598, 1
  %v3600 = vsel %vm3319, %v3057, %v3243
  %v3601 = vsel %vm3321, %v3244, %v3245
  %v3602 = vsel %vm3323, %v3600, %v3601
  %v3603 = vsel %vm3325, %v3246, %v3247
  %v3604 = vsel %vm3327, %v3249, %v3248
  %v3605 = vsel %vm3329, %v3603, %v3604
  %v3606 = vsel %vm3331, %v3602, %v3605
  %v3607 = vrot.slane %v3606, 1
  %v3608 = vsel %vm3319, %v3065, %v3250
  %v3609 = vsel %vm3321, %v3251, %v3252
  %v3610 = vsel %vm3323, %v3608, %v3609
  %v3611 = vsel %vm3325, %v3253, %v3254
  %v3612 = vsel %vm3327, %v3256, %v3255
  %v3613 = vsel %vm3329, %v3611, %v3612
  %v3614 = vsel %vm3331, %v3610, %v3613
  %v3615 = vrot.slane %v3614, 1
  %v3616 = vsel %vm3287, %v3041, %v3229
  %v3617 = vsel %vm3291, %v3230, %v3231
  %v3618 = vsel %vm3360, %v3616, %v3617
  %v3619 = vsel %vm3293, %v3232, %v3233
  %v3620 = vsel %vm3285, %v3234, %v3235
  %v3621 = vsel %vm3364, %v3620, %v3619
  %v3622 = vsel %vm3366, %v3618, %v3621
  %v3623 = vrot.slane %v3622, 2
  %v3624 = vsel %vm3287, %v3049, %v3236
  %v3625 = vsel %vm3291, %v3237, %v3238
  %v3626 = vsel %vm3360, %v3624, %v3625
  %v3627 = vsel %vm3293, %v3239, %v3240
  %v3628 = vsel %vm3285, %v3241, %v3242
  %v3629 = vsel %vm3364, %v3628, %v3627
  %v3630 = vsel %vm3366, %v3626, %v3629
  %v3631 = vrot.slane %v3630, 2
  %v3632 = vsel %vm3287, %v3057, %v3243
  %v3633 = vsel %vm3291, %v3244, %v3245
  %v3634 = vsel %vm3360, %v3632, %v3633
  %v3635 = vsel %vm3293, %v3246, %v3247
  %v3636 = vsel %vm3285, %v3248, %v3249
  %v3637 = vsel %vm3364, %v3636, %v3635
  %v3638 = vsel %vm3366, %v3634, %v3637
  %v3639 = vrot.slane %v3638, 2
  %v3640 = vsel %vm3287, %v3065, %v3250
  %v3641 = vsel %vm3291, %v3251, %v3252
  %v3642 = vsel %vm3360, %v3640, %v3641
  %v3643 = vsel %vm3293, %v3253, %v3254
  %v3644 = vsel %vm3285, %v3255, %v3256
  %v3645 = vsel %vm3364, %v3644, %v3643
  %v3646 = vsel %vm3366, %v3642, %v3645
  %v3647 = vrot.slane %v3646, 2
  %v3648 = vsel %vm3321, %v3041, %v3229
  %v3649 = vsel %vm3325, %v3230, %v3231
  %v3650 = vsel %vm3395, %v3648, %v3649
  %v3651 = vsel %vm3327, %v3233, %v3232
  %v3652 = vsel %vm3319, %v3234, %v3235
  %v3653 = vsel %vm3399, %v3652, %v3651
  %v3654 = vsel %vm3401, %v3650, %v3653
  %v3655 = vrot.slane %v3654, 3
  %v3656 = vsel %vm3321, %v3049, %v3236
  %v3657 = vsel %vm3325, %v3237, %v3238
  %v3658 = vsel %vm3395, %v3656, %v3657
  %v3659 = vsel %vm3327, %v3240, %v3239
  %v3660 = vsel %vm3319, %v3241, %v3242
  %v3661 = vsel %vm3399, %v3660, %v3659
  %v3662 = vsel %vm3401, %v3658, %v3661
  %v3663 = vrot.slane %v3662, 3
  %v3664 = vsel %vm3321, %v3057, %v3243
  %v3665 = vsel %vm3325, %v3244, %v3245
  %v3666 = vsel %vm3395, %v3664, %v3665
  %v3667 = vsel %vm3327, %v3247, %v3246
  %v3668 = vsel %vm3319, %v3248, %v3249
  %v3669 = vsel %vm3399, %v3668, %v3667
  %v3670 = vsel %vm3401, %v3666, %v3669
  %v3671 = vrot.slane %v3670, 3
  %v3672 = vsel %vm3321, %v3065, %v3250
  %v3673 = vsel %vm3325, %v3251, %v3252
  %v3674 = vsel %vm3395, %v3672, %v3673
  %v3675 = vsel %vm3327, %v3254, %v3253
  %v3676 = vsel %vm3319, %v3255, %v3256
  %v3677 = vsel %vm3399, %v3676, %v3675
  %v3678 = vsel %vm3401, %v3674, %v3677
  %v3679 = vrot.slane %v3678, 3
  %v3680 = vsel %vm3291, %v3041, %v3229
  %v3681 = vsel %vm3293, %v3230, %v3231
  %v3682 = vsel %vm3295, %v3680, %v3681
  %v3683 = vsel %vm3285, %v3232, %v3233
  %v3684 = vsel %vm3287, %v3234, %v3235
  %v3685 = vsel %vm3289, %v3683, %v3684
  %v3686 = vsel %vm402, %v3685, %v3682
  %v3687 = vrot.slane %v3686, 4
  %v3688 = vsel %vm3291, %v3049, %v3236
  %v3689 = vsel %vm3293, %v3237, %v3238
  %v3690 = vsel %vm3295, %v3688, %v3689
  %v3691 = vsel %vm3285, %v3239, %v3240
  %v3692 = vsel %vm3287, %v3241, %v3242
  %v3693 = vsel %vm3289, %v3691, %v3692
  %v3694 = vsel %vm402, %v3693, %v3690
  %v3695 = vrot.slane %v3694, 4
  %v3696 = vsel %vm3291, %v3057, %v3243
  %v3697 = vsel %vm3293, %v3244, %v3245
  %v3698 = vsel %vm3295, %v3696, %v3697
  %v3699 = vsel %vm3285, %v3246, %v3247
  %v3700 = vsel %vm3287, %v3248, %v3249
  %v3701 = vsel %vm3289, %v3699, %v3700
  %v3702 = vsel %vm402, %v3701, %v3698
  %v3703 = vrot.slane %v3702, 4
  %v3704 = vsel %vm3291, %v3065, %v3250
  %v3705 = vsel %vm3293, %v3251, %v3252
  %v3706 = vsel %vm3295, %v3704, %v3705
  %v3707 = vsel %vm3285, %v3253, %v3254
  %v3708 = vsel %vm3287, %v3255, %v3256
  %v3709 = vsel %vm3289, %v3707, %v3708
  %v3710 = vsel %vm402, %v3709, %v3706
  %v3711 = vrot.slane %v3710, 4
  %v3712 = vsel %vm3325, %v3041, %v3229
  %v3713 = vsel %vm3327, %v3231, %v3230
  %v3714 = vsel %vm3329, %v3712, %v3713
  %v3715 = vsel %vm3319, %v3232, %v3233
  %v3716 = vsel %vm3321, %v3234, %v3235
  %v3717 = vsel %vm3323, %v3715, %v3716
  %v3718 = vsel %vm3331, %v3717, %v3714
  %v3719 = vrot.slane %v3718, 5
  %v3720 = vsel %vm3325, %v3049, %v3236
  %v3721 = vsel %vm3327, %v3238, %v3237
  %v3722 = vsel %vm3329, %v3720, %v3721
  %v3723 = vsel %vm3319, %v3239, %v3240
  %v3724 = vsel %vm3321, %v3241, %v3242
  %v3725 = vsel %vm3323, %v3723, %v3724
  %v3726 = vsel %vm3331, %v3725, %v3722
  %v3727 = vrot.slane %v3726, 5
  %v3728 = vsel %vm3325, %v3057, %v3243
  %v3729 = vsel %vm3327, %v3245, %v3244
  %v3730 = vsel %vm3329, %v3728, %v3729
  %v3731 = vsel %vm3319, %v3246, %v3247
  %v3732 = vsel %vm3321, %v3248, %v3249
  %v3733 = vsel %vm3323, %v3731, %v3732
  %v3734 = vsel %vm3331, %v3733, %v3730
  %v3735 = vrot.slane %v3734, 5
  %v3736 = vsel %vm3325, %v3065, %v3250
  %v3737 = vsel %vm3327, %v3252, %v3251
  %v3738 = vsel %vm3329, %v3736, %v3737
  %v3739 = vsel %vm3319, %v3253, %v3254
  %v3740 = vsel %vm3321, %v3255, %v3256
  %v3741 = vsel %vm3323, %v3739, %v3740
  %v3742 = vsel %vm3331, %v3741, %v3738
  %v3743 = vrot.slane %v3742, 5
  %v3744 = vsel %vm3293, %v3041, %v3229
  %v3745 = vsel %vm3285, %v3230, %v3231
  %v3746 = vsel %vm3364, %v3745, %v3744
  %v3747 = vsel %vm3287, %v3232, %v3233
  %v3748 = vsel %vm3291, %v3234, %v3235
  %v3749 = vsel %vm3360, %v3747, %v3748
  %v3750 = vsel %vm3366, %v3749, %v3746
  %v3751 = vrot.slane %v3750, 6
  %v3752 = vsel %vm3293, %v3049, %v3236
  %v3753 = vsel %vm3285, %v3237, %v3238
  %v3754 = vsel %vm3364, %v3753, %v3752
  %v3755 = vsel %vm3287, %v3239, %v3240
  %v3756 = vsel %vm3291, %v3241, %v3242
  %v3757 = vsel %vm3360, %v3755, %v3756
  %v3758 = vsel %vm3366, %v3757, %v3754
  %v3759 = vrot.slane %v3758, 6
  %v3760 = vsel %vm3293, %v3057, %v3243
  %v3761 = vsel %vm3285, %v3244, %v3245
  %v3762 = vsel %vm3364, %v3761, %v3760
  %v3763 = vsel %vm3287, %v3246, %v3247
  %v3764 = vsel %vm3291, %v3248, %v3249
  %v3765 = vsel %vm3360, %v3763, %v3764
  %v3766 = vsel %vm3366, %v3765, %v3762
  %v3767 = vrot.slane %v3766, 6
  %v3768 = vsel %vm3293, %v3065, %v3250
  %v3769 = vsel %vm3285, %v3251, %v3252
  %v3770 = vsel %vm3364, %v3769, %v3768
  %v3771 = vsel %vm3287, %v3253, %v3254
  %v3772 = vsel %vm3291, %v3255, %v3256
  %v3773 = vsel %vm3360, %v3771, %v3772
  %v3774 = vsel %vm3366, %v3773, %v3770
  %v3775 = vrot.slane %v3774, 6
  %v3776 = vsel %vm3327, %v3229, %v3041
  %v3777 = vsel %vm3319, %v3230, %v3231
  %v3778 = vsel %vm3399, %v3777, %v3776
  %v3779 = vsel %vm3321, %v3232, %v3233
  %v3780 = vsel %vm3325, %v3234, %v3235
  %v3781 = vsel %vm3395, %v3779, %v3780
  %v3782 = vsel %vm3401, %v3781, %v3778
  %v3783 = vrot.slane %v3782, 7
  %v3784 = vsel %vm3327, %v3236, %v3049
  %v3785 = vsel %vm3319, %v3237, %v3238
  %v3786 = vsel %vm3399, %v3785, %v3784
  %v3787 = vsel %vm3321, %v3239, %v3240
  %v3788 = vsel %vm3325, %v3241, %v3242
  %v3789 = vsel %vm3395, %v3787, %v3788
  %v3790 = vsel %vm3401, %v3789, %v3786
  %v3791 = vrot.slane %v3790, 7
  %v3792 = vsel %vm3327, %v3243, %v3057
  %v3793 = vsel %vm3319, %v3244, %v3245
  %v3794 = vsel %vm3399, %v3793, %v3792
  %v3795 = vsel %vm3321, %v3246, %v3247
  %v3796 = vsel %vm3325, %v3248, %v3249
  %v3797 = vsel %vm3395, %v3795, %v3796
  %v3798 = vsel %vm3401, %v3797, %v3794
  %v3799 = vrot.slane %v3798, 7
  %v3800 = vsel %vm3327, %v3250, %v3065
  %v3801 = vsel %vm3319, %v3251, %v3252
  %v3802 = vsel %vm3399, %v3801, %v3800
  %v3803 = vsel %vm3321, %v3253, %v3254
  %v3804 = vsel %vm3325, %v3255, %v3256
  %v3805 = vsel %vm3395, %v3803, %v3804
  %v3806 = vsel %vm3401, %v3805, %v3802
  %v3807 = vrot.slane %v3806, 7
  %v3808 = vsel %vm3285, %v3073, %v3257
  %v3809 = vsel %vm3287, %v3258, %v3259
  %v3810 = vsel %vm3289, %v3808, %v3809
  %v3811 = vsel %vm3291, %v3260, %v3261
  %v3812 = vsel %vm3293, %v3262, %v3263
  %v3813 = vsel %vm3295, %v3811, %v3812
  %v3814 = vsel %vm402, %v3810, %v3813
  %v3815 = vsel %vm3285, %v3081, %v3264
  %v3816 = vsel %vm3287, %v3265, %v3266
  %v3817 = vsel %vm3289, %v3815, %v3816
  %v3818 = vsel %vm3291, %v3267, %v3268
  %v3819 = vsel %vm3293, %v3269, %v3270
  %v3820 = vsel %vm3295, %v3818, %v3819
  %v3821 = vsel %vm402, %v3817, %v3820
  %v3822 = vsel %vm3285, %v3089, %v3271
  %v3823 = vsel %vm3287, %v3272, %v3273
  %v3824 = vsel %vm3289, %v3822, %v3823
  %v3825 = vsel %vm3291, %v3274, %v3275
  %v3826 = vsel %vm3293, %v3276, %v3277
  %v3827 = vsel %vm3295, %v3825, %v3826
  %v3828 = vsel %vm402, %v3824, %v3827
  %v3829 = vsel %vm3285, %v3097, %v3278
  %v3830 = vsel %vm3287, %v3279, %v3280
  %v3831 = vsel %vm3289, %v3829, %v3830
  %v3832 = vsel %vm3291, %v3281, %v3282
  %v3833 = vsel %vm3293, %v3283, %v3284
  %v3834 = vsel %vm3295, %v3832, %v3833
  %v3835 = vsel %vm402, %v3831, %v3834
  %v3836 = vsel %vm3319, %v3073, %v3257
  %v3837 = vsel %vm3321, %v3258, %v3259
  %v3838 = vsel %vm3323, %v3836, %v3837
  %v3839 = vsel %vm3325, %v3260, %v3261
  %v3840 = vsel %vm3327, %v3263, %v3262
  %v3841 = vsel %vm3329, %v3839, %v3840
  %v3842 = vsel %vm3331, %v3838, %v3841
  %v3843 = vrot.slane %v3842, 1
  %v3844 = vsel %vm3319, %v3081, %v3264
  %v3845 = vsel %vm3321, %v3265, %v3266
  %v3846 = vsel %vm3323, %v3844, %v3845
  %v3847 = vsel %vm3325, %v3267, %v3268
  %v3848 = vsel %vm3327, %v3270, %v3269
  %v3849 = vsel %vm3329, %v3847, %v3848
  %v3850 = vsel %vm3331, %v3846, %v3849
  %v3851 = vrot.slane %v3850, 1
  %v3852 = vsel %vm3319, %v3089, %v3271
  %v3853 = vsel %vm3321, %v3272, %v3273
  %v3854 = vsel %vm3323, %v3852, %v3853
  %v3855 = vsel %vm3325, %v3274, %v3275
  %v3856 = vsel %vm3327, %v3277, %v3276
  %v3857 = vsel %vm3329, %v3855, %v3856
  %v3858 = vsel %vm3331, %v3854, %v3857
  %v3859 = vrot.slane %v3858, 1
  %v3860 = vsel %vm3319, %v3097, %v3278
  %v3861 = vsel %vm3321, %v3279, %v3280
  %v3862 = vsel %vm3323, %v3860, %v3861
  %v3863 = vsel %vm3325, %v3281, %v3282
  %v3864 = vsel %vm3327, %v3284, %v3283
  %v3865 = vsel %vm3329, %v3863, %v3864
  %v3866 = vsel %vm3331, %v3862, %v3865
  %v3867 = vrot.slane %v3866, 1
  %v3868 = vsel %vm3287, %v3073, %v3257
  %v3869 = vsel %vm3291, %v3258, %v3259
  %v3870 = vsel %vm3360, %v3868, %v3869
  %v3871 = vsel %vm3293, %v3260, %v3261
  %v3872 = vsel %vm3285, %v3262, %v3263
  %v3873 = vsel %vm3364, %v3872, %v3871
  %v3874 = vsel %vm3366, %v3870, %v3873
  %v3875 = vrot.slane %v3874, 2
  %v3876 = vsel %vm3287, %v3081, %v3264
  %v3877 = vsel %vm3291, %v3265, %v3266
  %v3878 = vsel %vm3360, %v3876, %v3877
  %v3879 = vsel %vm3293, %v3267, %v3268
  %v3880 = vsel %vm3285, %v3269, %v3270
  %v3881 = vsel %vm3364, %v3880, %v3879
  %v3882 = vsel %vm3366, %v3878, %v3881
  %v3883 = vrot.slane %v3882, 2
  %v3884 = vsel %vm3287, %v3089, %v3271
  %v3885 = vsel %vm3291, %v3272, %v3273
  %v3886 = vsel %vm3360, %v3884, %v3885
  %v3887 = vsel %vm3293, %v3274, %v3275
  %v3888 = vsel %vm3285, %v3276, %v3277
  %v3889 = vsel %vm3364, %v3888, %v3887
  %v3890 = vsel %vm3366, %v3886, %v3889
  %v3891 = vrot.slane %v3890, 2
  %v3892 = vsel %vm3287, %v3097, %v3278
  %v3893 = vsel %vm3291, %v3279, %v3280
  %v3894 = vsel %vm3360, %v3892, %v3893
  %v3895 = vsel %vm3293, %v3281, %v3282
  %v3896 = vsel %vm3285, %v3283, %v3284
  %v3897 = vsel %vm3364, %v3896, %v3895
  %v3898 = vsel %vm3366, %v3894, %v3897
  %v3899 = vrot.slane %v3898, 2
  %v3900 = vsel %vm3321, %v3073, %v3257
  %v3901 = vsel %vm3325, %v3258, %v3259
  %v3902 = vsel %vm3395, %v3900, %v3901
  %v3903 = vsel %vm3327, %v3261, %v3260
  %v3904 = vsel %vm3319, %v3262, %v3263
  %v3905 = vsel %vm3399, %v3904, %v3903
  %v3906 = vsel %vm3401, %v3902, %v3905
  %v3907 = vrot.slane %v3906, 3
  %v3908 = vsel %vm3321, %v3081, %v3264
  %v3909 = vsel %vm3325, %v3265, %v3266
  %v3910 = vsel %vm3395, %v3908, %v3909
  %v3911 = vsel %vm3327, %v3268, %v3267
  %v3912 = vsel %vm3319, %v3269, %v3270
  %v3913 = vsel %vm3399, %v3912, %v3911
  %v3914 = vsel %vm3401, %v3910, %v3913
  %v3915 = vrot.slane %v3914, 3
  %v3916 = vsel %vm3321, %v3089, %v3271
  %v3917 = vsel %vm3325, %v3272, %v3273
  %v3918 = vsel %vm3395, %v3916, %v3917
  %v3919 = vsel %vm3327, %v3275, %v3274
  %v3920 = vsel %vm3319, %v3276, %v3277
  %v3921 = vsel %vm3399, %v3920, %v3919
  %v3922 = vsel %vm3401, %v3918, %v3921
  %v3923 = vrot.slane %v3922, 3
  %v3924 = vsel %vm3321, %v3097, %v3278
  %v3925 = vsel %vm3325, %v3279, %v3280
  %v3926 = vsel %vm3395, %v3924, %v3925
  %v3927 = vsel %vm3327, %v3282, %v3281
  %v3928 = vsel %vm3319, %v3283, %v3284
  %v3929 = vsel %vm3399, %v3928, %v3927
  %v3930 = vsel %vm3401, %v3926, %v3929
  %v3931 = vrot.slane %v3930, 3
  %v3932 = vsel %vm3291, %v3073, %v3257
  %v3933 = vsel %vm3293, %v3258, %v3259
  %v3934 = vsel %vm3295, %v3932, %v3933
  %v3935 = vsel %vm3285, %v3260, %v3261
  %v3936 = vsel %vm3287, %v3262, %v3263
  %v3937 = vsel %vm3289, %v3935, %v3936
  %v3938 = vsel %vm402, %v3937, %v3934
  %v3939 = vrot.slane %v3938, 4
  %v3940 = vsel %vm3291, %v3081, %v3264
  %v3941 = vsel %vm3293, %v3265, %v3266
  %v3942 = vsel %vm3295, %v3940, %v3941
  %v3943 = vsel %vm3285, %v3267, %v3268
  %v3944 = vsel %vm3287, %v3269, %v3270
  %v3945 = vsel %vm3289, %v3943, %v3944
  %v3946 = vsel %vm402, %v3945, %v3942
  %v3947 = vrot.slane %v3946, 4
  %v3948 = vsel %vm3291, %v3089, %v3271
  %v3949 = vsel %vm3293, %v3272, %v3273
  %v3950 = vsel %vm3295, %v3948, %v3949
  %v3951 = vsel %vm3285, %v3274, %v3275
  %v3952 = vsel %vm3287, %v3276, %v3277
  %v3953 = vsel %vm3289, %v3951, %v3952
  %v3954 = vsel %vm402, %v3953, %v3950
  %v3955 = vrot.slane %v3954, 4
  %v3956 = vsel %vm3291, %v3097, %v3278
  %v3957 = vsel %vm3293, %v3279, %v3280
  %v3958 = vsel %vm3295, %v3956, %v3957
  %v3959 = vsel %vm3285, %v3281, %v3282
  %v3960 = vsel %vm3287, %v3283, %v3284
  %v3961 = vsel %vm3289, %v3959, %v3960
  %v3962 = vsel %vm402, %v3961, %v3958
  %v3963 = vrot.slane %v3962, 4
  %v3964 = vsel %vm3325, %v3073, %v3257
  %v3965 = vsel %vm3327, %v3259, %v3258
  %v3966 = vsel %vm3329, %v3964, %v3965
  %v3967 = vsel %vm3319, %v3260, %v3261
  %v3968 = vsel %vm3321, %v3262, %v3263
  %v3969 = vsel %vm3323, %v3967, %v3968
  %v3970 = vsel %vm3331, %v3969, %v3966
  %v3971 = vrot.slane %v3970, 5
  %v3972 = vsel %vm3325, %v3081, %v3264
  %v3973 = vsel %vm3327, %v3266, %v3265
  %v3974 = vsel %vm3329, %v3972, %v3973
  %v3975 = vsel %vm3319, %v3267, %v3268
  %v3976 = vsel %vm3321, %v3269, %v3270
  %v3977 = vsel %vm3323, %v3975, %v3976
  %v3978 = vsel %vm3331, %v3977, %v3974
  %v3979 = vrot.slane %v3978, 5
  %v3980 = vsel %vm3325, %v3089, %v3271
  %v3981 = vsel %vm3327, %v3273, %v3272
  %v3982 = vsel %vm3329, %v3980, %v3981
  %v3983 = vsel %vm3319, %v3274, %v3275
  %v3984 = vsel %vm3321, %v3276, %v3277
  %v3985 = vsel %vm3323, %v3983, %v3984
  %v3986 = vsel %vm3331, %v3985, %v3982
  %v3987 = vrot.slane %v3986, 5
  %v3988 = vsel %vm3325, %v3097, %v3278
  %v3989 = vsel %vm3327, %v3280, %v3279
  %v3990 = vsel %vm3329, %v3988, %v3989
  %v3991 = vsel %vm3319, %v3281, %v3282
  %v3992 = vsel %vm3321, %v3283, %v3284
  %v3993 = vsel %vm3323, %v3991, %v3992
  %v3994 = vsel %vm3331, %v3993, %v3990
  %v3995 = vrot.slane %v3994, 5
  %v3996 = vsel %vm3293, %v3073, %v3257
  %v3997 = vsel %vm3285, %v3258, %v3259
  %v3998 = vsel %vm3364, %v3997, %v3996
  %v3999 = vsel %vm3287, %v3260, %v3261
  %v4000 = vsel %vm3291, %v3262, %v3263
  %v4001 = vsel %vm3360, %v3999, %v4000
  %v4002 = vsel %vm3366, %v4001, %v3998
  %v4003 = vrot.slane %v4002, 6
  %v4004 = vsel %vm3293, %v3081, %v3264
  %v4005 = vsel %vm3285, %v3265, %v3266
  %v4006 = vsel %vm3364, %v4005, %v4004
  %v4007 = vsel %vm3287, %v3267, %v3268
  %v4008 = vsel %vm3291, %v3269, %v3270
  %v4009 = vsel %vm3360, %v4007, %v4008
  %v4010 = vsel %vm3366, %v4009, %v4006
  %v4011 = vrot.slane %v4010, 6
  %v4012 = vsel %vm3293, %v3089, %v3271
  %v4013 = vsel %vm3285, %v3272, %v3273
  %v4014 = vsel %vm3364, %v4013, %v4012
  %v4015 = vsel %vm3287, %v3274, %v3275
  %v4016 = vsel %vm3291, %v3276, %v3277
  %v4017 = vsel %vm3360, %v4015, %v4016
  %v4018 = vsel %vm3366, %v4017, %v4014
  %v4019 = vrot.slane %v4018, 6
  %v4020 = vsel %vm3293, %v3097, %v3278
  %v4021 = vsel %vm3285, %v3279, %v3280
  %v4022 = vsel %vm3364, %v4021, %v4020
  %v4023 = vsel %vm3287, %v3281, %v3282
  %v4024 = vsel %vm3291, %v3283, %v3284
  %v4025 = vsel %vm3360, %v4023, %v4024
  %v4026 = vsel %vm3366, %v4025, %v4022
  %v4027 = vrot.slane %v4026, 6
  %v4028 = vsel %vm3327, %v3257, %v3073
  %v4029 = vsel %vm3319, %v3258, %v3259
  %v4030 = vsel %vm3399, %v4029, %v4028
  %v4031 = vsel %vm3321, %v3260, %v3261
  %v4032 = vsel %vm3325, %v3262, %v3263
  %v4033 = vsel %vm3395, %v4031, %v4032
  %v4034 = vsel %vm3401, %v4033, %v4030
  %v4035 = vrot.slane %v4034, 7
  %v4036 = vsel %vm3327, %v3264, %v3081
  %v4037 = vsel %vm3319, %v3265, %v3266
  %v4038 = vsel %vm3399, %v4037, %v4036
  %v4039 = vsel %vm3321, %v3267, %v3268
  %v4040 = vsel %vm3325, %v3269, %v3270
  %v4041 = vsel %vm3395, %v4039, %v4040
  %v4042 = vsel %vm3401, %v4041, %v4038
  %v4043 = vrot.slane %v4042, 7
  %v4044 = vsel %vm3327, %v3271, %v3089
  %v4045 = vsel %vm3319, %v3272, %v3273
  %v4046 = vsel %vm3399, %v4045, %v4044
  %v4047 = vsel %vm3321, %v3274, %v3275
  %v4048 = vsel %vm3325, %v3276, %v3277
  %v4049 = vsel %vm3395, %v4047, %v4048
  %v4050 = vsel %vm3401, %v4049, %v4046
  %v4051 = vrot.slane %v4050, 7
  %v4052 = vsel %vm3327, %v3278, %v3097
  %v4053 = vsel %vm3319, %v3279, %v3280
  %v4054 = vsel %vm3399, %v4053, %v4052
  %v4055 = vsel %vm3321, %v3281, %v3282
  %v4056 = vsel %vm3325, %v3283, %v3284
  %v4057 = vsel %vm3395, %v4055, %v4056
  %v4058 = vsel %vm3401, %v4057, %v4054
  %v4059 = vrot.slane %v4058, 7
  %v4156 = vpack.c.bf16 %v3304, %v3297
  %v4157 = vpack.c.bf16 %v3318, %v3311
  %v4158 = vpack.c.bf16 %v3341, %v3333
  %v4159 = vpack.c.bf16 %v3357, %v3349
  %v4160 = vpack.c.bf16 %v3376, %v3368
  %v4161 = vpack.c.bf16 %v3392, %v3384
  %v4162 = vpack.c.bf16 %v3411, %v3403
  %v4163 = vpack.c.bf16 %v3427, %v3419
  %v4164 = vpack.c.bf16 %v3443, %v3435
  %v4165 = vpack.c.bf16 %v3459, %v3451
  %v4166 = vpack.c.bf16 %v3475, %v3467
  %v4167 = vpack.c.bf16 %v3491, %v3483
  %v4168 = vpack.c.bf16 %v3507, %v3499
  %v4169 = vpack.c.bf16 %v3523, %v3515
  %v4170 = vpack.c.bf16 %v3539, %v3531
  %v4171 = vpack.c.bf16 %v3555, %v3547
  %v4172 = vpack.c.bf16 %v3569, %v3562
  %v4173 = vpack.c.bf16 %v3583, %v3576
  %v4174 = vpack.c.bf16 %v3599, %v3591
  %v4175 = vpack.c.bf16 %v3615, %v3607
  %v4176 = vpack.c.bf16 %v3631, %v3623
  %v4177 = vpack.c.bf16 %v3647, %v3639
  %v4178 = vpack.c.bf16 %v3663, %v3655
  %v4179 = vpack.c.bf16 %v3679, %v3671
  %v4180 = vpack.c.bf16 %v3695, %v3687
  %v4181 = vpack.c.bf16 %v3711, %v3703
  %v4182 = vpack.c.bf16 %v3727, %v3719
  %v4183 = vpack.c.bf16 %v3743, %v3735
  %v4184 = vpack.c.bf16 %v3759, %v3751
  %v4185 = vpack.c.bf16 %v3775, %v3767
  %v4186 = vpack.c.bf16 %v3791, %v3783
  %v4187 = vpack.c.bf16 %v3807, %v3799
  %v4188 = vpack.c.bf16 %v3821, %v3814
  %v4189 = vpack.c.bf16 %v3835, %v3828
  %v4190 = vpack.c.bf16 %v3851, %v3843
  %v4191 = vpack.c.bf16 %v3867, %v3859
  %v4192 = vpack.c.bf16 %v3883, %v3875
  %v4193 = vpack.c.bf16 %v3899, %v3891
  %v4194 = vpack.c.bf16 %v3915, %v3907
  %v4195 = vpack.c.bf16 %v3931, %v3923
  %v4196 = vpack.c.bf16 %v3947, %v3939
  %v4197 = vpack.c.bf16 %v3963, %v3955
  %v4198 = vpack.c.bf16 %v3979, %v3971
  %v4199 = vpack.c.bf16 %v3995, %v3987
  %v4200 = vpack.c.bf16 %v4011, %v4003
  %v4201 = vpack.c.bf16 %v4027, %v4019
  %v4202 = vpack.c.bf16 %v4043, %v4035
  %v4203 = vpack.c.bf16 %v4059, %v4051
  %v4204 = vld [vmem:[%s4] sm:$0xf]
  %v4205 = vld [vmem:[%s4 + $0x4] sm:$0xf]
  %v4206 = vld [vmem:[%s4 + $0x8] sm:$0xf]
  %v4207 = vld [vmem:[%s4 + $0xc] sm:$0xf]
  %v4208 = vld [vmem:[%s4 + $0x10] sm:$0xf]
  %v4209 = vld [vmem:[%s4 + $0x14] sm:$0xf]
  %v4210 = vld [vmem:[%s4 + $0x18] sm:$0xf]
  %v4211 = vld [vmem:[%s4 + $0x1c] sm:$0xf]
  %v4212 = vld [vmem:[%s4 + $0x20] sm:$0xf]
  %v4213 = vld [vmem:[%s4 + $0x24] sm:$0xf]
  %v4214 = vld [vmem:[%s4 + $0x28] sm:$0xf]
  %v4215 = vld [vmem:[%s4 + $0x2c] sm:$0xf]
  %v4216 = vld [vmem:[%s4 + $0x30] sm:$0xf]
  %v4217 = vld [vmem:[%s4 + $0x34] sm:$0xf]
  %v4218 = vld [vmem:[%s4 + $0x38] sm:$0xf]
  %v4219 = vld [vmem:[%s4 + $0x3c] sm:$0xf]
  %v4236 = vunpack.c.l.b16 %v4204
  %v4237 = vunpack.c.l.b16 %v4205
  %v4238 = vunpack.c.l.b16 %v4206
  %v4239 = vunpack.c.l.b16 %v4207
  %v4240 = vunpack.c.l.b16 %v4208
  %v4241 = vunpack.c.l.b16 %v4209
  %v4242 = vunpack.c.l.b16 %v4210
  %v4243 = vunpack.c.l.b16 %v4211
  %v4244 = vunpack.c.l.b16 %v4212
  %v4245 = vunpack.c.l.b16 %v4213
  %v4246 = vunpack.c.l.b16 %v4214
  %v4247 = vunpack.c.l.b16 %v4215
  %v4248 = vunpack.c.l.b16 %v4216
  %v4249 = vunpack.c.l.b16 %v4217
  %v4250 = vunpack.c.l.b16 %v4218
  %v4251 = vunpack.c.l.b16 %v4219
  %v4252 = vpack.c.b16 %v4237, %v4236
  %v4253 = vpack.c.b16 %v4239, %v4238
  %v4254 = vpack.c.b16 %v4241, %v4240
  %v4255 = vpack.c.b16 %v4243, %v4242
  %v4256 = vpack.c.b16 %v4245, %v4244
  %v4257 = vpack.c.b16 %v4247, %v4246
  %v4258 = vpack.c.b16 %v4249, %v4248
  %v4259 = vpack.c.b16 %v4251, %v4250
  %4268 = vmatpush.bf16.msra.mxu0 %v4259
  %4269 = vmatpush.bf16.msra.mxu0 %v4258
  %4270 = vmatpush.bf16.msra.mxu0 %v4257
  %4271 = vmatpush.bf16.msra.mxu0 %v4256
  %4272 = vmatpush.bf16.msra.mxu0 %v4255
  %4273 = vmatpush.bf16.msra.mxu0 %v4254
  %4274 = vmatpush.bf16.msra.mxu0 %v4253
  %4275 = vmatpush.bf16.msra.mxu0 %v4252
  %4276 = vmatmul.bf16.gmra.mxu0 %v4156
  %v4277 = vpop.f32.mrf.mxu0
  %v4278 = vadd.f32 0.0, %v4277
  %v4279 = vpop.f32.mrf.mxu0
  %v4280 = vadd.f32 0.0, %v4279
  %4281 = vmatmul.bf16.gmra.mxu0 %v4157
  %v4282 = vpop.f32.mrf.mxu0
  %v4283 = vadd.f32 0.0, %v4282
  %v4284 = vpop.f32.mrf.mxu0
  %v4285 = vadd.f32 0.0, %v4284
  %4286 = vmatmul.bf16.gmra.mxu0 %v4158
  %v4287 = vpop.f32.mrf.mxu0
  %v4288 = vadd.f32 0.0, %v4287
  %v4289 = vpop.f32.mrf.mxu0
  %v4290 = vadd.f32 0.0, %v4289
  %4291 = vmatmul.bf16.gmra.mxu0 %v4159
  %v4292 = vpop.f32.mrf.mxu0
  %v4293 = vadd.f32 0.0, %v4292
  %v4294 = vpop.f32.mrf.mxu0
  %v4295 = vadd.f32 0.0, %v4294
  %4296 = vmatmul.bf16.gmra.mxu0 %v4160
  %v4297 = vpop.f32.mrf.mxu0
  %v4298 = vadd.f32 0.0, %v4297
  %v4299 = vpop.f32.mrf.mxu0
  %v4300 = vadd.f32 0.0, %v4299
  %4301 = vmatmul.bf16.gmra.mxu0 %v4161
  %v4302 = vpop.f32.mrf.mxu0
  %v4303 = vadd.f32 0.0, %v4302
  %v4304 = vpop.f32.mrf.mxu0
  %v4305 = vadd.f32 0.0, %v4304
  %4306 = vmatmul.bf16.gmra.mxu0 %v4162
  %v4307 = vpop.f32.mrf.mxu0
  %v4308 = vadd.f32 0.0, %v4307
  %v4309 = vpop.f32.mrf.mxu0
  %v4310 = vadd.f32 0.0, %v4309
  %4311 = vmatmul.bf16.gmra.mxu0 %v4163
  %v4312 = vpop.f32.mrf.mxu0
  %v4313 = vadd.f32 0.0, %v4312
  %v4314 = vpop.f32.mrf.mxu0
  %v4315 = vadd.f32 0.0, %v4314
  %4316 = vmatmul.bf16.gmra.mxu0 %v4164
  %v4317 = vpop.f32.mrf.mxu0
  %v4318 = vadd.f32 0.0, %v4317
  %v4319 = vpop.f32.mrf.mxu0
  %v4320 = vadd.f32 0.0, %v4319
  %4321 = vmatmul.bf16.gmra.mxu0 %v4165
  %v4322 = vpop.f32.mrf.mxu0
  %v4323 = vadd.f32 0.0, %v4322
  %v4324 = vpop.f32.mrf.mxu0
  %v4325 = vadd.f32 0.0, %v4324
  %4326 = vmatmul.bf16.gmra.mxu0 %v4166
  %v4327 = vpop.f32.mrf.mxu0
  %v4328 = vadd.f32 0.0, %v4327
  %v4329 = vpop.f32.mrf.mxu0
  %v4330 = vadd.f32 0.0, %v4329
  %4331 = vmatmul.bf16.gmra.mxu0 %v4167
  %v4332 = vpop.f32.mrf.mxu0
  %v4333 = vadd.f32 0.0, %v4332
  %v4334 = vpop.f32.mrf.mxu0
  %v4335 = vadd.f32 0.0, %v4334
  %4336 = vmatmul.bf16.gmra.mxu0 %v4168
  %v4337 = vpop.f32.mrf.mxu0
  %v4338 = vadd.f32 0.0, %v4337
  %v4339 = vpop.f32.mrf.mxu0
  %v4340 = vadd.f32 0.0, %v4339
  %4341 = vmatmul.bf16.gmra.mxu0 %v4169
  %v4342 = vpop.f32.mrf.mxu0
  %v4343 = vadd.f32 0.0, %v4342
  %v4344 = vpop.f32.mrf.mxu0
  %v4345 = vadd.f32 0.0, %v4344
  %4346 = vmatmul.bf16.gmra.mxu0 %v4170
  %v4347 = vpop.f32.mrf.mxu0
  %v4348 = vadd.f32 0.0, %v4347
  %v4349 = vpop.f32.mrf.mxu0
  %v4350 = vadd.f32 0.0, %v4349
  %4351 = vmatmul.bf16.gmra.mxu0 %v4171
  %v4352 = vpop.f32.mrf.mxu0
  %v4353 = vadd.f32 0.0, %v4352
  %v4354 = vpop.f32.mrf.mxu0
  %v4355 = vadd.f32 0.0, %v4354
  %4356 = vmatmul.bf16.gmra.mxu0 %v4172
  %v4357 = vpop.f32.mrf.mxu0
  %v4358 = vadd.f32 0.0, %v4357
  %v4359 = vpop.f32.mrf.mxu0
  %v4360 = vadd.f32 0.0, %v4359
  %4361 = vmatmul.bf16.gmra.mxu0 %v4173
  %v4362 = vpop.f32.mrf.mxu0
  %v4363 = vadd.f32 0.0, %v4362
  %v4364 = vpop.f32.mrf.mxu0
  %v4365 = vadd.f32 0.0, %v4364
  %4366 = vmatmul.bf16.gmra.mxu0 %v4174
  %v4367 = vpop.f32.mrf.mxu0
  %v4368 = vadd.f32 0.0, %v4367
  %v4369 = vpop.f32.mrf.mxu0
  %v4370 = vadd.f32 0.0, %v4369
  %4371 = vmatmul.bf16.gmra.mxu0 %v4175
  %v4372 = vpop.f32.mrf.mxu0
  %v4373 = vadd.f32 0.0, %v4372
  %v4374 = vpop.f32.mrf.mxu0
  %v4375 = vadd.f32 0.0, %v4374
  %4376 = vmatmul.bf16.gmra.mxu0 %v4176
  %v4377 = vpop.f32.mrf.mxu0
  %v4378 = vadd.f32 0.0, %v4377
  %v4379 = vpop.f32.mrf.mxu0
  %v4380 = vadd.f32 0.0, %v4379
  %4381 = vmatmul.bf16.gmra.mxu0 %v4177
  %v4382 = vpop.f32.mrf.mxu0
  %v4383 = vadd.f32 0.0, %v4382
  %v4384 = vpop.f32.mrf.mxu0
  %v4385 = vadd.f32 0.0, %v4384
  %4386 = vmatmul.bf16.gmra.mxu0 %v4178
  %v4387 = vpop.f32.mrf.mxu0
  %v4388 = vadd.f32 0.0, %v4387
  %v4389 = vpop.f32.mrf.mxu0
  %v4390 = vadd.f32 0.0, %v4389
  %4391 = vmatmul.bf16.gmra.mxu0 %v4179
  %v4392 = vpop.f32.mrf.mxu0
  %v4393 = vadd.f32 0.0, %v4392
  %v4394 = vpop.f32.mrf.mxu0
  %v4395 = vadd.f32 0.0, %v4394
  %4396 = vmatmul.bf16.gmra.mxu0 %v4180
  %v4397 = vpop.f32.mrf.mxu0
  %v4398 = vadd.f32 0.0, %v4397
  %v4399 = vpop.f32.mrf.mxu0
  %v4400 = vadd.f32 0.0, %v4399
  %4401 = vmatmul.bf16.gmra.mxu0 %v4181
  %v4402 = vpop.f32.mrf.mxu0
  %v4403 = vadd.f32 0.0, %v4402
  %v4404 = vpop.f32.mrf.mxu0
  %v4405 = vadd.f32 0.0, %v4404
  %4406 = vmatmul.bf16.gmra.mxu0 %v4182
  %v4407 = vpop.f32.mrf.mxu0
  %v4408 = vadd.f32 0.0, %v4407
  %v4409 = vpop.f32.mrf.mxu0
  %v4410 = vadd.f32 0.0, %v4409
  %4411 = vmatmul.bf16.gmra.mxu0 %v4183
  %v4412 = vpop.f32.mrf.mxu0
  %v4413 = vadd.f32 0.0, %v4412
  %v4414 = vpop.f32.mrf.mxu0
  %v4415 = vadd.f32 0.0, %v4414
  %4416 = vmatmul.bf16.gmra.mxu0 %v4184
  %v4417 = vpop.f32.mrf.mxu0
  %v4418 = vadd.f32 0.0, %v4417
  %v4419 = vpop.f32.mrf.mxu0
  %v4420 = vadd.f32 0.0, %v4419
  %4421 = vmatmul.bf16.gmra.mxu0 %v4185
  %v4422 = vpop.f32.mrf.mxu0
  %v4423 = vadd.f32 0.0, %v4422
  %v4424 = vpop.f32.mrf.mxu0
  %v4425 = vadd.f32 0.0, %v4424
  %4426 = vmatmul.bf16.gmra.mxu0 %v4186
  %v4427 = vpop.f32.mrf.mxu0
  %v4428 = vadd.f32 0.0, %v4427
  %v4429 = vpop.f32.mrf.mxu0
  %v4430 = vadd.f32 0.0, %v4429
  %4431 = vmatmul.bf16.gmra.mxu0 %v4187
  %v4432 = vpop.f32.mrf.mxu0
  %v4433 = vadd.f32 0.0, %v4432
  %v4434 = vpop.f32.mrf.mxu0
  %v4435 = vadd.f32 0.0, %v4434
  %4436 = vmatmul.bf16.gmra.mxu0 %v4188
  %v4437 = vpop.f32.mrf.mxu0
  %v4438 = vadd.f32 0.0, %v4437
  %v4439 = vpop.f32.mrf.mxu0
  %v4440 = vadd.f32 0.0, %v4439
  %4441 = vmatmul.bf16.gmra.mxu0 %v4189
  %v4442 = vpop.f32.mrf.mxu0
  %v4443 = vadd.f32 0.0, %v4442
  %v4444 = vpop.f32.mrf.mxu0
  %v4445 = vadd.f32 0.0, %v4444
  %4446 = vmatmul.bf16.gmra.mxu0 %v4190
  %v4447 = vpop.f32.mrf.mxu0
  %v4448 = vadd.f32 0.0, %v4447
  %v4449 = vpop.f32.mrf.mxu0
  %v4450 = vadd.f32 0.0, %v4449
  %4451 = vmatmul.bf16.gmra.mxu0 %v4191
  %v4452 = vpop.f32.mrf.mxu0
  %v4453 = vadd.f32 0.0, %v4452
  %v4454 = vpop.f32.mrf.mxu0
  %v4455 = vadd.f32 0.0, %v4454
  %4456 = vmatmul.bf16.gmra.mxu0 %v4192
  %v4457 = vpop.f32.mrf.mxu0
  %v4458 = vadd.f32 0.0, %v4457
  %v4459 = vpop.f32.mrf.mxu0
  %v4460 = vadd.f32 0.0, %v4459
  %4461 = vmatmul.bf16.gmra.mxu0 %v4193
  %v4462 = vpop.f32.mrf.mxu0
  %v4463 = vadd.f32 0.0, %v4462
  %v4464 = vpop.f32.mrf.mxu0
  %v4465 = vadd.f32 0.0, %v4464
  %4466 = vmatmul.bf16.gmra.mxu0 %v4194
  %v4467 = vpop.f32.mrf.mxu0
  %v4468 = vadd.f32 0.0, %v4467
  %v4469 = vpop.f32.mrf.mxu0
  %v4470 = vadd.f32 0.0, %v4469
  %4471 = vmatmul.bf16.gmra.mxu0 %v4195
  %v4472 = vpop.f32.mrf.mxu0
  %v4473 = vadd.f32 0.0, %v4472
  %v4474 = vpop.f32.mrf.mxu0
  %v4475 = vadd.f32 0.0, %v4474
  %4476 = vmatmul.bf16.gmra.mxu0 %v4196
  %v4477 = vpop.f32.mrf.mxu0
  %v4478 = vadd.f32 0.0, %v4477
  %v4479 = vpop.f32.mrf.mxu0
  %v4480 = vadd.f32 0.0, %v4479
  %4481 = vmatmul.bf16.gmra.mxu0 %v4197
  %v4482 = vpop.f32.mrf.mxu0
  %v4483 = vadd.f32 0.0, %v4482
  %v4484 = vpop.f32.mrf.mxu0
  %v4485 = vadd.f32 0.0, %v4484
  %4486 = vmatmul.bf16.gmra.mxu0 %v4198
  %v4487 = vpop.f32.mrf.mxu0
  %v4488 = vadd.f32 0.0, %v4487
  %v4489 = vpop.f32.mrf.mxu0
  %v4490 = vadd.f32 0.0, %v4489
  %4491 = vmatmul.bf16.gmra.mxu0 %v4199
  %v4492 = vpop.f32.mrf.mxu0
  %v4493 = vadd.f32 0.0, %v4492
  %v4494 = vpop.f32.mrf.mxu0
  %v4495 = vadd.f32 0.0, %v4494
  %4496 = vmatmul.bf16.gmra.mxu0 %v4200
  %v4497 = vpop.f32.mrf.mxu0
  %v4498 = vadd.f32 0.0, %v4497
  %v4499 = vpop.f32.mrf.mxu0
  %v4500 = vadd.f32 0.0, %v4499
  %4501 = vmatmul.bf16.gmra.mxu0 %v4201
  %v4502 = vpop.f32.mrf.mxu0
  %v4503 = vadd.f32 0.0, %v4502
  %v4504 = vpop.f32.mrf.mxu0
  %v4505 = vadd.f32 0.0, %v4504
  %4506 = vmatmul.bf16.gmra.mxu0 %v4202
  %v4507 = vpop.f32.mrf.mxu0
  %v4508 = vadd.f32 0.0, %v4507
  %v4509 = vpop.f32.mrf.mxu0
  %v4510 = vadd.f32 0.0, %v4509
  %4511 = vmatmul.bf16.gmra.mxu0 %v4203
  %v4512 = vpop.f32.mrf.mxu0
  %v4513 = vadd.f32 0.0, %v4512
  %v4514 = vpop.f32.mrf.mxu0
  %v4515 = vadd.f32 0.0, %v4514
  %4516 = vdwg.mxu0
  %v4517 = vlog2.pop %v4278
  %v4518 = vmul.f32 %v4517, 0.6931472
  %v4519 = vlog2.pop %v4280
  %v4520 = vmul.f32 %v4519, 0.6931472
  %v4521 = vlog2.pop %v4283
  %v4522 = vmul.f32 %v4521, 0.6931472
  %v4523 = vlog2.pop %v4285
  %v4524 = vmul.f32 %v4523, 0.6931472
  %v4525 = vlog2.pop %v4288
  %v4526 = vmul.f32 %v4525, 0.6931472
  %v4527 = vlog2.pop %v4290
  %v4528 = vmul.f32 %v4527, 0.6931472
  %v4529 = vlog2.pop %v4293
  %v4530 = vmul.f32 %v4529, 0.6931472
  %v4531 = vlog2.pop %v4295
  %v4532 = vmul.f32 %v4531, 0.6931472
  %v4533 = vlog2.pop %v4298
  %v4534 = vmul.f32 %v4533, 0.6931472
  %v4535 = vlog2.pop %v4300
  %v4536 = vmul.f32 %v4535, 0.6931472
  %v4537 = vlog2.pop %v4303
  %v4538 = vmul.f32 %v4537, 0.6931472
  %v4539 = vlog2.pop %v4305
  %v4540 = vmul.f32 %v4539, 0.6931472
  %v4541 = vlog2.pop %v4308
  %v4542 = vmul.f32 %v4541, 0.6931472
  %v4543 = vlog2.pop %v4310
  %v4544 = vmul.f32 %v4543, 0.6931472
  %v4545 = vlog2.pop %v4313
  %v4546 = vmul.f32 %v4545, 0.6931472
  %v4547 = vlog2.pop %v4315
  %v4548 = vmul.f32 %v4547, 0.6931472
  %v4549 = vlog2.pop %v4318
  %v4550 = vmul.f32 %v4549, 0.6931472
  %v4551 = vlog2.pop %v4320
  %v4552 = vmul.f32 %v4551, 0.6931472
  %v4553 = vlog2.pop %v4323
  %v4554 = vmul.f32 %v4553, 0.6931472
  %v4555 = vlog2.pop %v4325
  %v4556 = vmul.f32 %v4555, 0.6931472
  %v4557 = vlog2.pop %v4328
  %v4558 = vmul.f32 %v4557, 0.6931472
  %v4559 = vlog2.pop %v4330
  %v4560 = vmul.f32 %v4559, 0.6931472
  %v4561 = vlog2.pop %v4333
  %v4562 = vmul.f32 %v4561, 0.6931472
  %v4563 = vlog2.pop %v4335
  %v4564 = vmul.f32 %v4563, 0.6931472
  %v4565 = vlog2.pop %v4338
  %v4566 = vmul.f32 %v4565, 0.6931472
  %v4567 = vlog2.pop %v4340
  %v4568 = vmul.f32 %v4567, 0.6931472
  %v4569 = vlog2.pop %v4343
  %v4570 = vmul.f32 %v4569, 0.6931472
  %v4571 = vlog2.pop %v4345
  %v4572 = vmul.f32 %v4571, 0.6931472
  %v4573 = vlog2.pop %v4348
  %v4574 = vmul.f32 %v4573, 0.6931472
  %v4575 = vlog2.pop %v4350
  %v4576 = vmul.f32 %v4575, 0.6931472
  %v4577 = vlog2.pop %v4353
  %v4578 = vmul.f32 %v4577, 0.6931472
  %v4579 = vlog2.pop %v4355
  %v4580 = vmul.f32 %v4579, 0.6931472
  %v4581 = vlog2.pop %v4358
  %v4582 = vmul.f32 %v4581, 0.6931472
  %v4583 = vlog2.pop %v4360
  %v4584 = vmul.f32 %v4583, 0.6931472
  %v4585 = vlog2.pop %v4363
  %v4586 = vmul.f32 %v4585, 0.6931472
  %v4587 = vlog2.pop %v4365
  %v4588 = vmul.f32 %v4587, 0.6931472
  %v4589 = vlog2.pop %v4368
  %v4590 = vmul.f32 %v4589, 0.6931472
  %v4591 = vlog2.pop %v4370
  %v4592 = vmul.f32 %v4591, 0.6931472
  %v4593 = vlog2.pop %v4373
  %v4594 = vmul.f32 %v4593, 0.6931472
  %v4595 = vlog2.pop %v4375
  %v4596 = vmul.f32 %v4595, 0.6931472
  %v4597 = vlog2.pop %v4378
  %v4598 = vmul.f32 %v4597, 0.6931472
  %v4599 = vlog2.pop %v4380
  %v4600 = vmul.f32 %v4599, 0.6931472
  %v4601 = vlog2.pop %v4383
  %v4602 = vmul.f32 %v4601, 0.6931472
  %v4603 = vlog2.pop %v4385
  %v4604 = vmul.f32 %v4603, 0.6931472
  %v4605 = vlog2.pop %v4388
  %v4606 = vmul.f32 %v4605, 0.6931472
  %v4607 = vlog2.pop %v4390
  %v4608 = vmul.f32 %v4607, 0.6931472
  %v4609 = vlog2.pop %v4393
  %v4610 = vmul.f32 %v4609, 0.6931472
  %v4611 = vlog2.pop %v4395
  %v4612 = vmul.f32 %v4611, 0.6931472
  %v4613 = vlog2.pop %v4398
  %v4614 = vmul.f32 %v4613, 0.6931472
  %v4615 = vlog2.pop %v4400
  %v4616 = vmul.f32 %v4615, 0.6931472
  %v4617 = vlog2.pop %v4403
  %v4618 = vmul.f32 %v4617, 0.6931472
  %v4619 = vlog2.pop %v4405
  %v4620 = vmul.f32 %v4619, 0.6931472
  %v4621 = vlog2.pop %v4408
  %v4622 = vmul.f32 %v4621, 0.6931472
  %v4623 = vlog2.pop %v4410
  %v4624 = vmul.f32 %v4623, 0.6931472
  %v4625 = vlog2.pop %v4413
  %v4626 = vmul.f32 %v4625, 0.6931472
  %v4627 = vlog2.pop %v4415
  %v4628 = vmul.f32 %v4627, 0.6931472
  %v4629 = vlog2.pop %v4418
  %v4630 = vmul.f32 %v4629, 0.6931472
  %v4631 = vlog2.pop %v4420
  %v4632 = vmul.f32 %v4631, 0.6931472
  %v4633 = vlog2.pop %v4423
  %v4634 = vmul.f32 %v4633, 0.6931472
  %v4635 = vlog2.pop %v4425
  %v4636 = vmul.f32 %v4635, 0.6931472
  %v4637 = vlog2.pop %v4428
  %v4638 = vmul.f32 %v4637, 0.6931472
  %v4639 = vlog2.pop %v4430
  %v4640 = vmul.f32 %v4639, 0.6931472
  %v4641 = vlog2.pop %v4433
  %v4642 = vmul.f32 %v4641, 0.6931472
  %v4643 = vlog2.pop %v4435
  %v4644 = vmul.f32 %v4643, 0.6931472
  %v4645 = vlog2.pop %v4438
  %v4646 = vmul.f32 %v4645, 0.6931472
  %v4647 = vlog2.pop %v4440
  %v4648 = vmul.f32 %v4647, 0.6931472
  %v4649 = vlog2.pop %v4443
  %v4650 = vmul.f32 %v4649, 0.6931472
  %v4651 = vlog2.pop %v4445
  %v4652 = vmul.f32 %v4651, 0.6931472
  %v4653 = vlog2.pop %v4448
  %v4654 = vmul.f32 %v4653, 0.6931472
  %v4655 = vlog2.pop %v4450
  %v4656 = vmul.f32 %v4655, 0.6931472
  %v4657 = vlog2.pop %v4453
  %v4658 = vmul.f32 %v4657, 0.6931472
  %v4659 = vlog2.pop %v4455
  %v4660 = vmul.f32 %v4659, 0.6931472
  %v4661 = vlog2.pop %v4458
  %v4662 = vmul.f32 %v4661, 0.6931472
  %v4663 = vlog2.pop %v4460
  %v4664 = vmul.f32 %v4663, 0.6931472
  %v4665 = vlog2.pop %v4463
  %v4666 = vmul.f32 %v4665, 0.6931472
  %v4667 = vlog2.pop %v4465
  %v4668 = vmul.f32 %v4667, 0.6931472
  %v4669 = vlog2.pop %v4468
  %v4670 = vmul.f32 %v4669, 0.6931472
  %v4671 = vlog2.pop %v4470
  %v4672 = vmul.f32 %v4671, 0.6931472
  %v4673 = vlog2.pop %v4473
  %v4674 = vmul.f32 %v4673, 0.6931472
  %v4675 = vlog2.pop %v4475
  %v4676 = vmul.f32 %v4675, 0.6931472
  %v4677 = vlog2.pop %v4478
  %v4678 = vmul.f32 %v4677, 0.6931472
  %v4679 = vlog2.pop %v4480
  %v4680 = vmul.f32 %v4679, 0.6931472
  %v4681 = vlog2.pop %v4483
  %v4682 = vmul.f32 %v4681, 0.6931472
  %v4683 = vlog2.pop %v4485
  %v4684 = vmul.f32 %v4683, 0.6931472
  %v4685 = vlog2.pop %v4488
  %v4686 = vmul.f32 %v4685, 0.6931472
  %v4687 = vlog2.pop %v4490
  %v4688 = vmul.f32 %v4687, 0.6931472
  %v4689 = vlog2.pop %v4493
  %v4690 = vmul.f32 %v4689, 0.6931472
  %v4691 = vlog2.pop %v4495
  %v4692 = vmul.f32 %v4691, 0.6931472
  %v4693 = vlog2.pop %v4498
  %v4694 = vmul.f32 %v4693, 0.6931472
  %v4695 = vlog2.pop %v4500
  %v4696 = vmul.f32 %v4695, 0.6931472
  %v4697 = vlog2.pop %v4503
  %v4698 = vmul.f32 %v4697, 0.6931472
  %v4699 = vlog2.pop %v4505
  %v4700 = vmul.f32 %v4699, 0.6931472
  %v4701 = vlog2.pop %v4508
  %v4702 = vmul.f32 %v4701, 0.6931472
  %v4703 = vlog2.pop %v4510
  %v4704 = vmul.f32 %v4703, 0.6931472
  %v4705 = vlog2.pop %v4513
  %v4706 = vmul.f32 %v4705, 0.6931472
  %v4707 = vlog2.pop %v4515
  %v4708 = vmul.f32 %v4707, 0.6931472
  %vm4709 = vcmask 277504
  %4710 = vst.msk [vmem:[%s5] sm:$0xff] %vm4709, %v4518
  %4711 = vst.msk [vmem:[%s5 + $0x8] sm:$0xff] %vm4709, %v4520
  %4712 = vst.msk [vmem:[%s5 + $0x10] sm:$0xff] %vm4709, %v4522
  %4713 = vst.msk [vmem:[%s5 + $0x18] sm:$0xff] %vm4709, %v4524
  %4714 = vst.msk [vmem:[%s5 + $0x20] sm:$0xff] %vm4709, %v4526
  %4715 = vst.msk [vmem:[%s5 + $0x28] sm:$0xff] %vm4709, %v4528
  %4716 = vst.msk [vmem:[%s5 + $0x30] sm:$0xff] %vm4709, %v4530
  %4717 = vst.msk [vmem:[%s5 + $0x38] sm:$0xff] %vm4709, %v4532
  %4718 = vst.msk [vmem:[%s5 + $0x40] sm:$0xff] %vm4709, %v4534
  %4719 = vst.msk [vmem:[%s5 + $0x48] sm:$0xff] %vm4709, %v4536
  %4720 = vst.msk [vmem:[%s5 + $0x50] sm:$0xff] %vm4709, %v4538
  %4721 = vst.msk [vmem:[%s5 + $0x58] sm:$0xff] %vm4709, %v4540
  %4722 = vst.msk [vmem:[%s5 + $0x60] sm:$0xff] %vm4709, %v4542
  %4723 = vst.msk [vmem:[%s5 + $0x68] sm:$0xff] %vm4709, %v4544
  %4724 = vst.msk [vmem:[%s5 + $0x70] sm:$0xff] %vm4709, %v4546
  %4725 = vst.msk [vmem:[%s5 + $0x78] sm:$0xff] %vm4709, %v4548
  %4726 = vst.msk [vmem:[%s5 + $0x80] sm:$0xff] %vm4709, %v4550
  %4727 = vst.msk [vmem:[%s5 + $0x88] sm:$0xff] %vm4709, %v4552
  %4728 = vst.msk [vmem:[%s5 + $0x90] sm:$0xff] %vm4709, %v4554
  %4729 = vst.msk [vmem:[%s5 + $0x98] sm:$0xff] %vm4709, %v4556
  %4730 = vst.msk [vmem:[%s5 + $0xa0] sm:$0xff] %vm4709, %v4558
  %4731 = vst.msk [vmem:[%s5 + $0xa8] sm:$0xff] %vm4709, %v4560
  %4732 = vst.msk [vmem:[%s5 + $0xb0] sm:$0xff] %vm4709, %v4562
  %4733 = vst.msk [vmem:[%s5 + $0xb8] sm:$0xff] %vm4709, %v4564
  %4734 = vst.msk [vmem:[%s5 + $0xc0] sm:$0xff] %vm4709, %v4566
  %4735 = vst.msk [vmem:[%s5 + $0xc8] sm:$0xff] %vm4709, %v4568
  %4736 = vst.msk [vmem:[%s5 + $0xd0] sm:$0xff] %vm4709, %v4570
  %4737 = vst.msk [vmem:[%s5 + $0xd8] sm:$0xff] %vm4709, %v4572
  %4738 = vst.msk [vmem:[%s5 + $0xe0] sm:$0xff] %vm4709, %v4574
  %4739 = vst.msk [vmem:[%s5 + $0xe8] sm:$0xff] %vm4709, %v4576
  %4740 = vst.msk [vmem:[%s5 + $0xf0] sm:$0xff] %vm4709, %v4578
  %4741 = vst.msk [vmem:[%s5 + $0xf8] sm:$0xff] %vm4709, %v4580
  %4742 = vst.msk [vmem:[%s5 + $0x100] sm:$0xff] %vm4709, %v4582
  %4743 = vst.msk [vmem:[%s5 + $0x108] sm:$0xff] %vm4709, %v4584
  %4744 = vst.msk [vmem:[%s5 + $0x110] sm:$0xff] %vm4709, %v4586
  %4745 = vst.msk [vmem:[%s5 + $0x118] sm:$0xff] %vm4709, %v4588
  %4746 = vst.msk [vmem:[%s5 + $0x120] sm:$0xff] %vm4709, %v4590
  %4747 = vst.msk [vmem:[%s5 + $0x128] sm:$0xff] %vm4709, %v4592
  %4748 = vst.msk [vmem:[%s5 + $0x130] sm:$0xff] %vm4709, %v4594
  %4749 = vst.msk [vmem:[%s5 + $0x138] sm:$0xff] %vm4709, %v4596
  %4750 = vst.msk [vmem:[%s5 + $0x140] sm:$0xff] %vm4709, %v4598
  %4751 = vst.msk [vmem:[%s5 + $0x148] sm:$0xff] %vm4709, %v4600
  %4752 = vst.msk [vmem:[%s5 + $0x150] sm:$0xff] %vm4709, %v4602
  %4753 = vst.msk [vmem:[%s5 + $0x158] sm:$0xff] %vm4709, %v4604
  %4754 = vst.msk [vmem:[%s5 + $0x160] sm:$0xff] %vm4709, %v4606
  %4755 = vst.msk [vmem:[%s5 + $0x168] sm:$0xff] %vm4709, %v4608
  %4756 = vst.msk [vmem:[%s5 + $0x170] sm:$0xff] %vm4709, %v4610
  %4757 = vst.msk [vmem:[%s5 + $0x178] sm:$0xff] %vm4709, %v4612
  %4758 = vst.msk [vmem:[%s5 + $0x180] sm:$0xff] %vm4709, %v4614
  %4759 = vst.msk [vmem:[%s5 + $0x188] sm:$0xff] %vm4709, %v4616
  %4760 = vst.msk [vmem:[%s5 + $0x190] sm:$0xff] %vm4709, %v4618
  %4761 = vst.msk [vmem:[%s5 + $0x198] sm:$0xff] %vm4709, %v4620
  %4762 = vst.msk [vmem:[%s5 + $0x1a0] sm:$0xff] %vm4709, %v4622
  %4763 = vst.msk [vmem:[%s5 + $0x1a8] sm:$0xff] %vm4709, %v4624
  %4764 = vst.msk [vmem:[%s5 + $0x1b0] sm:$0xff] %vm4709, %v4626
  %4765 = vst.msk [vmem:[%s5 + $0x1b8] sm:$0xff] %vm4709, %v4628
  %4766 = vst.msk [vmem:[%s5 + $0x1c0] sm:$0xff] %vm4709, %v4630
  %4767 = vst.msk [vmem:[%s5 + $0x1c8] sm:$0xff] %vm4709, %v4632
  %4768 = vst.msk [vmem:[%s5 + $0x1d0] sm:$0xff] %vm4709, %v4634
  %4769 = vst.msk [vmem:[%s5 + $0x1d8] sm:$0xff] %vm4709, %v4636
  %4770 = vst.msk [vmem:[%s5 + $0x1e0] sm:$0xff] %vm4709, %v4638
  %4771 = vst.msk [vmem:[%s5 + $0x1e8] sm:$0xff] %vm4709, %v4640
  %4772 = vst.msk [vmem:[%s5 + $0x1f0] sm:$0xff] %vm4709, %v4642
  %4773 = vst.msk [vmem:[%s5 + $0x1f8] sm:$0xff] %vm4709, %v4644
  %4774 = vst.msk [vmem:[%s5 + $0x200] sm:$0xff] %vm4709, %v4646
  %4775 = vst.msk [vmem:[%s5 + $0x208] sm:$0xff] %vm4709, %v4648
  %4776 = vst.msk [vmem:[%s5 + $0x210] sm:$0xff] %vm4709, %v4650
  %4777 = vst.msk [vmem:[%s5 + $0x218] sm:$0xff] %vm4709, %v4652
  %4778 = vst.msk [vmem:[%s5 + $0x220] sm:$0xff] %vm4709, %v4654
  %4779 = vst.msk [vmem:[%s5 + $0x228] sm:$0xff] %vm4709, %v4656
  %4780 = vst.msk [vmem:[%s5 + $0x230] sm:$0xff] %vm4709, %v4658
  %4781 = vst.msk [vmem:[%s5 + $0x238] sm:$0xff] %vm4709, %v4660
  %4782 = vst.msk [vmem:[%s5 + $0x240] sm:$0xff] %vm4709, %v4662
  %4783 = vst.msk [vmem:[%s5 + $0x248] sm:$0xff] %vm4709, %v4664
  %4784 = vst.msk [vmem:[%s5 + $0x250] sm:$0xff] %vm4709, %v4666
  %4785 = vst.msk [vmem:[%s5 + $0x258] sm:$0xff] %vm4709, %v4668
  %4786 = vst.msk [vmem:[%s5 + $0x260] sm:$0xff] %vm4709, %v4670
  %4787 = vst.msk [vmem:[%s5 + $0x268] sm:$0xff] %vm4709, %v4672
  %4788 = vst.msk [vmem:[%s5 + $0x270] sm:$0xff] %vm4709, %v4674
  %4789 = vst.msk [vmem:[%s5 + $0x278] sm:$0xff] %vm4709, %v4676
  %4790 = vst.msk [vmem:[%s5 + $0x280] sm:$0xff] %vm4709, %v4678
  %4791 = vst.msk [vmem:[%s5 + $0x288] sm:$0xff] %vm4709, %v4680
  %4792 = vst.msk [vmem:[%s5 + $0x290] sm:$0xff] %vm4709, %v4682
  %4793 = vst.msk [vmem:[%s5 + $0x298] sm:$0xff] %vm4709, %v4684
  %4794 = vst.msk [vmem:[%s5 + $0x2a0] sm:$0xff] %vm4709, %v4686
  %4795 = vst.msk [vmem:[%s5 + $0x2a8] sm:$0xff] %vm4709, %v4688
  %4796 = vst.msk [vmem:[%s5 + $0x2b0] sm:$0xff] %vm4709, %v4690
  %4797 = vst.msk [vmem:[%s5 + $0x2b8] sm:$0xff] %vm4709, %v4692
  %4798 = vst.msk [vmem:[%s5 + $0x2c0] sm:$0xff] %vm4709, %v4694
  %4799 = vst.msk [vmem:[%s5 + $0x2c8] sm:$0xff] %vm4709, %v4696
  %4800 = vst.msk [vmem:[%s5 + $0x2d0] sm:$0xff] %vm4709, %v4698
  %4801 = vst.msk [vmem:[%s5 + $0x2d8] sm:$0xff] %vm4709, %v4700
  %4802 = vst.msk [vmem:[%s5 + $0x2e0] sm:$0xff] %vm4709, %v4702
  %4803 = vst.msk [vmem:[%s5 + $0x2e8] sm:$0xff] %vm4709, %v4704
  %4804 = vst.msk [vmem:[%s5 + $0x2f0] sm:$0xff] %vm4709, %v4706
  %4805 = vst.msk [vmem:[%s5 + $0x2f8] sm:$0xff] %vm4709, %v4708
  // Predicated region
  $region22: #{sccnet_forward.1} parent=0 // pred_check
    _
  $region23: #{sccnet_forward.1} parent=0 // pred_check_branch
    %4807 = sbr.rel (0) target = $region25
  $region24: #{sccnet_forward.1} parent=0 // pred_region
    _
  $region25: #{sccnet_forward.1} parent=0 // pred_fallthru
    _
  // Predicated region
  $region26: #{sccnet_forward.1} parent=0 // pred_check
    _
  $region27: #{sccnet_forward.1} parent=0 // pred_check_branch
    %4809 = sbr.rel (0) target = $region29
  $region28: #{sccnet_forward.1} parent=0 // pred_region
    _
  $region29: #{sccnet_forward.1} parent=0 // pred_fallthru
    _

</llo_original>
